<compile_context>
chip_gen: v5e
topology: v5e:2x2
jax: 0.10.0
libtpu: 0.0.40
codegen_flags: <defaults>
</compile_context>

<pallas_src>
import functools
import math

import jax
import jax.numpy as jnp
from jax import lax
from jax.experimental import pallas as pl
from jax.experimental.pallas import tpu as pltpu


def _round_up(n, m):
    return -(-n // m) * m


def _cdiv(a, b):
    return -(-a // b)


# --------------------------------- kernel ------------------------------------

def _conv_stacked_kernel(x_hbm, w_ref, b_ref, o_ref, xwin_ref, xs_ref, sem,
                         *, taps, cin_blk, tn, win):
    """One (batch, output-tile) grid step of the stride-1 conv.

    x_hbm   : (B, Cin_blk, Lpad)     zero-padded flattened input, left in HBM
    w_ref   : (Cout_pad, T*Cin_blk)  all K^d taps stacked on the contraction
    b_ref   : (Cout_pad, 1)          bias
    o_ref   : (Cout_pad, TN)         lane-dense wide-output tile
    xwin_ref: (2, Cin_blk, WIN)      double-buffered input window (TN + halo)
    xs_ref  : (T*Cin_blk, TN)        stacked conv operand
    sem     : DMA semaphores (2,)
    """
    bi = pl.program_id(0)
    ni = pl.program_id(1)
    ntiles = pl.num_programs(1)
    slot = ni & 1

    def window_copy(tile_idx, slot_idx):
        start = tile_idx * tn                     # multiple of 128 by design
        return pltpu.make_async_copy(
            x_hbm.at[bi, :, pl.ds(start, win)],
            xwin_ref.at[slot_idx],
            sem.at[slot_idx],
        )

    # First tile of this batch row: nothing was prefetched for us yet.
    @pl.when(ni == 0)
    def _():
        window_copy(0, 0).start()

    # Wait for the current window, then immediately prefetch the next tile's
    # window so its HBM DMA overlaps this tile's gather + matmul.
    window_copy(ni, slot).wait()

    @pl.when(ni + 1 < ntiles)
    def _():
        window_copy(ni + 1, 1 - slot).start()

    # Gather the T tap windows into the contraction dimension (static unroll;
    # destination blocks are sublane-aligned, source lane offsets are static
    # within the resident window).
    for t, off in enumerate(taps):
        xs_ref[t * cin_blk:(t + 1) * cin_blk, :] = xwin_ref[slot, :, off:off + tn]

    # One full-depth MXU matmul per output tile (f32 accumulation) + one bias
    # add; the result is written exactly once (no VMEM accumulator RMW).
    acc = jnp.dot(w_ref[...], xs_ref[...], preferred_element_type=jnp.float32)
    o_ref[...] = (acc + b_ref[...]).astype(o_ref.dtype)


# ------------------------------ module glue ----------------------------------

def init_conv_layer(key, in_channels, out_channels, window_size=None,
                    kernel_size=3, stride=1, padding=None, spatial_dims=3):
    """Parameters matching nn.Conv2d / nn.Conv3d default init (approximately)."""
    del window_size  # unused in ConvLayer.forward
    if padding is None:
        padding = kernel_size // 2
    k = kernel_size
    if spatial_dims == 3:
        wshape = (out_channels, in_channels, k, k, k)
        fan_in = in_channels * k * k * k
    elif spatial_dims == 2:
        wshape = (out_channels, in_channels, k, k)
        fan_in = in_channels * k * k
    else:
        raise ValueError("spatial_dims must be 2 or 3")
    bound = 1.0 / math.sqrt(fan_in)
    kw, kb = jax.random.split(key)
    return {
        "weight": jax.random.uniform(kw, wshape, jnp.float32, -bound, bound),
        "bias": jax.random.uniform(kb, (out_channels,), jnp.float32, -bound, bound),
        "kernel_size": k,
        "stride": stride,
        "padding": padding,
        "spatial_dims": spatial_dims,
    }


def conv_layer_forward(params, x, operand_dtype=jnp.bfloat16):
    w = params["weight"]
    b = params["bias"]
    k = params["kernel_size"]
    s = params["stride"]
    p = params["padding"]
    sd = params["spatial_dims"]
    if s != 1:
        # TODO(synk): stride > 1 not implemented in the Pallas path.
        raise NotImplementedError("Pallas ConvLayer path only supports stride=1")
    cout, cin = w.shape[0], w.shape[1]

    odt = jnp.dtype(operand_dtype) if operand_dtype is not None else jnp.dtype(x.dtype)
    osize = odt.itemsize
    out_size = jnp.dtype(x.dtype).itemsize
    # Sublane alignment of one tap's channel block inside the stacked operand
    # (8 rows for 32-bit dtypes, 16 for 16-bit packed layouts).
    cin_blk = _round_up(cin, 8 * max(1, 4 // osize))
    cout_pad = _round_up(cout, 8)

    if sd == 3:
        B, _, D, H, W = x.shape
        Dp, Hp, Wp = D + 2 * p, H + 2 * p, W + 2 * p
        Dout, Hout, Wout = Dp - k + 1, Hp - k + 1, Wp - k + 1
        nwide = Dout * Hp * Wp
        plane = Hp * Wp
        taps = tuple(dz * Hp * Wp + dy * Wp + dx
                     for dz in range(k) for dy in range(k) for dx in range(k))
        T = k * k * k
        base_len = Dp * Hp * Wp
    elif sd == 2:
        B, _, H, W = x.shape
        Hp, Wp = H + 2 * p, W + 2 * p
        Hout, Wout = Hp - k + 1, Wp - k + 1
        nwide = Hout * Wp
        plane = Wp
        taps = tuple(dy * Wp + dx for dy in range(k) for dx in range(k))
        T = k * k
        base_len = Hp * Wp
    else:
        raise ValueError("spatial_dims must be 2 or 3")

    halo = _round_up(max(taps), 128)

    # ---- per-generation tile-size selection + VMEM limit ---------------------
    try:
        vmem_cap = int(pltpu.get_tpu_info().vmem_capacity_bytes)
    except Exception:
        vmem_cap = 64 * 1024 * 1024            # conservative (v7x per-core VMEM)
    if not vmem_cap or vmem_cap < (16 << 20):
        vmem_cap = 64 * 1024 * 1024
    budget = vmem_cap // 4
    tn = 2048
    while tn > 128:
        per_tile = (T * cin_blk * tn * osize               # stacked operand
                    + 2 * cout_pad * tn * out_size          # dbl-buffered out tile
                    + 2 * cin_blk * (tn + halo) * osize     # dbl-buffered window
                    + 2 * cout_pad * T * cin_blk * osize)   # weights
        if per_tile <= budget:
            break
        tn //= 2
    ntiles = max(1, _cdiv(nwide, tn))
    tn = _round_up(_cdiv(nwide, ntiles), 128)   # balance tiles, stay lane-dense
    nwide_pad = ntiles * tn
    win = tn + halo

    # ---- host-side layout (single pad + reshape; no im2col) ------------------
    # Append just enough trailing zero planes/rows that the last tile's halo'd
    # window stays in bounds of the flattened padded input.
    needed = (ntiles - 1) * tn + win
    extra = _cdiv(max(0, needed - base_len), plane)
    if sd == 3:
        lpad = (Dp + extra) * Hp * Wp
        xpad = jnp.pad(x, ((0, 0), (0, cin_blk - cin),
                           (p, p + extra), (p, p), (p, p)))
    else:
        lpad = (Hp + extra) * Wp
        xpad = jnp.pad(x, ((0, 0), (0, cin_blk - cin),
                           (p, p + extra), (p, p)))
    xf = xpad.reshape(B, cin_blk, lpad)

    # Weights: (Cout, Cin, K^d) -> (Cout_pad, T*Cin_blk), tap-major along the
    # contraction so the kernel uses the whole weight tile in one MXU matmul.
    wt = w.reshape(cout, cin, T).transpose(0, 2, 1)
    wt = jnp.pad(wt, ((0, cout_pad - cout), (0, 0), (0, cin_blk - cin)))
    wf = wt.reshape(cout_pad, T * cin_blk)
    bf = jnp.pad(b, (0, cout_pad - cout)).astype(jnp.float32)[:, None]

    if operand_dtype is not None:
        xf = xf.astype(odt)
        wf = wf.astype(odt)

    vmem_need = (2 * cout_pad * T * cin_blk * osize
                 + 2 * cout_pad * tn * out_size
                 + 2 * cin_blk * win * osize
                 + T * cin_blk * tn * osize
                 + 2 * 8 * 128 * 4)
    vmem_limit = int(min(int(vmem_cap * 0.9),
                         max(2 * vmem_need, 32 * 1024 * 1024)))

    cost = pl.CostEstimate(
        flops=int(2 * B * cout * cin * T * nwide),
        transcendentals=0,
        bytes_accessed=int(xf.size * osize + wf.size * osize + bf.size * 4
                           + B * cout_pad * nwide_pad * out_size),
    )

    kernel = functools.partial(_conv_stacked_kernel, taps=taps,
                               cin_blk=cin_blk, tn=tn, win=win)
    out_wide = pl.pallas_call(
        kernel,
        out_shape=jax.ShapeDtypeStruct((B, cout_pad, nwide_pad), x.dtype),
        grid_spec=pltpu.PrefetchScalarGridSpec(
            num_scalar_prefetch=0,
            grid=(B, ntiles),
            in_specs=[
                # Input stays in HBM; the kernel DMAs halo'd tile windows.
                pl.BlockSpec(memory_space=pl.ANY),
                pl.BlockSpec((cout_pad, T * cin_blk), lambda bi, ni: (0, 0)),
                pl.BlockSpec((cout_pad, 1), lambda bi, ni: (0, 0)),
            ],
            out_specs=pl.BlockSpec((None, cout_pad, tn),
                                   lambda bi, ni: (bi, 0, ni)),
            scratch_shapes=[
                pltpu.VMEM((2, cin_blk, win), odt),        # halo'd input window
                pltpu.VMEM((T * cin_blk, tn), odt),        # stacked operand
                pltpu.SemaphoreType.DMA((2,)),
            ],
        ),
        compiler_params=pltpu.CompilerParams(
            # Inner (tile) axis must execute sequentially per core so the
            # manual prefetch chain stays valid; the batch axis shards across
            # TensorCores (v7x megacore).
            dimension_semantics=("parallel", "arbitrary"),
            vmem_limit_bytes=vmem_limit,
        ),
        cost_estimate=cost,
    )(xf, wf, bf)

    # Crop the "wide" output back to the true spatial extent (cheap XLA slice).
    # TODO(synk): downstream ops could consume the wide layout directly.
    out = out_wide[:, :cout, :nwide]
    if sd == 3:
        out = out.reshape(B, cout, Dout, Hp, Wp)[:, :, :, :Hout, :Wout]
    else:
        out = out.reshape(B, cout, Hout, Wp)[:, :, :, :Wout]
    return out


# ---------------------------- pure-JAX reference ------------------------------

def _ref_forward(params, x):
    w, b, p, s = params["weight"], params["bias"], params["padding"], params["stride"]
    if params["spatial_dims"] == 3:
        dn = ("NCDHW", "OIDHW", "NCDHW")
        y = lax.conv_general_dilated(x, w, (s, s, s), [(p, p)] * 3,
                                     dimension_numbers=dn)
        return y + b[None, :, None, None, None]
    else:
        dn = ("NCHW", "OIHW", "NCHW")
        y = lax.conv_general_dilated(x, w, (s, s), [(p, p)] * 2,
                                     dimension_numbers=dn)
        return y + b[None, :, None, None]


if __name__ == "__main__":
    key = jax.random.PRNGKey(0)
    kx2, kx3, kp2, kp3 = jax.random.split(key, 4)

    B, Cin, Cout, D, H, W = 2, 4, 8, 8, 16, 16

    # 3-D path (ConvLayer default: spatial_dims=3, kernel_size=3, stride=1, pad=1)
    x3 = jax.random.normal(kx3, (B, Cin, D, H, W), jnp.float32)
    p3 = init_conv_layer(kp3, Cin, Cout, window_size=D, spatial_dims=3)
    ref3 = _ref_forward(p3, x3)

    out3 = jax.block_until_ready(jax.jit(lambda xx: conv_layer_forward(p3, xx))(x3))
    assert out3.shape == (B, Cout, D, H, W)
    assert jnp.allclose(out3, ref3, atol=5e-2, rtol=5e-2), \
        float(jnp.max(jnp.abs(out3 - ref3)))

    out3_f32 = jax.block_until_ready(
        jax.jit(lambda xx: conv_layer_forward(p3, xx, operand_dtype=None))(x3))
    assert jnp.allclose(out3_f32, ref3, atol=1e-3, rtol=1e-3), \
        float(jnp.max(jnp.abs(out3_f32 - ref3)))

    # 2-D path (spatial_dims=2)
    x2 = jax.random.normal(kx2, (B, Cin, H, W), jnp.float32)
    p2 = init_conv_layer(kp2, Cin, Cout, window_size=H, spatial_dims=2)
    ref2 = _ref_forward(p2, x2)

    out2 = jax.block_until_ready(jax.jit(lambda xx: conv_layer_forward(p2, xx))(x2))
    assert out2.shape == (B, Cout, H, W)
    assert jnp.allclose(out2, ref2, atol=5e-2, rtol=5e-2), \
        float(jnp.max(jnp.abs(out2 - ref2)))

    out2_f32 = jax.block_until_ready(
        jax.jit(lambda xx: conv_layer_forward(p2, xx, operand_dtype=None))(x2))
    assert jnp.allclose(out2_f32, ref2, atol=1e-3, rtol=1e-3), \
        float(jnp.max(jnp.abs(out2_f32 - ref2)))

    print("KERNEL_OK")
</pallas_src>

<mosaic_0001>
module attributes {stable_mosaic.version = 11 : i64} {
  func.func @_conv_stacked_kernel(%arg0: i32, %arg1: i32, %arg2: memref<2x16x3888xbf16, #tpu.memory_space<any>>, %arg3: memref<8x432xbf16, #tpu.memory_space<vmem>>, %arg4: memref<8x1xf32, #tpu.memory_space<vmem>>, %arg5: memref<1x8x1408xf32, #tpu.memory_space<vmem>>, %arg6: memref<2x16x2176xbf16, #tpu.memory_space<vmem>>, %arg7: memref<432x1408xbf16, #tpu.memory_space<vmem>>, %arg8: memref<2x!tpu.dma_semaphore, #tpu.memory_space<semaphore_mem>>) attributes {dimension_semantics = [#tpu.dimension_semantics<parallel>, #tpu.dimension_semantics<arbitrary>], iteration_bounds = array<i64: 2, 2>, scalar_prefetch = 0 : i64, scratch_operands = 3 : i64, tpu.core_type = #tpu.core_type<tc>, window_params = [{}, {pipeline_mode = #tpu.pipeline_mode<synchronous>, transform_indices = @transform_1, window_bounds = array<i64: 8, 432>}, {pipeline_mode = #tpu.pipeline_mode<synchronous>, transform_indices = @transform_2, window_bounds = array<i64: 8, 1>}, {transform_indices = @transform_3, window_bounds = array<i64: 1, 8, 1408>}]} {
    %c1_i32 = arith.constant 1 : i32
    %0 = arith.andi %arg1, %c1_i32 : i32
    %c0_i32 = arith.constant 0 : i32
    %1 = arith.cmpi eq, %arg1, %c0_i32 : i32
    %2 = arith.extui %1 : i1 to i32
    %c0_i32_0 = arith.constant 0 : i32
    %3 = arith.cmpi ne, %2, %c0_i32_0 : i32
    scf.if %3 {
      %c0_i32_70 = arith.constant 0 : i32
      %c0_i32_71 = arith.constant 0 : i32
      %c0_i32_72 = arith.constant 0 : i32
      %c0_i32_73 = arith.constant 0 : i32
      %132 = tpu.memref_slice %arg2[%arg0, %c0_i32_72, %c0_i32_73] : memref<2x16x3888xbf16, #tpu.memory_space<any>> -> memref<1x16x2176xbf16, #tpu.memory_space<any>>
      %133 = tpu.memref_squeeze %132 : memref<1x16x2176xbf16, #tpu.memory_space<any>> -> memref<16x2176xbf16, #tpu.memory_space<any>>
      %c0_i32_74 = arith.constant 0 : i32
      %c0_i32_75 = arith.constant 0 : i32
      %134 = tpu.memref_slice %arg6[%c0_i32_70, %c0_i32_74, %c0_i32_75] : memref<2x16x2176xbf16, #tpu.memory_space<vmem>> -> memref<1x16x2176xbf16, #tpu.memory_space<vmem>>
      %135 = tpu.memref_squeeze %134 : memref<1x16x2176xbf16, #tpu.memory_space<vmem>> -> memref<16x2176xbf16, #tpu.memory_space<vmem>>
      %136 = tpu.memref_slice %arg8[%c0_i32_71] : memref<2x!tpu.dma_semaphore, #tpu.memory_space<semaphore_mem>> -> memref<1x!tpu.dma_semaphore, #tpu.memory_space<semaphore_mem>>
      %137 = tpu.memref_squeeze %136 : memref<1x!tpu.dma_semaphore, #tpu.memory_space<semaphore_mem>> -> memref<!tpu.dma_semaphore, #tpu.memory_space<semaphore_mem>>
      tpu.enqueue_dma source(%133 : memref<16x2176xbf16, #tpu.memory_space<any>>) target(%135 : memref<16x2176xbf16, #tpu.memory_space<vmem>>) target_semaphore(%137 : memref<!tpu.dma_semaphore, #tpu.memory_space<semaphore_mem>>)
    } else {
    }
    %c1408_i32 = arith.constant 1408 : i32
    %4 = arith.muli %arg1, %c1408_i32 : i32
    %c0_i32_1 = arith.constant 0 : i32
    %5 = tpu.memref_slice %arg2[%arg0, %c0_i32_1, %4] : memref<2x16x3888xbf16, #tpu.memory_space<any>> -> memref<1x16x2176xbf16, #tpu.memory_space<any>>
    %6 = tpu.memref_squeeze %5 : memref<1x16x2176xbf16, #tpu.memory_space<any>> -> memref<16x2176xbf16, #tpu.memory_space<any>>
    %c0_i32_2 = arith.constant 0 : i32
    %c0_i32_3 = arith.constant 0 : i32
    %7 = tpu.memref_slice %arg6[%0, %c0_i32_2, %c0_i32_3] : memref<2x16x2176xbf16, #tpu.memory_space<vmem>> -> memref<1x16x2176xbf16, #tpu.memory_space<vmem>>
    %8 = tpu.memref_squeeze %7 : memref<1x16x2176xbf16, #tpu.memory_space<vmem>> -> memref<16x2176xbf16, #tpu.memory_space<vmem>>
    %9 = tpu.memref_slice %arg8[%0] : memref<2x!tpu.dma_semaphore, #tpu.memory_space<semaphore_mem>> -> memref<1x!tpu.dma_semaphore, #tpu.memory_space<semaphore_mem>>
    %10 = tpu.memref_squeeze %9 : memref<1x!tpu.dma_semaphore, #tpu.memory_space<semaphore_mem>> -> memref<!tpu.dma_semaphore, #tpu.memory_space<semaphore_mem>>
    tpu.wait_dma2 semaphore(%10 : memref<!tpu.dma_semaphore, #tpu.memory_space<semaphore_mem>>) src(%6 : memref<16x2176xbf16, #tpu.memory_space<any>>) dst(%8 : memref<16x2176xbf16, #tpu.memory_space<vmem>>)
    %c1_i32_4 = arith.constant 1 : i32
    %11 = arith.addi %arg1, %c1_i32_4 : i32
    %c2_i32 = arith.constant 2 : i32
    %12 = arith.cmpi slt, %11, %c2_i32 : i32
    %13 = arith.extui %12 : i1 to i32
    %c0_i32_5 = arith.constant 0 : i32
    %14 = arith.cmpi ne, %13, %c0_i32_5 : i32
    scf.if %14 {
      %c1_i32_70 = arith.constant 1 : i32
      %132 = arith.addi %arg1, %c1_i32_70 : i32
      %c1_i32_71 = arith.constant 1 : i32
      %133 = arith.subi %c1_i32_71, %0 : i32
      %c1408_i32_72 = arith.constant 1408 : i32
      %134 = arith.muli %132, %c1408_i32_72 : i32
      %c0_i32_73 = arith.constant 0 : i32
      %135 = tpu.memref_slice %arg2[%arg0, %c0_i32_73, %134] : memref<2x16x3888xbf16, #tpu.memory_space<any>> -> memref<1x16x2176xbf16, #tpu.memory_space<any>>
      %136 = tpu.memref_squeeze %135 : memref<1x16x2176xbf16, #tpu.memory_space<any>> -> memref<16x2176xbf16, #tpu.memory_space<any>>
      %c0_i32_74 = arith.constant 0 : i32
      %c0_i32_75 = arith.constant 0 : i32
      %137 = tpu.memref_slice %arg6[%133, %c0_i32_74, %c0_i32_75] : memref<2x16x2176xbf16, #tpu.memory_space<vmem>> -> memref<1x16x2176xbf16, #tpu.memory_space<vmem>>
      %138 = tpu.memref_squeeze %137 : memref<1x16x2176xbf16, #tpu.memory_space<vmem>> -> memref<16x2176xbf16, #tpu.memory_space<vmem>>
      %139 = tpu.memref_slice %arg8[%133] : memref<2x!tpu.dma_semaphore, #tpu.memory_space<semaphore_mem>> -> memref<1x!tpu.dma_semaphore, #tpu.memory_space<semaphore_mem>>
      %140 = tpu.memref_squeeze %139 : memref<1x!tpu.dma_semaphore, #tpu.memory_space<semaphore_mem>> -> memref<!tpu.dma_semaphore, #tpu.memory_space<semaphore_mem>>
      tpu.enqueue_dma source(%136 : memref<16x2176xbf16, #tpu.memory_space<any>>) target(%138 : memref<16x2176xbf16, #tpu.memory_space<vmem>>) target_semaphore(%140 : memref<!tpu.dma_semaphore, #tpu.memory_space<semaphore_mem>>)
    } else {
    }
    %15 = arith.index_cast %0 : i32 to index
    %c0 = arith.constant 0 : index
    %c0_6 = arith.constant 0 : index
    %16 = vector.load %arg6[%15, %c0, %c0_6] : memref<2x16x2176xbf16, #tpu.memory_space<vmem>>, vector<1x16x1408xbf16>
    %17 = vector.shape_cast %16 : vector<1x16x1408xbf16> to vector<16x1408xbf16>
    %c0_7 = arith.constant 0 : index
    %c0_8 = arith.constant 0 : index
    %18 = vector.load %arg7[%c0_7, %c0_8] : memref<432x1408xbf16, #tpu.memory_space<vmem>>, vector<16x1408xbf16>
    tpu.vector_store %arg7[%c0_7, %c0_8], %17 {strides = array<i32>} : memref<432x1408xbf16, #tpu.memory_space<vmem>>, vector<16x1408xbf16>,
    %19 = arith.index_cast %0 : i32 to index
    %c0_9 = arith.constant 0 : index
    %c1 = arith.constant 1 : index
    %20 = vector.load %arg6[%19, %c0_9, %c1] : memref<2x16x2176xbf16, #tpu.memory_space<vmem>>, vector<1x16x1408xbf16>
    %21 = vector.shape_cast %20 : vector<1x16x1408xbf16> to vector<16x1408xbf16>
    %c16 = arith.constant 16 : index
    %c0_10 = arith.constant 0 : index
    %22 = vector.load %arg7[%c16, %c0_10] : memref<432x1408xbf16, #tpu.memory_space<vmem>>, vector<16x1408xbf16>
    tpu.vector_store %arg7[%c16, %c0_10], %21 {strides = array<i32>} : memref<432x1408xbf16, #tpu.memory_space<vmem>>, vector<16x1408xbf16>,
    %23 = arith.index_cast %0 : i32 to index
    %c0_11 = arith.constant 0 : index
    %c2 = arith.constant 2 : index
    %24 = vector.load %arg6[%23, %c0_11, %c2] : memref<2x16x2176xbf16, #tpu.memory_space<vmem>>, vector<1x16x1408xbf16>
    %25 = vector.shape_cast %24 : vector<1x16x1408xbf16> to vector<16x1408xbf16>
    %c32 = arith.constant 32 : index
    %c0_12 = arith.constant 0 : index
    %26 = vector.load %arg7[%c32, %c0_12] : memref<432x1408xbf16, #tpu.memory_space<vmem>>, vector<16x1408xbf16>
    tpu.vector_store %arg7[%c32, %c0_12], %25 {strides = array<i32>} : memref<432x1408xbf16, #tpu.memory_space<vmem>>, vector<16x1408xbf16>,
    %27 = arith.index_cast %0 : i32 to index
    %c0_13 = arith.constant 0 : index
    %c18 = arith.constant 18 : index
    %28 = vector.load %arg6[%27, %c0_13, %c18] : memref<2x16x2176xbf16, #tpu.memory_space<vmem>>, vector<1x16x1408xbf16>
    %29 = vector.shape_cast %28 : vector<1x16x1408xbf16> to vector<16x1408xbf16>
    %c48 = arith.constant 48 : index
    %c0_14 = arith.constant 0 : index
    %30 = vector.load %arg7[%c48, %c0_14] : memref<432x1408xbf16, #tpu.memory_space<vmem>>, vector<16x1408xbf16>
    tpu.vector_store %arg7[%c48, %c0_14], %29 {strides = array<i32>} : memref<432x1408xbf16, #tpu.memory_space<vmem>>, vector<16x1408xbf16>,
    %31 = arith.index_cast %0 : i32 to index
    %c0_15 = arith.constant 0 : index
    %c19 = arith.constant 19 : index
    %32 = vector.load %arg6[%31, %c0_15, %c19] : memref<2x16x2176xbf16, #tpu.memory_space<vmem>>, vector<1x16x1408xbf16>
    %33 = vector.shape_cast %32 : vector<1x16x1408xbf16> to vector<16x1408xbf16>
    %c64 = arith.constant 64 : index
    %c0_16 = arith.constant 0 : index
    %34 = vector.load %arg7[%c64, %c0_16] : memref<432x1408xbf16, #tpu.memory_space<vmem>>, vector<16x1408xbf16>
    tpu.vector_store %arg7[%c64, %c0_16], %33 {strides = array<i32>} : memref<432x1408xbf16, #tpu.memory_space<vmem>>, vector<16x1408xbf16>,
    %35 = arith.index_cast %0 : i32 to index
    %c0_17 = arith.constant 0 : index
    %c20 = arith.constant 20 : index
    %36 = vector.load %arg6[%35, %c0_17, %c20] : memref<2x16x2176xbf16, #tpu.memory_space<vmem>>, vector<1x16x1408xbf16>
    %37 = vector.shape_cast %36 : vector<1x16x1408xbf16> to vector<16x1408xbf16>
    %c80 = arith.constant 80 : index
    %c0_18 = arith.constant 0 : index
    %38 = vector.load %arg7[%c80, %c0_18] : memref<432x1408xbf16, #tpu.memory_space<vmem>>, vector<16x1408xbf16>
    tpu.vector_store %arg7[%c80, %c0_18], %37 {strides = array<i32>} : memref<432x1408xbf16, #tpu.memory_space<vmem>>, vector<16x1408xbf16>,
    %39 = arith.index_cast %0 : i32 to index
    %c0_19 = arith.constant 0 : index
    %c36 = arith.constant 36 : index
    %40 = vector.load %arg6[%39, %c0_19, %c36] : memref<2x16x2176xbf16, #tpu.memory_space<vmem>>, vector<1x16x1408xbf16>
    %41 = vector.shape_cast %40 : vector<1x16x1408xbf16> to vector<16x1408xbf16>
    %c96 = arith.constant 96 : index
    %c0_20 = arith.constant 0 : index
    %42 = vector.load %arg7[%c96, %c0_20] : memref<432x1408xbf16, #tpu.memory_space<vmem>>, vector<16x1408xbf16>
    tpu.vector_store %arg7[%c96, %c0_20], %41 {strides = array<i32>} : memref<432x1408xbf16, #tpu.memory_space<vmem>>, vector<16x1408xbf16>,
    %43 = arith.index_cast %0 : i32 to index
    %c0_21 = arith.constant 0 : index
    %c37 = arith.constant 37 : index
    %44 = vector.load %arg6[%43, %c0_21, %c37] : memref<2x16x2176xbf16, #tpu.memory_space<vmem>>, vector<1x16x1408xbf16>
    %45 = vector.shape_cast %44 : vector<1x16x1408xbf16> to vector<16x1408xbf16>
    %c112 = arith.constant 112 : index
    %c0_22 = arith.constant 0 : index
    %46 = vector.load %arg7[%c112, %c0_22] : memref<432x1408xbf16, #tpu.memory_space<vmem>>, vector<16x1408xbf16>
    tpu.vector_store %arg7[%c112, %c0_22], %45 {strides = array<i32>} : memref<432x1408xbf16, #tpu.memory_space<vmem>>, vector<16x1408xbf16>,
    %47 = arith.index_cast %0 : i32 to index
    %c0_23 = arith.constant 0 : index
    %c38 = arith.constant 38 : index
    %48 = vector.load %arg6[%47, %c0_23, %c38] : memref<2x16x2176xbf16, #tpu.memory_space<vmem>>, vector<1x16x1408xbf16>
    %49 = vector.shape_cast %48 : vector<1x16x1408xbf16> to vector<16x1408xbf16>
    %c128 = arith.constant 128 : index
    %c0_24 = arith.constant 0 : index
    %50 = vector.load %arg7[%c128, %c0_24] : memref<432x1408xbf16, #tpu.memory_space<vmem>>, vector<16x1408xbf16>
    tpu.vector_store %arg7[%c128, %c0_24], %49 {strides = array<i32>} : memref<432x1408xbf16, #tpu.memory_space<vmem>>, vector<16x1408xbf16>,
    %51 = arith.index_cast %0 : i32 to index
    %c0_25 = arith.constant 0 : index
    %c324 = arith.constant 324 : index
    %52 = vector.load %arg6[%51, %c0_25, %c324] : memref<2x16x2176xbf16, #tpu.memory_space<vmem>>, vector<1x16x1408xbf16>
    %53 = vector.shape_cast %52 : vector<1x16x1408xbf16> to vector<16x1408xbf16>
    %c144 = arith.constant 144 : index
    %c0_26 = arith.constant 0 : index
    %54 = vector.load %arg7[%c144, %c0_26] : memref<432x1408xbf16, #tpu.memory_space<vmem>>, vector<16x1408xbf16>
    tpu.vector_store %arg7[%c144, %c0_26], %53 {strides = array<i32>} : memref<432x1408xbf16, #tpu.memory_space<vmem>>, vector<16x1408xbf16>,
    %55 = arith.index_cast %0 : i32 to index
    %c0_27 = arith.constant 0 : index
    %c325 = arith.constant 325 : index
    %56 = vector.load %arg6[%55, %c0_27, %c325] : memref<2x16x2176xbf16, #tpu.memory_space<vmem>>, vector<1x16x1408xbf16>
    %57 = vector.shape_cast %56 : vector<1x16x1408xbf16> to vector<16x1408xbf16>
    %c160 = arith.constant 160 : index
    %c0_28 = arith.constant 0 : index
    %58 = vector.load %arg7[%c160, %c0_28] : memref<432x1408xbf16, #tpu.memory_space<vmem>>, vector<16x1408xbf16>
    tpu.vector_store %arg7[%c160, %c0_28], %57 {strides = array<i32>} : memref<432x1408xbf16, #tpu.memory_space<vmem>>, vector<16x1408xbf16>,
    %59 = arith.index_cast %0 : i32 to index
    %c0_29 = arith.constant 0 : index
    %c326 = arith.constant 326 : index
    %60 = vector.load %arg6[%59, %c0_29, %c326] : memref<2x16x2176xbf16, #tpu.memory_space<vmem>>, vector<1x16x1408xbf16>
    %61 = vector.shape_cast %60 : vector<1x16x1408xbf16> to vector<16x1408xbf16>
    %c176 = arith.constant 176 : index
    %c0_30 = arith.constant 0 : index
    %62 = vector.load %arg7[%c176, %c0_30] : memref<432x1408xbf16, #tpu.memory_space<vmem>>, vector<16x1408xbf16>
    tpu.vector_store %arg7[%c176, %c0_30], %61 {strides = array<i32>} : memref<432x1408xbf16, #tpu.memory_space<vmem>>, vector<16x1408xbf16>,
    %63 = arith.index_cast %0 : i32 to index
    %c0_31 = arith.constant 0 : index
    %c342 = arith.constant 342 : index
    %64 = vector.load %arg6[%63, %c0_31, %c342] : memref<2x16x2176xbf16, #tpu.memory_space<vmem>>, vector<1x16x1408xbf16>
    %65 = vector.shape_cast %64 : vector<1x16x1408xbf16> to vector<16x1408xbf16>
    %c192 = arith.constant 192 : index
    %c0_32 = arith.constant 0 : index
    %66 = vector.load %arg7[%c192, %c0_32] : memref<432x1408xbf16, #tpu.memory_space<vmem>>, vector<16x1408xbf16>
    tpu.vector_store %arg7[%c192, %c0_32], %65 {strides = array<i32>} : memref<432x1408xbf16, #tpu.memory_space<vmem>>, vector<16x1408xbf16>,
    %67 = arith.index_cast %0 : i32 to index
    %c0_33 = arith.constant 0 : index
    %c343 = arith.constant 343 : index
    %68 = vector.load %arg6[%67, %c0_33, %c343] : memref<2x16x2176xbf16, #tpu.memory_space<vmem>>, vector<1x16x1408xbf16>
    %69 = vector.shape_cast %68 : vector<1x16x1408xbf16> to vector<16x1408xbf16>
    %c208 = arith.constant 208 : index
    %c0_34 = arith.constant 0 : index
    %70 = vector.load %arg7[%c208, %c0_34] : memref<432x1408xbf16, #tpu.memory_space<vmem>>, vector<16x1408xbf16>
    tpu.vector_store %arg7[%c208, %c0_34], %69 {strides = array<i32>} : memref<432x1408xbf16, #tpu.memory_space<vmem>>, vector<16x1408xbf16>,
    %71 = arith.index_cast %0 : i32 to index
    %c0_35 = arith.constant 0 : index
    %c344 = arith.constant 344 : index
    %72 = vector.load %arg6[%71, %c0_35, %c344] : memref<2x16x2176xbf16, #tpu.memory_space<vmem>>, vector<1x16x1408xbf16>
    %73 = vector.shape_cast %72 : vector<1x16x1408xbf16> to vector<16x1408xbf16>
    %c224 = arith.constant 224 : index
    %c0_36 = arith.constant 0 : index
    %74 = vector.load %arg7[%c224, %c0_36] : memref<432x1408xbf16, #tpu.memory_space<vmem>>, vector<16x1408xbf16>
    tpu.vector_store %arg7[%c224, %c0_36], %73 {strides = array<i32>} : memref<432x1408xbf16, #tpu.memory_space<vmem>>, vector<16x1408xbf16>,
    %75 = arith.index_cast %0 : i32 to index
    %c0_37 = arith.constant 0 : index
    %c360 = arith.constant 360 : index
    %76 = vector.load %arg6[%75, %c0_37, %c360] : memref<2x16x2176xbf16, #tpu.memory_space<vmem>>, vector<1x16x1408xbf16>
    %77 = vector.shape_cast %76 : vector<1x16x1408xbf16> to vector<16x1408xbf16>
    %c240 = arith.constant 240 : index
    %c0_38 = arith.constant 0 : index
    %78 = vector.load %arg7[%c240, %c0_38] : memref<432x1408xbf16, #tpu.memory_space<vmem>>, vector<16x1408xbf16>
    tpu.vector_store %arg7[%c240, %c0_38], %77 {strides = array<i32>} : memref<432x1408xbf16, #tpu.memory_space<vmem>>, vector<16x1408xbf16>,
    %79 = arith.index_cast %0 : i32 to index
    %c0_39 = arith.constant 0 : index
    %c361 = arith.constant 361 : index
    %80 = vector.load %arg6[%79, %c0_39, %c361] : memref<2x16x2176xbf16, #tpu.memory_space<vmem>>, vector<1x16x1408xbf16>
    %81 = vector.shape_cast %80 : vector<1x16x1408xbf16> to vector<16x1408xbf16>
    %c256 = arith.constant 256 : index
    %c0_40 = arith.constant 0 : index
    %82 = vector.load %arg7[%c256, %c0_40] : memref<432x1408xbf16, #tpu.memory_space<vmem>>, vector<16x1408xbf16>
    tpu.vector_store %arg7[%c256, %c0_40], %81 {strides = array<i32>} : memref<432x1408xbf16, #tpu.memory_space<vmem>>, vector<16x1408xbf16>,
    %83 = arith.index_cast %0 : i32 to index
    %c0_41 = arith.constant 0 : index
    %c362 = arith.constant 362 : index
    %84 = vector.load %arg6[%83, %c0_41, %c362] : memref<2x16x2176xbf16, #tpu.memory_space<vmem>>, vector<1x16x1408xbf16>
    %85 = vector.shape_cast %84 : vector<1x16x1408xbf16> to vector<16x1408xbf16>
    %c272 = arith.constant 272 : index
    %c0_42 = arith.constant 0 : index
    %86 = vector.load %arg7[%c272, %c0_42] : memref<432x1408xbf16, #tpu.memory_space<vmem>>, vector<16x1408xbf16>
    tpu.vector_store %arg7[%c272, %c0_42], %85 {strides = array<i32>} : memref<432x1408xbf16, #tpu.memory_space<vmem>>, vector<16x1408xbf16>,
    %87 = arith.index_cast %0 : i32 to index
    %c0_43 = arith.constant 0 : index
    %c648 = arith.constant 648 : index
    %88 = vector.load %arg6[%87, %c0_43, %c648] : memref<2x16x2176xbf16, #tpu.memory_space<vmem>>, vector<1x16x1408xbf16>
    %89 = vector.shape_cast %88 : vector<1x16x1408xbf16> to vector<16x1408xbf16>
    %c288 = arith.constant 288 : index
    %c0_44 = arith.constant 0 : index
    %90 = vector.load %arg7[%c288, %c0_44] : memref<432x1408xbf16, #tpu.memory_space<vmem>>, vector<16x1408xbf16>
    tpu.vector_store %arg7[%c288, %c0_44], %89 {strides = array<i32>} : memref<432x1408xbf16, #tpu.memory_space<vmem>>, vector<16x1408xbf16>,
    %91 = arith.index_cast %0 : i32 to index
    %c0_45 = arith.constant 0 : index
    %c649 = arith.constant 649 : index
    %92 = vector.load %arg6[%91, %c0_45, %c649] : memref<2x16x2176xbf16, #tpu.memory_space<vmem>>, vector<1x16x1408xbf16>
    %93 = vector.shape_cast %92 : vector<1x16x1408xbf16> to vector<16x1408xbf16>
    %c304 = arith.constant 304 : index
    %c0_46 = arith.constant 0 : index
    %94 = vector.load %arg7[%c304, %c0_46] : memref<432x1408xbf16, #tpu.memory_space<vmem>>, vector<16x1408xbf16>
    tpu.vector_store %arg7[%c304, %c0_46], %93 {strides = array<i32>} : memref<432x1408xbf16, #tpu.memory_space<vmem>>, vector<16x1408xbf16>,
    %95 = arith.index_cast %0 : i32 to index
    %c0_47 = arith.constant 0 : index
    %c650 = arith.constant 650 : index
    %96 = vector.load %arg6[%95, %c0_47, %c650] : memref<2x16x2176xbf16, #tpu.memory_space<vmem>>, vector<1x16x1408xbf16>
    %97 = vector.shape_cast %96 : vector<1x16x1408xbf16> to vector<16x1408xbf16>
    %c320 = arith.constant 320 : index
    %c0_48 = arith.constant 0 : index
    %98 = vector.load %arg7[%c320, %c0_48] : memref<432x1408xbf16, #tpu.memory_space<vmem>>, vector<16x1408xbf16>
    tpu.vector_store %arg7[%c320, %c0_48], %97 {strides = array<i32>} : memref<432x1408xbf16, #tpu.memory_space<vmem>>, vector<16x1408xbf16>,
    %99 = arith.index_cast %0 : i32 to index
    %c0_49 = arith.constant 0 : index
    %c666 = arith.constant 666 : index
    %100 = vector.load %arg6[%99, %c0_49, %c666] : memref<2x16x2176xbf16, #tpu.memory_space<vmem>>, vector<1x16x1408xbf16>
    %101 = vector.shape_cast %100 : vector<1x16x1408xbf16> to vector<16x1408xbf16>
    %c336 = arith.constant 336 : index
    %c0_50 = arith.constant 0 : index
    %102 = vector.load %arg7[%c336, %c0_50] : memref<432x1408xbf16, #tpu.memory_space<vmem>>, vector<16x1408xbf16>
    tpu.vector_store %arg7[%c336, %c0_50], %101 {strides = array<i32>} : memref<432x1408xbf16, #tpu.memory_space<vmem>>, vector<16x1408xbf16>,
    %103 = arith.index_cast %0 : i32 to index
    %c0_51 = arith.constant 0 : index
    %c667 = arith.constant 667 : index
    %104 = vector.load %arg6[%103, %c0_51, %c667] : memref<2x16x2176xbf16, #tpu.memory_space<vmem>>, vector<1x16x1408xbf16>
    %105 = vector.shape_cast %104 : vector<1x16x1408xbf16> to vector<16x1408xbf16>
    %c352 = arith.constant 352 : index
    %c0_52 = arith.constant 0 : index
    %106 = vector.load %arg7[%c352, %c0_52] : memref<432x1408xbf16, #tpu.memory_space<vmem>>, vector<16x1408xbf16>
    tpu.vector_store %arg7[%c352, %c0_52], %105 {strides = array<i32>} : memref<432x1408xbf16, #tpu.memory_space<vmem>>, vector<16x1408xbf16>,
    %107 = arith.index_cast %0 : i32 to index
    %c0_53 = arith.constant 0 : index
    %c668 = arith.constant 668 : index
    %108 = vector.load %arg6[%107, %c0_53, %c668] : memref<2x16x2176xbf16, #tpu.memory_space<vmem>>, vector<1x16x1408xbf16>
    %109 = vector.shape_cast %108 : vector<1x16x1408xbf16> to vector<16x1408xbf16>
    %c368 = arith.constant 368 : index
    %c0_54 = arith.constant 0 : index
    %110 = vector.load %arg7[%c368, %c0_54] : memref<432x1408xbf16, #tpu.memory_space<vmem>>, vector<16x1408xbf16>
    tpu.vector_store %arg7[%c368, %c0_54], %109 {strides = array<i32>} : memref<432x1408xbf16, #tpu.memory_space<vmem>>, vector<16x1408xbf16>,
    %111 = arith.index_cast %0 : i32 to index
    %c0_55 = arith.constant 0 : index
    %c684 = arith.constant 684 : index
    %112 = vector.load %arg6[%111, %c0_55, %c684] : memref<2x16x2176xbf16, #tpu.memory_space<vmem>>, vector<1x16x1408xbf16>
    %113 = vector.shape_cast %112 : vector<1x16x1408xbf16> to vector<16x1408xbf16>
    %c384 = arith.constant 384 : index
    %c0_56 = arith.constant 0 : index
    %114 = vector.load %arg7[%c384, %c0_56] : memref<432x1408xbf16, #tpu.memory_space<vmem>>, vector<16x1408xbf16>
    tpu.vector_store %arg7[%c384, %c0_56], %113 {strides = array<i32>} : memref<432x1408xbf16, #tpu.memory_space<vmem>>, vector<16x1408xbf16>,
    %115 = arith.index_cast %0 : i32 to index
    %c0_57 = arith.constant 0 : index
    %c685 = arith.constant 685 : index
    %116 = vector.load %arg6[%115, %c0_57, %c685] : memref<2x16x2176xbf16, #tpu.memory_space<vmem>>, vector<1x16x1408xbf16>
    %117 = vector.shape_cast %116 : vector<1x16x1408xbf16> to vector<16x1408xbf16>
    %c400 = arith.constant 400 : index
    %c0_58 = arith.constant 0 : index
    %118 = vector.load %arg7[%c400, %c0_58] : memref<432x1408xbf16, #tpu.memory_space<vmem>>, vector<16x1408xbf16>
    tpu.vector_store %arg7[%c400, %c0_58], %117 {strides = array<i32>} : memref<432x1408xbf16, #tpu.memory_space<vmem>>, vector<16x1408xbf16>,
    %119 = arith.index_cast %0 : i32 to index
    %c0_59 = arith.constant 0 : index
    %c686 = arith.constant 686 : index
    %120 = vector.load %arg6[%119, %c0_59, %c686] : memref<2x16x2176xbf16, #tpu.memory_space<vmem>>, vector<1x16x1408xbf16>
    %121 = vector.shape_cast %120 : vector<1x16x1408xbf16> to vector<16x1408xbf16>
    %c416 = arith.constant 416 : index
    %c0_60 = arith.constant 0 : index
    %122 = vector.load %arg7[%c416, %c0_60] : memref<432x1408xbf16, #tpu.memory_space<vmem>>, vector<16x1408xbf16>
    tpu.vector_store %arg7[%c416, %c0_60], %121 {strides = array<i32>} : memref<432x1408xbf16, #tpu.memory_space<vmem>>, vector<16x1408xbf16>,
    %c0_61 = arith.constant 0 : index
    %c0_62 = arith.constant 0 : index
    %123 = vector.load %arg3[%c0_61, %c0_62] : memref<8x432xbf16, #tpu.memory_space<vmem>>, vector<8x432xbf16>
    %c0_63 = arith.constant 0 : index
    %c0_64 = arith.constant 0 : index
    %124 = vector.load %arg7[%c0_63, %c0_64] : memref<432x1408xbf16, #tpu.memory_space<vmem>>, vector<432x1408xbf16>
    %cst = arith.constant dense<0.000000e+00> : vector<8x1408xf32>
    %125 = tpu.matmul %123, %124, %cst {dimension_numbers = #tpu.dot_dimension_numbers<[1], [0], [0], [1], [0, 0, 1, 1], [], []>} : vector<8x432xbf16>, vector<432x1408xbf16>, vector<8x1408xf32> -> vector<8x1408xf32>
    %c0_65 = arith.constant 0 : index
    %c0_66 = arith.constant 0 : index
    %126 = vector.load %arg4[%c0_65, %c0_66] : memref<8x1xf32, #tpu.memory_space<vmem>>, vector<8x1xf32>
    %127 = vector.broadcast %126 : vector<8x1xf32> to vector<8x1408xf32>
    %128 = arith.addf %125, %127 : vector<8x1408xf32>
    %c0_67 = arith.constant 0 : index
    %c0_68 = arith.constant 0 : index
    %c0_69 = arith.constant 0 : index
    %129 = vector.load %arg5[%c0_67, %c0_68, %c0_69] : memref<1x8x1408xf32, #tpu.memory_space<vmem>>, vector<1x8x1408xf32>
    %130 = vector.shape_cast %129 : vector<1x8x1408xf32> to vector<8x1408xf32>
    %131 = vector.shape_cast %128 : vector<8x1408xf32> to vector<1x8x1408xf32>
    tpu.vector_store %arg5[%c0_67, %c0_68, %c0_69], %131 {strides = array<i32>} : memref<1x8x1408xf32, #tpu.memory_space<vmem>>, vector<1x8x1408xf32>,
    return
  }
  func.func @transform_1(%arg0: i32, %arg1: i32) -> (i32, i32) {
    %c0_i32 = arith.constant 0 : i32
    %c0_i32_0 = arith.constant 0 : i32
    %c0_i32_1 = arith.constant 0 : i32
    return %c0_i32, %c0_i32_0 : i32, i32
  }
  func.func @transform_2(%arg0: i32, %arg1: i32) -> (i32, i32) {
    %c0_i32 = arith.constant 0 : i32
    %c0_i32_0 = arith.constant 0 : i32
    %c0_i32_1 = arith.constant 0 : i32
    return %c0_i32, %c0_i32_0 : i32, i32
  }
  func.func @transform_3(%arg0: i32, %arg1: i32) -> (i32, i32, i32) {
    %c0_i32 = arith.constant 0 : i32
    %c0_i32_0 = arith.constant 0 : i32
    return %arg0, %c0_i32, %arg1 : i32, i32, i32
  }
}

</mosaic_0001>

<llo_original>
// kernel: _lambda_.1
$region0: #{_lambda_.1}
  #allocation0 [shape = 'u32[]', space=smem, size = 0x4, offset = 0x4, fixed_abs, tag = 'smem constant byte address 0x4 - core index']
  #allocation1 [shape = 'u32[72,128]{1,0:T(1,128)}', space=vmem, size = 0x9000, scoped, tag = 'internal scratch']
  #allocation2 [shape = 'bf16[2,16,2176]{2,1,0:T(8,128)(2,1)}', space=vmem, size = 0x22000, scoped, tag = 'scratch operand']
  #allocation3 [shape = 'bf16[432,1408]{1,0:T(8,128)(2,1)}', space=vmem, size = 0x129000, scoped, tag = 'scratch operand']
  #allocation4 [shape = 's32[2]{0}', space=sflag, size = 0x8, scoped, tag = 'scratch operand']
  #allocation5 [shape = 's32[]', space=sflag, size = 0x4, offset = 0, fixed_abs, tag = 'sflag constant byte address 0x0 - dummy sync flag']
  #allocation6 [shape = 's32[]', space=sflag, size = 0x4, offset = 0, fixed_abs, tag = 'sflag constant byte address 0x0 - dummy sync flag']
  %s0 = inlined_call_operand.vmem [shape: bf16[2,16,3888], index: 0, kind: input, shape index: {}]
  %s1 = inlined_call_operand.vmem [shape: bf16[8,432], index: 1, kind: input, shape index: {}]
  %s2 = inlined_call_operand.vmem [shape: f32[8,1], index: 2, kind: input, shape index: {}]
  %s3 = inlined_call_operand.vmem [shape: f32[2,8,2816], index: 3, kind: output, shape index: {}]
  %s4 = sld [smem:[#allocation0]]
  $region93: #{_lambda_.1} parent=0
    _
  %s6 = ssub.s32 1, %s4
  %s7 = scalar_select 0, %s6, %s4
  loop: start=0, step=1, limit=6
  $region2: #{_lambda_.1} parent=0 // loop_pre_header
    _
  $region3: #{_lambda_.1} parent=0 // loop_header
    %s9 = sphi 0, %s13
    %p10 = scmp.ge.s32.totalorder %s9, 6
    %s16 = sphi 0, %s28
    %s17 = sphi 0, %s24
    %s18 = sphi 0, %s16
    %s19 = sphi 0, %s17
    %s20 = sphi 0, %s18
    %s21 = sphi 0, %s19
    %s29 = sphi 0, %s29
    %s31 = sphi 0, %s29
    %s32 = sphi 0, %s31
    %s46 = sphi 0, %s32
    %s50 = sphi 0, %s50
    %s52 = sphi 0, %s50
    %s53 = sphi 0, %s52
    %s67 = sphi 0, %s53
    %s75 = sphi 0, %s77
    %s78 = sphi 0, %s75
    %s79 = sphi 0, %s78
    %s95 = sphi 0, %s79
  $region4: #{_lambda_.1} parent=0 // loop_header_branch
    %12 = sbr.rel (%p10) target = $region8
  $region5: #{_lambda_.1} parent=0 // loop_body
    %s14 = ssub.s32 %s9, 1
    %s15 = ssub.s32 %s9, 2
    %s22 = sadd.s32 1, %s17
    %p23 = scmp.ge.s32.totalorder %s22, 2
    %s24 = scalar_select %p23, 0, %s22
    %s25 = sadd.s32 1, %s16
    %s26 = scalar_select %p23, %s25, %s16
    %p27 = scmp.ge.s32.totalorder %s26, 2
    %s28 = scalar_select %p27, 0, %s26
    %s30 = sadd.s32 %s29, 1
    %p33 = scmp.eq.s32.totalorder %s9, 3
    %p34 = scmp.ne.s32.totalorder %s29, %s31
    %p35 = scmp.eq.s32.totalorder %s9, 0
    %p36 = por %p34, %p35
    %p37 = scmp.ne.s32.totalorder %s29, %s31
    %p38 = scmp.eq.s32.totalorder %s14, 3
    %p39 = por %p37, %p38
    %p40 = scmp.ne.s32.totalorder %s31, %s32
    %p41 = scmp.eq.s32.totalorder %s14, 0
    %p42 = por %p40, %p41
    %p43 = scmp.ne.s32.totalorder %s31, %s32
    %p44 = scmp.eq.s32.totalorder %s15, 3
    %p45 = por %p43, %p44
    %p47 = scmp.ne.s32.totalorder %s32, %s46
    %p48 = scmp.eq.s32.totalorder %s15, 0
    %p49 = por %p47, %p48
    %s51 = sadd.s32 %s50, 1
    %p54 = scmp.eq.s32.totalorder %s9, 3
    %p55 = scmp.ne.s32.totalorder %s50, %s52
    %p56 = scmp.eq.s32.totalorder %s9, 0
    %p57 = por %p55, %p56
    %p58 = scmp.ne.s32.totalorder %s50, %s52
    %p59 = scmp.eq.s32.totalorder %s14, 3
    %p60 = por %p58, %p59
    %p61 = scmp.ne.s32.totalorder %s52, %s53
    %p62 = scmp.eq.s32.totalorder %s14, 0
    %p63 = por %p61, %p62
    %p64 = scmp.ne.s32.totalorder %s52, %s53
    %p65 = scmp.eq.s32.totalorder %s15, 3
    %p66 = por %p64, %p65
    %p68 = scmp.ne.s32.totalorder %s53, %s67
    %p69 = scmp.eq.s32.totalorder %s15, 0
    %p70 = por %p68, %p69
    %s71 = ssub.s32 %s16, %s28
    %s72 = ssub.s32 %s17, %s24
    %s73 = sor.u32 %s71, %s72
    %p74 = scmp.eq.s32.totalorder %s73, 0
    %s76 = sadd.s32 %s75, 1
    %s77 = scalar_select %p74, %s75, %s76
    %p80 = pneg %p74
    %p81 = scmp.eq.s32.totalorder %s9, 3
    %p82 = por %p80, %p81
    %p83 = scmp.ne.s32.totalorder %s75, %s78
    %p84 = scmp.eq.s32.totalorder %s9, 0
    %p85 = por %p83, %p84
    %p86 = scmp.ne.s32.totalorder %s75, %s78
    %p87 = scmp.eq.s32.totalorder %s14, 3
    %p88 = por %p86, %p87
    %p89 = scmp.ne.s32.totalorder %s78, %s79
    %p90 = scmp.eq.s32.totalorder %s14, 0
    %p91 = por %p89, %p90
    %p92 = scmp.ne.s32.totalorder %s78, %s79
    %p93 = scmp.eq.s32.totalorder %s15, 3
    %p94 = por %p92, %p93
    %p96 = scmp.ne.s32.totalorder %s79, %s95
    %p97 = scmp.eq.s32.totalorder %s15, 0
    %p98 = por %p96, %p97
    %p99 = scmp.le.s32.totalorder 1, %s9
    %p100 = scmp.lt.s32.totalorder %s9, 5
    %p101 = pnand %p99, %p100
    %p102 = pneg %p101
    // Predicated region
    $region9: #{_lambda_.1} parent=5 // pred_check
      _
    $region10: #{_lambda_.1} parent=5 // pred_check_branch
      %104 = sbr.rel (%p101) target = $region12
    $region11: #{_lambda_.1} parent=5 // pred_region
      %s105 = ssub.s32 %s9, 1
      // Predicated region
      $region13: #{_lambda_.1} parent=11 // pred_check
        %p106 = pneg %p42
      $region14: #{_lambda_.1} parent=11 // pred_check_branch
        %108 = sbr.rel (%p106) target = $region16
      $region15: #{_lambda_.1} parent=11 // pred_region
        _
      $region16: #{_lambda_.1} parent=11 // pred_fallthru
        _
      // Predicated region
      $region17: #{_lambda_.1} parent=11 // pred_check
        %p109 = pneg %p63
      $region18: #{_lambda_.1} parent=11 // pred_check_branch
        %111 = sbr.rel (%p109) target = $region20
      $region19: #{_lambda_.1} parent=11 // pred_region
        _
      $region20: #{_lambda_.1} parent=11 // pred_fallthru
        _
    $region12: #{_lambda_.1} parent=5 // pred_fallthru
      _
    %p112 = scmp.lt.s32.totalorder %s9, 4
    // Predicated region
    $region21: #{_lambda_.1} parent=5 // pred_check
      %p113 = pneg %p112
    $region22: #{_lambda_.1} parent=5 // pred_check_branch
      %115 = sbr.rel (%p113) target = $region24
    $region23: #{_lambda_.1} parent=5 // pred_region
      _
    $region24: #{_lambda_.1} parent=5 // pred_fallthru
      _
    %p116 = scmp.le.s32.totalorder 1, %s9
    %p117 = scmp.lt.s32.totalorder %s9, 5
    %p118 = pnand %p116, %p117
    %p119 = pneg %p118
    // Predicated region
    $region25: #{_lambda_.1} parent=5 // pred_check
      _
    $region26: #{_lambda_.1} parent=5 // pred_check_branch
      %121 = sbr.rel (%p118) target = $region28
    $region27: #{_lambda_.1} parent=5 // pred_region
      %s122 = ssub.s32 %s9, 1
      %p123 = pneg %p42
      %p124 = pneg %p39
      %p125 = pneg %p63
      %p126 = pneg %p60
      %p127 = pneg %p91
      %p128 = pneg %p88
      %s129 = smul.u32 11, %s19
      %p130 = scmp.lt.s32.totalorder %s18, 1
      %s131 = scalar_select %p130, %s18, 1
      %p132 = scmp.lt.s32.totalorder %s129, 21
      %s133 = scalar_select %p132, %s129, 21
      %s134 = smul.addr %s131, 22
      %s135 = sadd.s32 %s133, %s134
      %s136 = smul.addr %s135, 8
      %s137 = scalar_lea.vmem %s3, %s136
      %s138 = smul.u32 11, %s19
      %p139 = scmp.lt.s32.totalorder %s18, 1
      %s140 = scalar_select %p139, %s18, 1
      %p141 = scmp.lt.s32.totalorder %s138, 21
      %s142 = scalar_select %p141, %s138, 21
      %s143 = smul.addr %s140, 22
      %s144 = sadd.s32 %s142, %s143
      %s145 = smul.addr %s144, 8
      %s146 = scalar_lea.vmem %s3, %s145
      %s147 = smul.u32 11, %s19
      %s149 = sand.u32 %s19, 1
      %p150 = scmp.eq.s32.totalorder %s19, 0
      // Predicated region
      $region29: #{_lambda_.1} parent=27 // pred_check
        %p151 = pneg %p150
      $region30: #{_lambda_.1} parent=27 // pred_check_branch
        %153 = sbr.rel (%p151) target = $region32
      $region31: #{_lambda_.1} parent=27 // pred_region
        %s154 = smul.u32 %s18, 62
        %s155 = smul.addr %s154, 4
        %s156 = scalar_lea.vmem %s0, %s155
        // Predicated region
        $region33: #{_lambda_.1} parent=31 // pred_check
          _
        $region34: #{_lambda_.1} parent=31 // pred_check_branch
          %158 = sbr.rel (0) target = $region36
        $region35: #{_lambda_.1} parent=31 // pred_region
          %s159 = scalar_lea.vmem %s156, 64
          %s160 = scalar_lea.vmem [#allocation2], 64
          loop: start=0, step=1, limit=1
          $region37: #{_lambda_.1} parent=35 // loop_pre_header
            _
          $region38: #{_lambda_.1} parent=35 // loop_header
            %s162 = sphi 0, %s166
            %p163 = scmp.ge.s32.totalorder %s162, 1
            %s167 = sphi %s156, %s156
            %s168 = sphi [#allocation2], [#allocation2]
          $region39: #{_lambda_.1} parent=35 // loop_header_branch
            %165 = sbr.rel (%p163) target = $region43
          $region40: #{_lambda_.1} parent=35 // loop_body
            %v169 = vld [vmem:[%s167] sm:$0xff]
            %170 = vst [vmem:[%s168] sm:$0xff] %v169
            %v171 = vld [vmem:[%s167 + $0x8] sm:$0xff]
            %172 = vst [vmem:[%s168 + $0x8] sm:$0xff] %v171
            %v173 = vld [vmem:[%s167 + $0x10] sm:$0xff]
            %174 = vst [vmem:[%s168 + $0x10] sm:$0xff] %v173
            %v175 = vld [vmem:[%s167 + $0x18] sm:$0xff]
            %176 = vst [vmem:[%s168 + $0x18] sm:$0xff] %v175
            %v177 = vld [vmem:[%s167 + $0x20] sm:$0xff]
            %178 = vst [vmem:[%s168 + $0x20] sm:$0xff] %v177
            %v179 = vld [vmem:[%s167 + $0x28] sm:$0xff]
            %180 = vst [vmem:[%s168 + $0x28] sm:$0xff] %v179
            %v181 = vld [vmem:[%s167 + $0x30] sm:$0xff]
            %182 = vst [vmem:[%s168 + $0x30] sm:$0xff] %v181
            %v183 = vld [vmem:[%s167 + $0x38] sm:$0xff]
            %184 = vst [vmem:[%s168 + $0x38] sm:$0xff] %v183
            %v185 = vld [vmem:[%s167 + $0x7c] sm:$0xff]
            %186 = vst [vmem:[%s168 + $0x44] sm:$0xff] %v185
            %v187 = vld [vmem:[%s167 + $0x84] sm:$0xff]
            %188 = vst [vmem:[%s168 + $0x4c] sm:$0xff] %v187
            %v189 = vld [vmem:[%s167 + $0x8c] sm:$0xff]
            %190 = vst [vmem:[%s168 + $0x54] sm:$0xff] %v189
            %v191 = vld [vmem:[%s167 + $0x94] sm:$0xff]
            %192 = vst [vmem:[%s168 + $0x5c] sm:$0xff] %v191
            %v193 = vld [vmem:[%s167 + $0x9c] sm:$0xff]
            %194 = vst [vmem:[%s168 + $0x64] sm:$0xff] %v193
            %v195 = vld [vmem:[%s167 + $0xa4] sm:$0xff]
            %196 = vst [vmem:[%s168 + $0x6c] sm:$0xff] %v195
            %v197 = vld [vmem:[%s167 + $0xac] sm:$0xff]
            %198 = vst [vmem:[%s168 + $0x74] sm:$0xff] %v197
            %v199 = vld [vmem:[%s167 + $0xb4] sm:$0xff]
            %200 = vst [vmem:[%s168 + $0x7c] sm:$0xff] %v199
          $region41: #{_lambda_.1} parent=35 // loop_footer
            %s166 = sadd.s32 1, %s162
          $region42: #{_lambda_.1} parent=35 // loop_footer_branch
            %161 = sbr.rel target = $region38
          $region43: #{_lambda_.1} parent=35 // loop_exit
            _
          %s202 = ssub.s32 16, 1
          loop: start=0, step=1, limit=1
          $region44: #{_lambda_.1} parent=35 // loop_pre_header
            _
          $region45: #{_lambda_.1} parent=35 // loop_header
            %s204 = sphi 0, %s208
            %p205 = scmp.ge.s32.totalorder %s204, 1
            %s209 = sphi %s159, %s159
            %s210 = sphi %s160, %s160
          $region46: #{_lambda_.1} parent=35 // loop_header_branch
            %207 = sbr.rel (%p205) target = $region50
          $region47: #{_lambda_.1} parent=35 // loop_body
            %v211 = vld [vmem:[%s209] sm:%s202]
            %212 = vst [vmem:[%s210] sm:%s202] %v211
            %v213 = vld [vmem:[%s209 + $0x7c] sm:%s202]
            %214 = vst [vmem:[%s210 + $0x44] sm:%s202] %v213
          $region48: #{_lambda_.1} parent=35 // loop_footer
            %s208 = sadd.s32 1, %s204
          $region49: #{_lambda_.1} parent=35 // loop_footer_branch
            %203 = sbr.rel target = $region45
          $region50: #{_lambda_.1} parent=35 // loop_exit
            _
        $region36: #{_lambda_.1} parent=31 // pred_fallthru
          _
        // Predicated region
        $region51: #{_lambda_.1} parent=31 // pred_check
          _
        $region52: #{_lambda_.1} parent=31 // pred_check_branch
          %217 = sbr.rel (0) target = $region54
        $region53: #{_lambda_.1} parent=31 // pred_region
          %218 = vsyncadd [#allocation4], 2176
        $region54: #{_lambda_.1} parent=31 // pred_fallthru
          _
      $region32: #{_lambda_.1} parent=27 // pred_fallthru
        _
      %s219 = smul.u32 %s149, 34
      %s220 = smul.addr %s219, 4
      %s221 = scalar_lea.vmem [#allocation2], %s220
      %s222 = scalar_lea.sflag [#allocation4], %s149
      %s223 = smul.u32 4, 2
      %s224 = smul.u32 %s223, 17
      %s225 = sshll.u32 %s224, 4
      %226 = dma.done %s222, %s225
      %s227 = sadd.s32 %s19, 1
      %p228 = scmp.lt.s32.totalorder %s227, 2
      // Predicated region
      $region55: #{_lambda_.1} parent=27 // pred_check
        %p229 = pneg %p228
      $region56: #{_lambda_.1} parent=27 // pred_check_branch
        %231 = sbr.rel (%p229) target = $region58
      $region57: #{_lambda_.1} parent=27 // pred_region
        %s232 = ssub.s32 1, %s149
        %s233 = smul.u32 %s227, 1408
        %s234 = sshra.s32 %s233, 7
        %s235 = sand.u32 %s233, 127
        %s236 = smul.u32 %s18, 62
        %s237 = sadd.s32 %s234, %s236
        %s238 = smul.addr %s237, 4
        %s239 = scalar_lea.vmem %s0, %s238
        %s240 = smul.u32 %s232, 34
        %s241 = smul.addr %s240, 4
        %s242 = scalar_lea.vmem [#allocation2], %s241
        %s243 = scalar_lea.sflag [#allocation4], %s232
        // Predicated region
        $region59: #{_lambda_.1} parent=57 // pred_check
          _
        $region60: #{_lambda_.1} parent=57 // pred_check_branch
          %245 = sbr.rel (0) target = $region62
        $region61: #{_lambda_.1} parent=57 // pred_region
          %s246 = scalar_lea.vmem %s239, 64
          %s247 = scalar_lea.vmem %s242, 64 [#allocation2]
          loop: start=0, step=1, limit=1
          $region63: #{_lambda_.1} parent=61 // loop_pre_header
            _
          $region64: #{_lambda_.1} parent=61 // loop_header
            %s249 = sphi 0, %s253
            %p250 = scmp.ge.s32.totalorder %s249, 1
            %s254 = sphi %s239, %s239
            %s255 = sphi %s242, %s242
          $region65: #{_lambda_.1} parent=61 // loop_header_branch
            %252 = sbr.rel (%p250) target = $region69
          $region66: #{_lambda_.1} parent=61 // loop_body
            %v256 = vld [vmem:[%s254] sm:$0xff]
            %257 = vst [vmem:[%s255] sm:$0xff] %v256
            %v258 = vld [vmem:[%s254 + $0x8] sm:$0xff]
            %259 = vst [vmem:[%s255 + $0x8] sm:$0xff] %v258
            %v260 = vld [vmem:[%s254 + $0x10] sm:$0xff]
            %261 = vst [vmem:[%s255 + $0x10] sm:$0xff] %v260
            %v262 = vld [vmem:[%s254 + $0x18] sm:$0xff]
            %263 = vst [vmem:[%s255 + $0x18] sm:$0xff] %v262
            %v264 = vld [vmem:[%s254 + $0x20] sm:$0xff]
            %265 = vst [vmem:[%s255 + $0x20] sm:$0xff] %v264
            %v266 = vld [vmem:[%s254 + $0x28] sm:$0xff]
            %267 = vst [vmem:[%s255 + $0x28] sm:$0xff] %v266
            %v268 = vld [vmem:[%s254 + $0x30] sm:$0xff]
            %269 = vst [vmem:[%s255 + $0x30] sm:$0xff] %v268
            %v270 = vld [vmem:[%s254 + $0x38] sm:$0xff]
            %271 = vst [vmem:[%s255 + $0x38] sm:$0xff] %v270
            %v272 = vld [vmem:[%s254 + $0x7c] sm:$0xff]
            %273 = vst [vmem:[%s255 + $0x44] sm:$0xff] %v272
            %v274 = vld [vmem:[%s254 + $0x84] sm:$0xff]
            %275 = vst [vmem:[%s255 + $0x4c] sm:$0xff] %v274
            %v276 = vld [vmem:[%s254 + $0x8c] sm:$0xff]
            %277 = vst [vmem:[%s255 + $0x54] sm:$0xff] %v276
            %v278 = vld [vmem:[%s254 + $0x94] sm:$0xff]
            %279 = vst [vmem:[%s255 + $0x5c] sm:$0xff] %v278
            %v280 = vld [vmem:[%s254 + $0x9c] sm:$0xff]
            %281 = vst [vmem:[%s255 + $0x64] sm:$0xff] %v280
            %v282 = vld [vmem:[%s254 + $0xa4] sm:$0xff]
            %283 = vst [vmem:[%s255 + $0x6c] sm:$0xff] %v282
            %v284 = vld [vmem:[%s254 + $0xac] sm:$0xff]
            %285 = vst [vmem:[%s255 + $0x74] sm:$0xff] %v284
            %v286 = vld [vmem:[%s254 + $0xb4] sm:$0xff]
            %287 = vst [vmem:[%s255 + $0x7c] sm:$0xff] %v286
          $region67: #{_lambda_.1} parent=61 // loop_footer
            %s253 = sadd.s32 1, %s249
          $region68: #{_lambda_.1} parent=61 // loop_footer_branch
            %248 = sbr.rel target = $region64
          $region69: #{_lambda_.1} parent=61 // loop_exit
            _
          %s289 = ssub.s32 16, 1
          loop: start=0, step=1, limit=1
          $region70: #{_lambda_.1} parent=61 // loop_pre_header
            _
          $region71: #{_lambda_.1} parent=61 // loop_header
            %s291 = sphi 0, %s295
            %p292 = scmp.ge.s32.totalorder %s291, 1
            %s296 = sphi %s246, %s246
            %s297 = sphi %s247, %s247
          $region72: #{_lambda_.1} parent=61 // loop_header_branch
            %294 = sbr.rel (%p292) target = $region76
          $region73: #{_lambda_.1} parent=61 // loop_body
            %v298 = vld [vmem:[%s296] sm:%s289]
            %299 = vst [vmem:[%s297] sm:%s289] %v298
            %v300 = vld [vmem:[%s296 + $0x7c] sm:%s289]
            %301 = vst [vmem:[%s297 + $0x44] sm:%s289] %v300
          $region74: #{_lambda_.1} parent=61 // loop_footer
            %s295 = sadd.s32 1, %s291
          $region75: #{_lambda_.1} parent=61 // loop_footer_branch
            %290 = sbr.rel target = $region71
          $region76: #{_lambda_.1} parent=61 // loop_exit
            _
        $region62: #{_lambda_.1} parent=57 // pred_fallthru
          _
        // Predicated region
        $region77: #{_lambda_.1} parent=57 // pred_check
          _
        $region78: #{_lambda_.1} parent=57 // pred_check_branch
          %304 = sbr.rel (0) target = $region80
        $region79: #{_lambda_.1} parent=57 // pred_region
          %305 = vsyncadd %s243, 2176
        $region80: #{_lambda_.1} parent=57 // pred_fallthru
          _
      $region58: #{_lambda_.1} parent=27 // pred_fallthru
        _
      %v306 = vld [vmem:[%s221] sm:$0xff]
      %v307 = vld [vmem:[%s221 + $0x8] sm:$0xff]
      %v308 = vld [vmem:[%s221 + $0x10] sm:$0xff]
      %v309 = vld [vmem:[%s221 + $0x18] sm:$0xff]
      %v310 = vld [vmem:[%s221 + $0x20] sm:$0xff]
      %v311 = vld [vmem:[%s221 + $0x28] sm:$0xf]
      %v312 = vld [vmem:[%s221 + $0x44] sm:$0xff]
      %v313 = vld [vmem:[%s221 + $0x4c] sm:$0xff]
      %v314 = vld [vmem:[%s221 + $0x54] sm:$0xff]
      %v315 = vld [vmem:[%s221 + $0x5c] sm:$0xff]
      %v316 = vld [vmem:[%s221 + $0x64] sm:$0xff]
      %v317 = vld [vmem:[%s221 + $0x6c] sm:$0xf]
      %318 = vst [vmem:[#allocation3] sm:$0xff] %v306
      %319 = vst [vmem:[#allocation3 + $0x8] sm:$0xff] %v307
      %320 = vst [vmem:[#allocation3 + $0x10] sm:$0xff] %v308
      %321 = vst [vmem:[#allocation3 + $0x18] sm:$0xff] %v309
      %322 = vst [vmem:[#allocation3 + $0x20] sm:$0xff] %v310
      %323 = vst [vmem:[#allocation3 + $0x28] sm:$0xf] %v311
      %324 = vst [vmem:[#allocation3 + $0x2c] sm:$0xff] %v312
      %325 = vst [vmem:[#allocation3 + $0x34] sm:$0xff] %v313
      %326 = vst [vmem:[#allocation3 + $0x3c] sm:$0xff] %v314
      %327 = vst [vmem:[#allocation3 + $0x44] sm:$0xff] %v315
      %328 = vst [vmem:[#allocation3 + $0x4c] sm:$0xff] %v316
      %329 = vst [vmem:[#allocation3 + $0x54] sm:$0xf] %v317
      %v330 = vld [vmem:[%s221] sm:$0xff]
      %v331 = vld [vmem:[%s221 + $0x8] sm:$0xff]
      %v332 = vld [vmem:[%s221 + $0x10] sm:$0xff]
      %v333 = vld [vmem:[%s221 + $0x18] sm:$0xff]
      %v334 = vld [vmem:[%s221 + $0x20] sm:$0xff]
      %v335 = vld [vmem:[%s221 + $0x28] sm:$0xff]
      %v336 = vld [vmem:[%s221 + $0x44] sm:$0xff]
      %v337 = vld [vmem:[%s221 + $0x4c] sm:$0xff]
      %v338 = vld [vmem:[%s221 + $0x54] sm:$0xff]
      %v339 = vld [vmem:[%s221 + $0x5c] sm:$0xff]
      %v340 = vld [vmem:[%s221 + $0x64] sm:$0xff]
      %v341 = vld [vmem:[%s221 + $0x6c] sm:$0xff]
      %354 = vrot.lane.b32.xlu0 %v330, 127
      %v355 = vpop.permute.xlu0 %354
      %356 = vrot.lane.b32.xlu0 %v331, 127
      %v357 = vpop.permute.xlu0 %356
      %358 = vrot.lane.b32.xlu0 %v332, 127
      %v359 = vpop.permute.xlu0 %358
      %360 = vrot.lane.b32.xlu0 %v333, 127
      %v361 = vpop.permute.xlu0 %360
      %362 = vrot.lane.b32.xlu0 %v334, 127
      %v363 = vpop.permute.xlu0 %362
      %364 = vrot.lane.b32.xlu0 %v335, 127
      %v365 = vpop.permute.xlu0 %364
      %366 = vrot.lane.b32.xlu0 %v336, 127
      %v367 = vpop.permute.xlu0 %366
      %368 = vrot.lane.b32.xlu0 %v337, 127
      %v369 = vpop.permute.xlu0 %368
      %370 = vrot.lane.b32.xlu0 %v338, 127
      %v371 = vpop.permute.xlu0 %370
      %372 = vrot.lane.b32.xlu0 %v339, 127
      %v373 = vpop.permute.xlu0 %372
      %374 = vrot.lane.b32.xlu0 %v340, 127
      %v375 = vpop.permute.xlu0 %374
      %376 = vrot.lane.b32.xlu0 %v341, 127
      %v377 = vpop.permute.xlu0 %376
      %v378 = vrot.slane %v355, 4
      %v379 = vrot.slane %v357, 4
      %v380 = vrot.slane %v359, 4
      %v381 = vrot.slane %v361, 4
      %v382 = vrot.slane %v363, 4
      %v383 = vrot.slane %v365, 4
      %v384 = vrot.slane %v367, 4
      %v385 = vrot.slane %v369, 4
      %v386 = vrot.slane %v371, 4
      %v387 = vrot.slane %v373, 4
      %v388 = vrot.slane %v375, 4
      %v389 = vrot.slane %v377, 4
      %vm390 = vcmask 1043456
      %v391 = vsel %vm390, %v378, %v379
      %vm392 = vcmask 1039360
      %v393 = vsel %vm392, %v355, %v391
      %v394 = vsel %vm390, %v379, %v380
      %v395 = vsel %vm392, %v357, %v394
      %v396 = vsel %vm390, %v380, %v381
      %v397 = vsel %vm392, %v359, %v396
      %v398 = vsel %vm390, %v381, %v382
      %v399 = vsel %vm392, %v361, %v398
      %v400 = vsel %vm390, %v382, %v383
      %v401 = vsel %vm392, %v363, %v400
      %v402 = vsel %vm392, %v365, %v383
      %v403 = vsel %vm390, %v384, %v385
      %v404 = vsel %vm392, %v367, %v403
      %v405 = vsel %vm390, %v385, %v386
      %v406 = vsel %vm392, %v369, %v405
      %v407 = vsel %vm390, %v386, %v387
      %v408 = vsel %vm392, %v371, %v407
      %v409 = vsel %vm390, %v387, %v388
      %v410 = vsel %vm392, %v373, %v409
      %v411 = vsel %vm390, %v388, %v389
      %v412 = vsel %vm392, %v375, %v411
      %v413 = vsel %vm392, %v377, %v389
      %426 = vst [vmem:[#allocation3 + $0x58] sm:$0xff] %v393
      %427 = vst [vmem:[#allocation3 + $0x60] sm:$0xff] %v395
      %428 = vst [vmem:[#allocation3 + $0x68] sm:$0xff] %v397
      %429 = vst [vmem:[#allocation3 + $0x70] sm:$0xff] %v399
      %430 = vst [vmem:[#allocation3 + $0x78] sm:$0xff] %v401
      %431 = vst [vmem:[#allocation3 + $0x80] sm:$0xf] %v402
      %432 = vst [vmem:[#allocation3 + $0x84] sm:$0xff] %v404
      %433 = vst [vmem:[#allocation3 + $0x8c] sm:$0xff] %v406
      %434 = vst [vmem:[#allocation3 + $0x94] sm:$0xff] %v408
      %435 = vst [vmem:[#allocation3 + $0x9c] sm:$0xff] %v410
      %436 = vst [vmem:[#allocation3 + $0xa4] sm:$0xff] %v412
      %437 = vst [vmem:[#allocation3 + $0xac] sm:$0xf] %v413
      %v438 = vld [vmem:[%s221] sm:$0xff]
      %v439 = vld [vmem:[%s221 + $0x8] sm:$0xff]
      %v440 = vld [vmem:[%s221 + $0x10] sm:$0xff]
      %v441 = vld [vmem:[%s221 + $0x18] sm:$0xff]
      %v442 = vld [vmem:[%s221 + $0x20] sm:$0xff]
      %v443 = vld [vmem:[%s221 + $0x28] sm:$0xff]
      %v444 = vld [vmem:[%s221 + $0x44] sm:$0xff]
      %v445 = vld [vmem:[%s221 + $0x4c] sm:$0xff]
      %v446 = vld [vmem:[%s221 + $0x54] sm:$0xff]
      %v447 = vld [vmem:[%s221 + $0x5c] sm:$0xff]
      %v448 = vld [vmem:[%s221 + $0x64] sm:$0xff]
      %v449 = vld [vmem:[%s221 + $0x6c] sm:$0xff]
      %462 = vrot.lane.b32.xlu0 %v438, 126
      %v463 = vpop.permute.xlu0 %462
      %464 = vrot.lane.b32.xlu0 %v439, 126
      %v465 = vpop.permute.xlu0 %464
      %466 = vrot.lane.b32.xlu0 %v440, 126
      %v467 = vpop.permute.xlu0 %466
      %468 = vrot.lane.b32.xlu0 %v441, 126
      %v469 = vpop.permute.xlu0 %468
      %470 = vrot.lane.b32.xlu0 %v442, 126
      %v471 = vpop.permute.xlu0 %470
      %472 = vrot.lane.b32.xlu0 %v443, 126
      %v473 = vpop.permute.xlu0 %472
      %474 = vrot.lane.b32.xlu0 %v444, 126
      %v475 = vpop.permute.xlu0 %474
      %476 = vrot.lane.b32.xlu0 %v445, 126
      %v477 = vpop.permute.xlu0 %476
      %478 = vrot.lane.b32.xlu0 %v446, 126
      %v479 = vpop.permute.xlu0 %478
      %480 = vrot.lane.b32.xlu0 %v447, 126
      %v481 = vpop.permute.xlu0 %480
      %482 = vrot.lane.b32.xlu0 %v448, 126
      %v483 = vpop.permute.xlu0 %482
      %484 = vrot.lane.b32.xlu0 %v449, 126
      %v485 = vpop.permute.xlu0 %484
      %v486 = vrot.slane %v463, 4
      %v487 = vrot.slane %v465, 4
      %v488 = vrot.slane %v467, 4
      %v489 = vrot.slane %v469, 4
      %v490 = vrot.slane %v471, 4
      %v491 = vrot.slane %v473, 4
      %v492 = vrot.slane %v475, 4
      %v493 = vrot.slane %v477, 4
      %v494 = vrot.slane %v479, 4
      %v495 = vrot.slane %v481, 4
      %v496 = vrot.slane %v483, 4
      %v497 = vrot.slane %v485, 4
      %v498 = vsel %vm390, %v486, %v487
      %vm499 = vcmask 1031168
      %v500 = vsel %vm499, %v463, %v498
      %v501 = vsel %vm390, %v487, %v488
      %v502 = vsel %vm499, %v465, %v501
      %v503 = vsel %vm390, %v488, %v489
      %v504 = vsel %vm499, %v467, %v503
      %v505 = vsel %vm390, %v489, %v490
      %v506 = vsel %vm499, %v469, %v505
      %v507 = vsel %vm390, %v490, %v491
      %v508 = vsel %vm499, %v471, %v507
      %v509 = vsel %vm499, %v473, %v491
      %v510 = vsel %vm390, %v492, %v493
      %v511 = vsel %vm499, %v475, %v510
      %v512 = vsel %vm390, %v493, %v494
      %v513 = vsel %vm499, %v477, %v512
      %v514 = vsel %vm390, %v494, %v495
      %v515 = vsel %vm499, %v479, %v514
      %v516 = vsel %vm390, %v495, %v496
      %v517 = vsel %vm499, %v481, %v516
      %v518 = vsel %vm390, %v496, %v497
      %v519 = vsel %vm499, %v483, %v518
      %v520 = vsel %vm499, %v485, %v497
      %533 = vst [vmem:[#allocation3 + $0xb0] sm:$0xff] %v500
      %534 = vst [vmem:[#allocation3 + $0xb8] sm:$0xff] %v502
      %535 = vst [vmem:[#allocation3 + $0xc0] sm:$0xff] %v504
      %536 = vst [vmem:[#allocation3 + $0xc8] sm:$0xff] %v506
      %537 = vst [vmem:[#allocation3 + $0xd0] sm:$0xff] %v508
      %538 = vst [vmem:[#allocation3 + $0xd8] sm:$0xf] %v509
      %539 = vst [vmem:[#allocation3 + $0xdc] sm:$0xff] %v511
      %540 = vst [vmem:[#allocation3 + $0xe4] sm:$0xff] %v513
      %541 = vst [vmem:[#allocation3 + $0xec] sm:$0xff] %v515
      %542 = vst [vmem:[#allocation3 + $0xf4] sm:$0xff] %v517
      %543 = vst [vmem:[#allocation3 + $0xfc] sm:$0xff] %v519
      %544 = vst [vmem:[#allocation3 + $0x104] sm:$0xf] %v520
      %v545 = vld [vmem:[%s221] sm:$0xff]
      %v546 = vld [vmem:[%s221 + $0x8] sm:$0xff]
      %v547 = vld [vmem:[%s221 + $0x10] sm:$0xff]
      %v548 = vld [vmem:[%s221 + $0x18] sm:$0xff]
      %v549 = vld [vmem:[%s221 + $0x20] sm:$0xff]
      %v550 = vld [vmem:[%s221 + $0x28] sm:$0xff]
      %v551 = vld [vmem:[%s221 + $0x44] sm:$0xff]
      %v552 = vld [vmem:[%s221 + $0x4c] sm:$0xff]
      %v553 = vld [vmem:[%s221 + $0x54] sm:$0xff]
      %v554 = vld [vmem:[%s221 + $0x5c] sm:$0xff]
      %v555 = vld [vmem:[%s221 + $0x64] sm:$0xff]
      %v556 = vld [vmem:[%s221 + $0x6c] sm:$0xff]
      %569 = vrot.lane.b32.xlu0 %v545, 110
      %v570 = vpop.permute.xlu0 %569
      %571 = vrot.lane.b32.xlu0 %v546, 110
      %v572 = vpop.permute.xlu0 %571
      %573 = vrot.lane.b32.xlu0 %v547, 110
      %v574 = vpop.permute.xlu0 %573
      %575 = vrot.lane.b32.xlu0 %v548, 110
      %v576 = vpop.permute.xlu0 %575
      %577 = vrot.lane.b32.xlu0 %v549, 110
      %v578 = vpop.permute.xlu0 %577
      %579 = vrot.lane.b32.xlu0 %v550, 110
      %v580 = vpop.permute.xlu0 %579
      %581 = vrot.lane.b32.xlu0 %v551, 110
      %v582 = vpop.permute.xlu0 %581
      %583 = vrot.lane.b32.xlu0 %v552, 110
      %v584 = vpop.permute.xlu0 %583
      %585 = vrot.lane.b32.xlu0 %v553, 110
      %v586 = vpop.permute.xlu0 %585
      %587 = vrot.lane.b32.xlu0 %v554, 110
      %v588 = vpop.permute.xlu0 %587
      %589 = vrot.lane.b32.xlu0 %v555, 110
      %v590 = vpop.permute.xlu0 %589
      %591 = vrot.lane.b32.xlu0 %v556, 110
      %v592 = vpop.permute.xlu0 %591
      %v593 = vrot.slane %v570, 4
      %v594 = vrot.slane %v572, 4
      %v595 = vrot.slane %v574, 4
      %v596 = vrot.slane %v576, 4
      %v597 = vrot.slane %v578, 4
      %v598 = vrot.slane %v580, 4
      %v599 = vrot.slane %v582, 4
      %v600 = vrot.slane %v584, 4
      %v601 = vrot.slane %v586, 4
      %v602 = vrot.slane %v588, 4
      %v603 = vrot.slane %v590, 4
      %v604 = vrot.slane %v592, 4
      %v605 = vsel %vm390, %v593, %v594
      %vm606 = vcmask 900096
      %v607 = vsel %vm606, %v570, %v605
      %v608 = vsel %vm390, %v594, %v595
      %v609 = vsel %vm606, %v572, %v608
      %v610 = vsel %vm390, %v595, %v596
      %v611 = vsel %vm606, %v574, %v610
      %v612 = vsel %vm390, %v596, %v597
      %v613 = vsel %vm606, %v576, %v612
      %v614 = vsel %vm390, %v597, %v598
      %v615 = vsel %vm606, %v578, %v614
      %v616 = vsel %vm606, %v580, %v598
      %v617 = vsel %vm390, %v599, %v600
      %v618 = vsel %vm606, %v582, %v617
      %v619 = vsel %vm390, %v600, %v601
      %v620 = vsel %vm606, %v584, %v619
      %v621 = vsel %vm390, %v601, %v602
      %v622 = vsel %vm606, %v586, %v621
      %v623 = vsel %vm390, %v602, %v603
      %v624 = vsel %vm606, %v588, %v623
      %v625 = vsel %vm390, %v603, %v604
      %v626 = vsel %vm606, %v590, %v625
      %v627 = vsel %vm606, %v592, %v604
      %640 = vst [vmem:[#allocation3 + $0x108] sm:$0xff] %v607
      %641 = vst [vmem:[#allocation3 + $0x110] sm:$0xff] %v609
      %642 = vst [vmem:[#allocation3 + $0x118] sm:$0xff] %v611
      %643 = vst [vmem:[#allocation3 + $0x120] sm:$0xff] %v613
      %644 = vst [vmem:[#allocation3 + $0x128] sm:$0xff] %v615
      %645 = vst [vmem:[#allocation3 + $0x130] sm:$0xf] %v616
      %646 = vst [vmem:[#allocation3 + $0x134] sm:$0xff] %v618
      %647 = vst [vmem:[#allocation3 + $0x13c] sm:$0xff] %v620
      %648 = vst [vmem:[#allocation3 + $0x144] sm:$0xff] %v622
      %649 = vst [vmem:[#allocation3 + $0x14c] sm:$0xff] %v624
      %650 = vst [vmem:[#allocation3 + $0x154] sm:$0xff] %v626
      %651 = vst [vmem:[#allocation3 + $0x15c] sm:$0xf] %v627
      %v652 = vld [vmem:[%s221] sm:$0xff]
      %v653 = vld [vmem:[%s221 + $0x8] sm:$0xff]
      %v654 = vld [vmem:[%s221 + $0x10] sm:$0xff]
      %v655 = vld [vmem:[%s221 + $0x18] sm:$0xff]
      %v656 = vld [vmem:[%s221 + $0x20] sm:$0xff]
      %v657 = vld [vmem:[%s221 + $0x28] sm:$0xff]
      %v658 = vld [vmem:[%s221 + $0x44] sm:$0xff]
      %v659 = vld [vmem:[%s221 + $0x4c] sm:$0xff]
      %v660 = vld [vmem:[%s221 + $0x54] sm:$0xff]
      %v661 = vld [vmem:[%s221 + $0x5c] sm:$0xff]
      %v662 = vld [vmem:[%s221 + $0x64] sm:$0xff]
      %v663 = vld [vmem:[%s221 + $0x6c] sm:$0xff]
      %676 = vrot.lane.b32.xlu0 %v652, 109
      %v677 = vpop.permute.xlu0 %676
      %678 = vrot.lane.b32.xlu0 %v653, 109
      %v679 = vpop.permute.xlu0 %678
      %680 = vrot.lane.b32.xlu0 %v654, 109
      %v681 = vpop.permute.xlu0 %680
      %682 = vrot.lane.b32.xlu0 %v655, 109
      %v683 = vpop.permute.xlu0 %682
      %684 = vrot.lane.b32.xlu0 %v656, 109
      %v685 = vpop.permute.xlu0 %684
      %686 = vrot.lane.b32.xlu0 %v657, 109
      %v687 = vpop.permute.xlu0 %686
      %688 = vrot.lane.b32.xlu0 %v658, 109
      %v689 = vpop.permute.xlu0 %688
      %690 = vrot.lane.b32.xlu0 %v659, 109
      %v691 = vpop.permute.xlu0 %690
      %692 = vrot.lane.b32.xlu0 %v660, 109
      %v693 = vpop.permute.xlu0 %692
      %694 = vrot.lane.b32.xlu0 %v661, 109
      %v695 = vpop.permute.xlu0 %694
      %696 = vrot.lane.b32.xlu0 %v662, 109
      %v697 = vpop.permute.xlu0 %696
      %698 = vrot.lane.b32.xlu0 %v663, 109
      %v699 = vpop.permute.xlu0 %698
      %v700 = vrot.slane %v677, 4
      %v701 = vrot.slane %v679, 4
      %v702 = vrot.slane %v681, 4
      %v703 = vrot.slane %v683, 4
      %v704 = vrot.slane %v685, 4
      %v705 = vrot.slane %v687, 4
      %v706 = vrot.slane %v689, 4
      %v707 = vrot.slane %v691, 4
      %v708 = vrot.slane %v693, 4
      %v709 = vrot.slane %v695, 4
      %v710 = vrot.slane %v697, 4
      %v711 = vrot.slane %v699, 4
      %v712 = vsel %vm390, %v700, %v701
      %vm713 = vcmask 891904
      %v714 = vsel %vm713, %v677, %v712
      %v715 = vsel %vm390, %v701, %v702
      %v716 = vsel %vm713, %v679, %v715
      %v717 = vsel %vm390, %v702, %v703
      %v718 = vsel %vm713, %v681, %v717
      %v719 = vsel %vm390, %v703, %v704
      %v720 = vsel %vm713, %v683, %v719
      %v721 = vsel %vm390, %v704, %v705
      %v722 = vsel %vm713, %v685, %v721
      %v723 = vsel %vm713, %v687, %v705
      %v724 = vsel %vm390, %v706, %v707
      %v725 = vsel %vm713, %v689, %v724
      %v726 = vsel %vm390, %v707, %v708
      %v727 = vsel %vm713, %v691, %v726
      %v728 = vsel %vm390, %v708, %v709
      %v729 = vsel %vm713, %v693, %v728
      %v730 = vsel %vm390, %v709, %v710
      %v731 = vsel %vm713, %v695, %v730
      %v732 = vsel %vm390, %v710, %v711
      %v733 = vsel %vm713, %v697, %v732
      %v734 = vsel %vm713, %v699, %v711
      %747 = vst [vmem:[#allocation3 + $0x160] sm:$0xff] %v714
      %748 = vst [vmem:[#allocation3 + $0x168] sm:$0xff] %v716
      %749 = vst [vmem:[#allocation3 + $0x170] sm:$0xff] %v718
      %750 = vst [vmem:[#allocation3 + $0x178] sm:$0xff] %v720
      %751 = vst [vmem:[#allocation3 + $0x180] sm:$0xff] %v722
      %752 = vst [vmem:[#allocation3 + $0x188] sm:$0xf] %v723
      %753 = vst [vmem:[#allocation3 + $0x18c] sm:$0xff] %v725
      %754 = vst [vmem:[#allocation3 + $0x194] sm:$0xff] %v727
      %755 = vst [vmem:[#allocation3 + $0x19c] sm:$0xff] %v729
      %756 = vst [vmem:[#allocation3 + $0x1a4] sm:$0xff] %v731
      %757 = vst [vmem:[#allocation3 + $0x1ac] sm:$0xff] %v733
      %758 = vst [vmem:[#allocation3 + $0x1b4] sm:$0xf] %v734
      %v759 = vld [vmem:[%s221] sm:$0xff]
      %v760 = vld [vmem:[%s221 + $0x8] sm:$0xff]
      %v761 = vld [vmem:[%s221 + $0x10] sm:$0xff]
      %v762 = vld [vmem:[%s221 + $0x18] sm:$0xff]
      %v763 = vld [vmem:[%s221 + $0x20] sm:$0xff]
      %v764 = vld [vmem:[%s221 + $0x28] sm:$0xff]
      %v765 = vld [vmem:[%s221 + $0x44] sm:$0xff]
      %v766 = vld [vmem:[%s221 + $0x4c] sm:$0xff]
      %v767 = vld [vmem:[%s221 + $0x54] sm:$0xff]
      %v768 = vld [vmem:[%s221 + $0x5c] sm:$0xff]
      %v769 = vld [vmem:[%s221 + $0x64] sm:$0xff]
      %v770 = vld [vmem:[%s221 + $0x6c] sm:$0xff]
      %783 = vrot.lane.b32.xlu0 %v759, 108
      %v784 = vpop.permute.xlu0 %783
      %785 = vrot.lane.b32.xlu0 %v760, 108
      %v786 = vpop.permute.xlu0 %785
      %787 = vrot.lane.b32.xlu0 %v761, 108
      %v788 = vpop.permute.xlu0 %787
      %789 = vrot.lane.b32.xlu0 %v762, 108
      %v790 = vpop.permute.xlu0 %789
      %791 = vrot.lane.b32.xlu0 %v763, 108
      %v792 = vpop.permute.xlu0 %791
      %793 = vrot.lane.b32.xlu0 %v764, 108
      %v794 = vpop.permute.xlu0 %793
      %795 = vrot.lane.b32.xlu0 %v765, 108
      %v796 = vpop.permute.xlu0 %795
      %797 = vrot.lane.b32.xlu0 %v766, 108
      %v798 = vpop.permute.xlu0 %797
      %799 = vrot.lane.b32.xlu0 %v767, 108
      %v800 = vpop.permute.xlu0 %799
      %801 = vrot.lane.b32.xlu0 %v768, 108
      %v802 = vpop.permute.xlu0 %801
      %803 = vrot.lane.b32.xlu0 %v769, 108
      %v804 = vpop.permute.xlu0 %803
      %805 = vrot.lane.b32.xlu0 %v770, 108
      %v806 = vpop.permute.xlu0 %805
      %v807 = vrot.slane %v784, 4
      %v808 = vrot.slane %v786, 4
      %v809 = vrot.slane %v788, 4
      %v810 = vrot.slane %v790, 4
      %v811 = vrot.slane %v792, 4
      %v812 = vrot.slane %v794, 4
      %v813 = vrot.slane %v796, 4
      %v814 = vrot.slane %v798, 4
      %v815 = vrot.slane %v800, 4
      %v816 = vrot.slane %v802, 4
      %v817 = vrot.slane %v804, 4
      %v818 = vrot.slane %v806, 4
      %v819 = vsel %vm390, %v807, %v808
      %vm820 = vcmask 883712
      %v821 = vsel %vm820, %v784, %v819
      %v822 = vsel %vm390, %v808, %v809
      %v823 = vsel %vm820, %v786, %v822
      %v824 = vsel %vm390, %v809, %v810
      %v825 = vsel %vm820, %v788, %v824
      %v826 = vsel %vm390, %v810, %v811
      %v827 = vsel %vm820, %v790, %v826
      %v828 = vsel %vm390, %v811, %v812
      %v829 = vsel %vm820, %v792, %v828
      %v830 = vsel %vm820, %v794, %v812
      %v831 = vsel %vm390, %v813, %v814
      %v832 = vsel %vm820, %v796, %v831
      %v833 = vsel %vm390, %v814, %v815
      %v834 = vsel %vm820, %v798, %v833
      %v835 = vsel %vm390, %v815, %v816
      %v836 = vsel %vm820, %v800, %v835
      %v837 = vsel %vm390, %v816, %v817
      %v838 = vsel %vm820, %v802, %v837
      %v839 = vsel %vm390, %v817, %v818
      %v840 = vsel %vm820, %v804, %v839
      %v841 = vsel %vm820, %v806, %v818
      %854 = vst [vmem:[#allocation3 + $0x1b8] sm:$0xff] %v821
      %855 = vst [vmem:[#allocation3 + $0x1c0] sm:$0xff] %v823
      %856 = vst [vmem:[#allocation3 + $0x1c8] sm:$0xff] %v825
      %857 = vst [vmem:[#allocation3 + $0x1d0] sm:$0xff] %v827
      %858 = vst [vmem:[#allocation3 + $0x1d8] sm:$0xff] %v829
      %859 = vst [vmem:[#allocation3 + $0x1e0] sm:$0xf] %v830
      %860 = vst [vmem:[#allocation3 + $0x1e4] sm:$0xff] %v832
      %861 = vst [vmem:[#allocation3 + $0x1ec] sm:$0xff] %v834
      %862 = vst [vmem:[#allocation3 + $0x1f4] sm:$0xff] %v836
      %863 = vst [vmem:[#allocation3 + $0x1fc] sm:$0xff] %v838
      %864 = vst [vmem:[#allocation3 + $0x204] sm:$0xff] %v840
      %865 = vst [vmem:[#allocation3 + $0x20c] sm:$0xf] %v841
      %v866 = vld [vmem:[%s221] sm:$0xff]
      %v867 = vld [vmem:[%s221 + $0x8] sm:$0xff]
      %v868 = vld [vmem:[%s221 + $0x10] sm:$0xff]
      %v869 = vld [vmem:[%s221 + $0x18] sm:$0xff]
      %v870 = vld [vmem:[%s221 + $0x20] sm:$0xff]
      %v871 = vld [vmem:[%s221 + $0x28] sm:$0xff]
      %v872 = vld [vmem:[%s221 + $0x44] sm:$0xff]
      %v873 = vld [vmem:[%s221 + $0x4c] sm:$0xff]
      %v874 = vld [vmem:[%s221 + $0x54] sm:$0xff]
      %v875 = vld [vmem:[%s221 + $0x5c] sm:$0xff]
      %v876 = vld [vmem:[%s221 + $0x64] sm:$0xff]
      %v877 = vld [vmem:[%s221 + $0x6c] sm:$0xff]
      %890 = vrot.lane.b32.xlu0 %v866, 92
      %v891 = vpop.permute.xlu0 %890
      %892 = vrot.lane.b32.xlu0 %v867, 92
      %v893 = vpop.permute.xlu0 %892
      %894 = vrot.lane.b32.xlu0 %v868, 92
      %v895 = vpop.permute.xlu0 %894
      %896 = vrot.lane.b32.xlu0 %v869, 92
      %v897 = vpop.permute.xlu0 %896
      %898 = vrot.lane.b32.xlu0 %v870, 92
      %v899 = vpop.permute.xlu0 %898
      %900 = vrot.lane.b32.xlu0 %v871, 92
      %v901 = vpop.permute.xlu0 %900
      %902 = vrot.lane.b32.xlu0 %v872, 92
      %v903 = vpop.permute.xlu0 %902
      %904 = vrot.lane.b32.xlu0 %v873, 92
      %v905 = vpop.permute.xlu0 %904
      %906 = vrot.lane.b32.xlu0 %v874, 92
      %v907 = vpop.permute.xlu0 %906
      %908 = vrot.lane.b32.xlu0 %v875, 92
      %v909 = vpop.permute.xlu0 %908
      %910 = vrot.lane.b32.xlu0 %v876, 92
      %v911 = vpop.permute.xlu0 %910
      %912 = vrot.lane.b32.xlu0 %v877, 92
      %v913 = vpop.permute.xlu0 %912
      %v914 = vrot.slane %v891, 4
      %v915 = vrot.slane %v893, 4
      %v916 = vrot.slane %v895, 4
      %v917 = vrot.slane %v897, 4
      %v918 = vrot.slane %v899, 4
      %v919 = vrot.slane %v901, 4
      %v920 = vrot.slane %v903, 4
      %v921 = vrot.slane %v905, 4
      %v922 = vrot.slane %v907, 4
      %v923 = vrot.slane %v909, 4
      %v924 = vrot.slane %v911, 4
      %v925 = vrot.slane %v913, 4
      %v926 = vsel %vm390, %v914, %v915
      %vm927 = vcmask 752640
      %v928 = vsel %vm927, %v891, %v926
      %v929 = vsel %vm390, %v915, %v916
      %v930 = vsel %vm927, %v893, %v929
      %v931 = vsel %vm390, %v916, %v917
      %v932 = vsel %vm927, %v895, %v931
      %v933 = vsel %vm390, %v917, %v918
      %v934 = vsel %vm927, %v897, %v933
      %v935 = vsel %vm390, %v918, %v919
      %v936 = vsel %vm927, %v899, %v935
      %v937 = vsel %vm927, %v901, %v919
      %v938 = vsel %vm390, %v920, %v921
      %v939 = vsel %vm927, %v903, %v938
      %v940 = vsel %vm390, %v921, %v922
      %v941 = vsel %vm927, %v905, %v940
      %v942 = vsel %vm390, %v922, %v923
      %v943 = vsel %vm927, %v907, %v942
      %v944 = vsel %vm390, %v923, %v924
      %v945 = vsel %vm927, %v909, %v944
      %v946 = vsel %vm390, %v924, %v925
      %v947 = vsel %vm927, %v911, %v946
      %v948 = vsel %vm927, %v913, %v925
      %961 = vst [vmem:[#allocation3 + $0x210] sm:$0xff] %v928
      %962 = vst [vmem:[#allocation3 + $0x218] sm:$0xff] %v930
      %963 = vst [vmem:[#allocation3 + $0x220] sm:$0xff] %v932
      %964 = vst [vmem:[#allocation3 + $0x228] sm:$0xff] %v934
      %965 = vst [vmem:[#allocation3 + $0x230] sm:$0xff] %v936
      %966 = vst [vmem:[#allocation3 + $0x238] sm:$0xf] %v937
      %967 = vst [vmem:[#allocation3 + $0x23c] sm:$0xff] %v939
      %968 = vst [vmem:[#allocation3 + $0x244] sm:$0xff] %v941
      %969 = vst [vmem:[#allocation3 + $0x24c] sm:$0xff] %v943
      %970 = vst [vmem:[#allocation3 + $0x254] sm:$0xff] %v945
      %971 = vst [vmem:[#allocation3 + $0x25c] sm:$0xff] %v947
      %972 = vst [vmem:[#allocation3 + $0x264] sm:$0xf] %v948
      %v973 = vld [vmem:[%s221] sm:$0xff]
      %v974 = vld [vmem:[%s221 + $0x8] sm:$0xff]
      %v975 = vld [vmem:[%s221 + $0x10] sm:$0xff]
      %v976 = vld [vmem:[%s221 + $0x18] sm:$0xff]
      %v977 = vld [vmem:[%s221 + $0x20] sm:$0xff]
      %v978 = vld [vmem:[%s221 + $0x28] sm:$0xff]
      %v979 = vld [vmem:[%s221 + $0x44] sm:$0xff]
      %v980 = vld [vmem:[%s221 + $0x4c] sm:$0xff]
      %v981 = vld [vmem:[%s221 + $0x54] sm:$0xff]
      %v982 = vld [vmem:[%s221 + $0x5c] sm:$0xff]
      %v983 = vld [vmem:[%s221 + $0x64] sm:$0xff]
      %v984 = vld [vmem:[%s221 + $0x6c] sm:$0xff]
      %997 = vrot.lane.b32.xlu0 %v973, 91
      %v998 = vpop.permute.xlu0 %997
      %999 = vrot.lane.b32.xlu0 %v974, 91
      %v1000 = vpop.permute.xlu0 %999
      %1001 = vrot.lane.b32.xlu0 %v975, 91
      %v1002 = vpop.permute.xlu0 %1001
      %1003 = vrot.lane.b32.xlu0 %v976, 91
      %v1004 = vpop.permute.xlu0 %1003
      %1005 = vrot.lane.b32.xlu0 %v977, 91
      %v1006 = vpop.permute.xlu0 %1005
      %1007 = vrot.lane.b32.xlu0 %v978, 91
      %v1008 = vpop.permute.xlu0 %1007
      %1009 = vrot.lane.b32.xlu0 %v979, 91
      %v1010 = vpop.permute.xlu0 %1009
      %1011 = vrot.lane.b32.xlu0 %v980, 91
      %v1012 = vpop.permute.xlu0 %1011
      %1013 = vrot.lane.b32.xlu0 %v981, 91
      %v1014 = vpop.permute.xlu0 %1013
      %1015 = vrot.lane.b32.xlu0 %v982, 91
      %v1016 = vpop.permute.xlu0 %1015
      %1017 = vrot.lane.b32.xlu0 %v983, 91
      %v1018 = vpop.permute.xlu0 %1017
      %1019 = vrot.lane.b32.xlu0 %v984, 91
      %v1020 = vpop.permute.xlu0 %1019
      %v1021 = vrot.slane %v998, 4
      %v1022 = vrot.slane %v1000, 4
      %v1023 = vrot.slane %v1002, 4
      %v1024 = vrot.slane %v1004, 4
      %v1025 = vrot.slane %v1006, 4
      %v1026 = vrot.slane %v1008, 4
      %v1027 = vrot.slane %v1010, 4
      %v1028 = vrot.slane %v1012, 4
      %v1029 = vrot.slane %v1014, 4
      %v1030 = vrot.slane %v1016, 4
      %v1031 = vrot.slane %v1018, 4
      %v1032 = vrot.slane %v1020, 4
      %v1033 = vsel %vm390, %v1021, %v1022
      %vm1034 = vcmask 744448
      %v1035 = vsel %vm1034, %v998, %v1033
      %v1036 = vsel %vm390, %v1022, %v1023
      %v1037 = vsel %vm1034, %v1000, %v1036
      %v1038 = vsel %vm390, %v1023, %v1024
      %v1039 = vsel %vm1034, %v1002, %v1038
      %v1040 = vsel %vm390, %v1024, %v1025
      %v1041 = vsel %vm1034, %v1004, %v1040
      %v1042 = vsel %vm390, %v1025, %v1026
      %v1043 = vsel %vm1034, %v1006, %v1042
      %v1044 = vsel %vm1034, %v1008, %v1026
      %v1045 = vsel %vm390, %v1027, %v1028
      %v1046 = vsel %vm1034, %v1010, %v1045
      %v1047 = vsel %vm390, %v1028, %v1029
      %v1048 = vsel %vm1034, %v1012, %v1047
      %v1049 = vsel %vm390, %v1029, %v1030
      %v1050 = vsel %vm1034, %v1014, %v1049
      %v1051 = vsel %vm390, %v1030, %v1031
      %v1052 = vsel %vm1034, %v1016, %v1051
      %v1053 = vsel %vm390, %v1031, %v1032
      %v1054 = vsel %vm1034, %v1018, %v1053
      %v1055 = vsel %vm1034, %v1020, %v1032
      %1068 = vst [vmem:[#allocation3 + $0x268] sm:$0xff] %v1035
      %1069 = vst [vmem:[#allocation3 + $0x270] sm:$0xff] %v1037
      %1070 = vst [vmem:[#allocation3 + $0x278] sm:$0xff] %v1039
      %1071 = vst [vmem:[#allocation3 + $0x280] sm:$0xff] %v1041
      %1072 = vst [vmem:[#allocation3 + $0x288] sm:$0xff] %v1043
      %1073 = vst [vmem:[#allocation3 + $0x290] sm:$0xf] %v1044
      %1074 = vst [vmem:[#allocation3 + $0x294] sm:$0xff] %v1046
      %1075 = vst [vmem:[#allocation3 + $0x29c] sm:$0xff] %v1048
      %1076 = vst [vmem:[#allocation3 + $0x2a4] sm:$0xff] %v1050
      %1077 = vst [vmem:[#allocation3 + $0x2ac] sm:$0xff] %v1052
      %1078 = vst [vmem:[#allocation3 + $0x2b4] sm:$0xff] %v1054
      %1079 = vst [vmem:[#allocation3 + $0x2bc] sm:$0xf] %v1055
      %v1080 = vld [vmem:[%s221] sm:$0xff]
      %v1081 = vld [vmem:[%s221 + $0x8] sm:$0xff]
      %v1082 = vld [vmem:[%s221 + $0x10] sm:$0xff]
      %v1083 = vld [vmem:[%s221 + $0x18] sm:$0xff]
      %v1084 = vld [vmem:[%s221 + $0x20] sm:$0xff]
      %v1085 = vld [vmem:[%s221 + $0x28] sm:$0xff]
      %v1086 = vld [vmem:[%s221 + $0x44] sm:$0xff]
      %v1087 = vld [vmem:[%s221 + $0x4c] sm:$0xff]
      %v1088 = vld [vmem:[%s221 + $0x54] sm:$0xff]
      %v1089 = vld [vmem:[%s221 + $0x5c] sm:$0xff]
      %v1090 = vld [vmem:[%s221 + $0x64] sm:$0xff]
      %v1091 = vld [vmem:[%s221 + $0x6c] sm:$0xff]
      %1104 = vrot.lane.b32.xlu0 %v1080, 90
      %v1105 = vpop.permute.xlu0 %1104
      %1106 = vrot.lane.b32.xlu0 %v1081, 90
      %v1107 = vpop.permute.xlu0 %1106
      %1108 = vrot.lane.b32.xlu0 %v1082, 90
      %v1109 = vpop.permute.xlu0 %1108
      %1110 = vrot.lane.b32.xlu0 %v1083, 90
      %v1111 = vpop.permute.xlu0 %1110
      %1112 = vrot.lane.b32.xlu0 %v1084, 90
      %v1113 = vpop.permute.xlu0 %1112
      %1114 = vrot.lane.b32.xlu0 %v1085, 90
      %v1115 = vpop.permute.xlu0 %1114
      %1116 = vrot.lane.b32.xlu0 %v1086, 90
      %v1117 = vpop.permute.xlu0 %1116
      %1118 = vrot.lane.b32.xlu0 %v1087, 90
      %v1119 = vpop.permute.xlu0 %1118
      %1120 = vrot.lane.b32.xlu0 %v1088, 90
      %v1121 = vpop.permute.xlu0 %1120
      %1122 = vrot.lane.b32.xlu0 %v1089, 90
      %v1123 = vpop.permute.xlu0 %1122
      %1124 = vrot.lane.b32.xlu0 %v1090, 90
      %v1125 = vpop.permute.xlu0 %1124
      %1126 = vrot.lane.b32.xlu0 %v1091, 90
      %v1127 = vpop.permute.xlu0 %1126
      %v1128 = vrot.slane %v1105, 4
      %v1129 = vrot.slane %v1107, 4
      %v1130 = vrot.slane %v1109, 4
      %v1131 = vrot.slane %v1111, 4
      %v1132 = vrot.slane %v1113, 4
      %v1133 = vrot.slane %v1115, 4
      %v1134 = vrot.slane %v1117, 4
      %v1135 = vrot.slane %v1119, 4
      %v1136 = vrot.slane %v1121, 4
      %v1137 = vrot.slane %v1123, 4
      %v1138 = vrot.slane %v1125, 4
      %v1139 = vrot.slane %v1127, 4
      %v1140 = vsel %vm390, %v1128, %v1129
      %vm1141 = vcmask 736256
      %v1142 = vsel %vm1141, %v1105, %v1140
      %v1143 = vsel %vm390, %v1129, %v1130
      %v1144 = vsel %vm1141, %v1107, %v1143
      %v1145 = vsel %vm390, %v1130, %v1131
      %v1146 = vsel %vm1141, %v1109, %v1145
      %v1147 = vsel %vm390, %v1131, %v1132
      %v1148 = vsel %vm1141, %v1111, %v1147
      %v1149 = vsel %vm390, %v1132, %v1133
      %v1150 = vsel %vm1141, %v1113, %v1149
      %v1151 = vsel %vm1141, %v1115, %v1133
      %v1152 = vsel %vm390, %v1134, %v1135
      %v1153 = vsel %vm1141, %v1117, %v1152
      %v1154 = vsel %vm390, %v1135, %v1136
      %v1155 = vsel %vm1141, %v1119, %v1154
      %v1156 = vsel %vm390, %v1136, %v1137
      %v1157 = vsel %vm1141, %v1121, %v1156
      %v1158 = vsel %vm390, %v1137, %v1138
      %v1159 = vsel %vm1141, %v1123, %v1158
      %v1160 = vsel %vm390, %v1138, %v1139
      %v1161 = vsel %vm1141, %v1125, %v1160
      %v1162 = vsel %vm1141, %v1127, %v1139
      %1175 = vst [vmem:[#allocation3 + $0x2c0] sm:$0xff] %v1142
      %1176 = vst [vmem:[#allocation3 + $0x2c8] sm:$0xff] %v1144
      %1177 = vst [vmem:[#allocation3 + $0x2d0] sm:$0xff] %v1146
      %1178 = vst [vmem:[#allocation3 + $0x2d8] sm:$0xff] %v1148
      %1179 = vst [vmem:[#allocation3 + $0x2e0] sm:$0xff] %v1150
      %1180 = vst [vmem:[#allocation3 + $0x2e8] sm:$0xf] %v1151
      %1181 = vst [vmem:[#allocation3 + $0x2ec] sm:$0xff] %v1153
      %1182 = vst [vmem:[#allocation3 + $0x2f4] sm:$0xff] %v1155
      %1183 = vst [vmem:[#allocation3 + $0x2fc] sm:$0xff] %v1157
      %1184 = vst [vmem:[#allocation3 + $0x304] sm:$0xff] %v1159
      %1185 = vst [vmem:[#allocation3 + $0x30c] sm:$0xff] %v1161
      %1186 = vst [vmem:[#allocation3 + $0x314] sm:$0xf] %v1162
      %v1187 = vld [vmem:[%s221 + $0x8] sm:$0xff]
      %v1188 = vld [vmem:[%s221 + $0x10] sm:$0xff]
      %v1189 = vld [vmem:[%s221 + $0x18] sm:$0xff]
      %v1190 = vld [vmem:[%s221 + $0x20] sm:$0xff]
      %v1191 = vld [vmem:[%s221 + $0x28] sm:$0xff]
      %v1192 = vld [vmem:[%s221 + $0x30] sm:$0xff]
      %v1193 = vld [vmem:[%s221 + $0x4c] sm:$0xff]
      %v1194 = vld [vmem:[%s221 + $0x54] sm:$0xff]
      %v1195 = vld [vmem:[%s221 + $0x5c] sm:$0xff]
      %v1196 = vld [vmem:[%s221 + $0x64] sm:$0xff]
      %v1197 = vld [vmem:[%s221 + $0x6c] sm:$0xff]
      %v1198 = vld [vmem:[%s221 + $0x74] sm:$0xff]
      %1211 = vrot.lane.b32.xlu0 %v1187, 60
      %v1212 = vpop.permute.xlu0 %1211
      %1213 = vrot.lane.b32.xlu0 %v1188, 60
      %v1214 = vpop.permute.xlu0 %1213
      %1215 = vrot.lane.b32.xlu0 %v1189, 60
      %v1216 = vpop.permute.xlu0 %1215
      %1217 = vrot.lane.b32.xlu0 %v1190, 60
      %v1218 = vpop.permute.xlu0 %1217
      %1219 = vrot.lane.b32.xlu0 %v1191, 60
      %v1220 = vpop.permute.xlu0 %1219
      %1221 = vrot.lane.b32.xlu0 %v1192, 60
      %v1222 = vpop.permute.xlu0 %1221
      %1223 = vrot.lane.b32.xlu0 %v1193, 60
      %v1224 = vpop.permute.xlu0 %1223
      %1225 = vrot.lane.b32.xlu0 %v1194, 60
      %v1226 = vpop.permute.xlu0 %1225
      %1227 = vrot.lane.b32.xlu0 %v1195, 60
      %v1228 = vpop.permute.xlu0 %1227
      %1229 = vrot.lane.b32.xlu0 %v1196, 60
      %v1230 = vpop.permute.xlu0 %1229
      %1231 = vrot.lane.b32.xlu0 %v1197, 60
      %v1232 = vpop.permute.xlu0 %1231
      %1233 = vrot.lane.b32.xlu0 %v1198, 60
      %v1234 = vpop.permute.xlu0 %1233
      %v1235 = vrot.slane %v1212, 4
      %v1236 = vrot.slane %v1214, 4
      %v1237 = vrot.slane %v1216, 4
      %v1238 = vrot.slane %v1218, 4
      %v1239 = vrot.slane %v1220, 4
      %v1240 = vrot.slane %v1222, 4
      %v1241 = vrot.slane %v1224, 4
      %v1242 = vrot.slane %v1226, 4
      %v1243 = vrot.slane %v1228, 4
      %v1244 = vrot.slane %v1230, 4
      %v1245 = vrot.slane %v1232, 4
      %v1246 = vrot.slane %v1234, 4
      %v1247 = vsel %vm390, %v1235, %v1236
      %vm1248 = vcmask 490496
      %v1249 = vsel %vm1248, %v1212, %v1247
      %v1250 = vsel %vm390, %v1236, %v1237
      %v1251 = vsel %vm1248, %v1214, %v1250
      %v1252 = vsel %vm390, %v1237, %v1238
      %v1253 = vsel %vm1248, %v1216, %v1252
      %v1254 = vsel %vm390, %v1238, %v1239
      %v1255 = vsel %vm1248, %v1218, %v1254
      %v1256 = vsel %vm390, %v1239, %v1240
      %v1257 = vsel %vm1248, %v1220, %v1256
      %v1258 = vsel %vm1248, %v1222, %v1240
      %v1259 = vsel %vm390, %v1241, %v1242
      %v1260 = vsel %vm1248, %v1224, %v1259
      %v1261 = vsel %vm390, %v1242, %v1243
      %v1262 = vsel %vm1248, %v1226, %v1261
      %v1263 = vsel %vm390, %v1243, %v1244
      %v1264 = vsel %vm1248, %v1228, %v1263
      %v1265 = vsel %vm390, %v1244, %v1245
      %v1266 = vsel %vm1248, %v1230, %v1265
      %v1267 = vsel %vm390, %v1245, %v1246
      %v1268 = vsel %vm1248, %v1232, %v1267
      %v1269 = vsel %vm1248, %v1234, %v1246
      %1282 = vst [vmem:[#allocation3 + $0x318] sm:$0xff] %v1249
      %1283 = vst [vmem:[#allocation3 + $0x320] sm:$0xff] %v1251
      %1284 = vst [vmem:[#allocation3 + $0x328] sm:$0xff] %v1253
      %1285 = vst [vmem:[#allocation3 + $0x330] sm:$0xff] %v1255
      %1286 = vst [vmem:[#allocation3 + $0x338] sm:$0xff] %v1257
      %1287 = vst [vmem:[#allocation3 + $0x340] sm:$0xf] %v1258
      %1288 = vst [vmem:[#allocation3 + $0x344] sm:$0xff] %v1260
      %1289 = vst [vmem:[#allocation3 + $0x34c] sm:$0xff] %v1262
      %1290 = vst [vmem:[#allocation3 + $0x354] sm:$0xff] %v1264
      %1291 = vst [vmem:[#allocation3 + $0x35c] sm:$0xff] %v1266
      %1292 = vst [vmem:[#allocation3 + $0x364] sm:$0xff] %v1268
      %1293 = vst [vmem:[#allocation3 + $0x36c] sm:$0xf] %v1269
      %v1294 = vld [vmem:[%s221 + $0x8] sm:$0xff]
      %v1295 = vld [vmem:[%s221 + $0x10] sm:$0xff]
      %v1296 = vld [vmem:[%s221 + $0x18] sm:$0xff]
      %v1297 = vld [vmem:[%s221 + $0x20] sm:$0xff]
      %v1298 = vld [vmem:[%s221 + $0x28] sm:$0xff]
      %v1299 = vld [vmem:[%s221 + $0x30] sm:$0xff]
      %v1300 = vld [vmem:[%s221 + $0x4c] sm:$0xff]
      %v1301 = vld [vmem:[%s221 + $0x54] sm:$0xff]
      %v1302 = vld [vmem:[%s221 + $0x5c] sm:$0xff]
      %v1303 = vld [vmem:[%s221 + $0x64] sm:$0xff]
      %v1304 = vld [vmem:[%s221 + $0x6c] sm:$0xff]
      %v1305 = vld [vmem:[%s221 + $0x74] sm:$0xff]
      %1318 = vrot.lane.b32.xlu0 %v1294, 59
      %v1319 = vpop.permute.xlu0 %1318
      %1320 = vrot.lane.b32.xlu0 %v1295, 59
      %v1321 = vpop.permute.xlu0 %1320
      %1322 = vrot.lane.b32.xlu0 %v1296, 59
      %v1323 = vpop.permute.xlu0 %1322
      %1324 = vrot.lane.b32.xlu0 %v1297, 59
      %v1325 = vpop.permute.xlu0 %1324
      %1326 = vrot.lane.b32.xlu0 %v1298, 59
      %v1327 = vpop.permute.xlu0 %1326
      %1328 = vrot.lane.b32.xlu0 %v1299, 59
      %v1329 = vpop.permute.xlu0 %1328
      %1330 = vrot.lane.b32.xlu0 %v1300, 59
      %v1331 = vpop.permute.xlu0 %1330
      %1332 = vrot.lane.b32.xlu0 %v1301, 59
      %v1333 = vpop.permute.xlu0 %1332
      %1334 = vrot.lane.b32.xlu0 %v1302, 59
      %v1335 = vpop.permute.xlu0 %1334
      %1336 = vrot.lane.b32.xlu0 %v1303, 59
      %v1337 = vpop.permute.xlu0 %1336
      %1338 = vrot.lane.b32.xlu0 %v1304, 59
      %v1339 = vpop.permute.xlu0 %1338
      %1340 = vrot.lane.b32.xlu0 %v1305, 59
      %v1341 = vpop.permute.xlu0 %1340
      %v1342 = vrot.slane %v1319, 4
      %v1343 = vrot.slane %v1321, 4
      %v1344 = vrot.slane %v1323, 4
      %v1345 = vrot.slane %v1325, 4
      %v1346 = vrot.slane %v1327, 4
      %v1347 = vrot.slane %v1329, 4
      %v1348 = vrot.slane %v1331, 4
      %v1349 = vrot.slane %v1333, 4
      %v1350 = vrot.slane %v1335, 4
      %v1351 = vrot.slane %v1337, 4
      %v1352 = vrot.slane %v1339, 4
      %v1353 = vrot.slane %v1341, 4
      %v1354 = vsel %vm390, %v1342, %v1343
      %vm1355 = vcmask 482304
      %v1356 = vsel %vm1355, %v1319, %v1354
      %v1357 = vsel %vm390, %v1343, %v1344
      %v1358 = vsel %vm1355, %v1321, %v1357
      %v1359 = vsel %vm390, %v1344, %v1345
      %v1360 = vsel %vm1355, %v1323, %v1359
      %v1361 = vsel %vm390, %v1345, %v1346
      %v1362 = vsel %vm1355, %v1325, %v1361
      %v1363 = vsel %vm390, %v1346, %v1347
      %v1364 = vsel %vm1355, %v1327, %v1363
      %v1365 = vsel %vm1355, %v1329, %v1347
      %v1366 = vsel %vm390, %v1348, %v1349
      %v1367 = vsel %vm1355, %v1331, %v1366
      %v1368 = vsel %vm390, %v1349, %v1350
      %v1369 = vsel %vm1355, %v1333, %v1368
      %v1370 = vsel %vm390, %v1350, %v1351
      %v1371 = vsel %vm1355, %v1335, %v1370
      %v1372 = vsel %vm390, %v1351, %v1352
      %v1373 = vsel %vm1355, %v1337, %v1372
      %v1374 = vsel %vm390, %v1352, %v1353
      %v1375 = vsel %vm1355, %v1339, %v1374
      %v1376 = vsel %vm1355, %v1341, %v1353
      %1389 = vst [vmem:[#allocation3 + $0x370] sm:$0xff] %v1356
      %1390 = vst [vmem:[#allocation3 + $0x378] sm:$0xff] %v1358
      %1391 = vst [vmem:[#allocation3 + $0x380] sm:$0xff] %v1360
      %1392 = vst [vmem:[#allocation3 + $0x388] sm:$0xff] %v1362
      %1393 = vst [vmem:[#allocation3 + $0x390] sm:$0xff] %v1364
      %1394 = vst [vmem:[#allocation3 + $0x398] sm:$0xf] %v1365
      %1395 = vst [vmem:[#allocation3 + $0x39c] sm:$0xff] %v1367
      %1396 = vst [vmem:[#allocation3 + $0x3a4] sm:$0xff] %v1369
      %1397 = vst [vmem:[#allocation3 + $0x3ac] sm:$0xff] %v1371
      %1398 = vst [vmem:[#allocation3 + $0x3b4] sm:$0xff] %v1373
      %1399 = vst [vmem:[#allocation3 + $0x3bc] sm:$0xff] %v1375
      %1400 = vst [vmem:[#allocation3 + $0x3c4] sm:$0xf] %v1376
      %v1401 = vld [vmem:[%s221 + $0x8] sm:$0xff]
      %v1402 = vld [vmem:[%s221 + $0x10] sm:$0xff]
      %v1403 = vld [vmem:[%s221 + $0x18] sm:$0xff]
      %v1404 = vld [vmem:[%s221 + $0x20] sm:$0xff]
      %v1405 = vld [vmem:[%s221 + $0x28] sm:$0xff]
      %v1406 = vld [vmem:[%s221 + $0x30] sm:$0xff]
      %v1407 = vld [vmem:[%s221 + $0x4c] sm:$0xff]
      %v1408 = vld [vmem:[%s221 + $0x54] sm:$0xff]
      %v1409 = vld [vmem:[%s221 + $0x5c] sm:$0xff]
      %v1410 = vld [vmem:[%s221 + $0x64] sm:$0xff]
      %v1411 = vld [vmem:[%s221 + $0x6c] sm:$0xff]
      %v1412 = vld [vmem:[%s221 + $0x74] sm:$0xff]
      %1425 = vrot.lane.b32.xlu0 %v1401, 58
      %v1426 = vpop.permute.xlu0 %1425
      %1427 = vrot.lane.b32.xlu0 %v1402, 58
      %v1428 = vpop.permute.xlu0 %1427
      %1429 = vrot.lane.b32.xlu0 %v1403, 58
      %v1430 = vpop.permute.xlu0 %1429
      %1431 = vrot.lane.b32.xlu0 %v1404, 58
      %v1432 = vpop.permute.xlu0 %1431
      %1433 = vrot.lane.b32.xlu0 %v1405, 58
      %v1434 = vpop.permute.xlu0 %1433
      %1435 = vrot.lane.b32.xlu0 %v1406, 58
      %v1436 = vpop.permute.xlu0 %1435
      %1437 = vrot.lane.b32.xlu0 %v1407, 58
      %v1438 = vpop.permute.xlu0 %1437
      %1439 = vrot.lane.b32.xlu0 %v1408, 58
      %v1440 = vpop.permute.xlu0 %1439
      %1441 = vrot.lane.b32.xlu0 %v1409, 58
      %v1442 = vpop.permute.xlu0 %1441
      %1443 = vrot.lane.b32.xlu0 %v1410, 58
      %v1444 = vpop.permute.xlu0 %1443
      %1445 = vrot.lane.b32.xlu0 %v1411, 58
      %v1446 = vpop.permute.xlu0 %1445
      %1447 = vrot.lane.b32.xlu0 %v1412, 58
      %v1448 = vpop.permute.xlu0 %1447
      %v1449 = vrot.slane %v1426, 4
      %v1450 = vrot.slane %v1428, 4
      %v1451 = vrot.slane %v1430, 4
      %v1452 = vrot.slane %v1432, 4
      %v1453 = vrot.slane %v1434, 4
      %v1454 = vrot.slane %v1436, 4
      %v1455 = vrot.slane %v1438, 4
      %v1456 = vrot.slane %v1440, 4
      %v1457 = vrot.slane %v1442, 4
      %v1458 = vrot.slane %v1444, 4
      %v1459 = vrot.slane %v1446, 4
      %v1460 = vrot.slane %v1448, 4
      %v1461 = vsel %vm390, %v1449, %v1450
      %vm1462 = vcmask 474112
      %v1463 = vsel %vm1462, %v1426, %v1461
      %v1464 = vsel %vm390, %v1450, %v1451
      %v1465 = vsel %vm1462, %v1428, %v1464
      %v1466 = vsel %vm390, %v1451, %v1452
      %v1467 = vsel %vm1462, %v1430, %v1466
      %v1468 = vsel %vm390, %v1452, %v1453
      %v1469 = vsel %vm1462, %v1432, %v1468
      %v1470 = vsel %vm390, %v1453, %v1454
      %v1471 = vsel %vm1462, %v1434, %v1470
      %v1472 = vsel %vm1462, %v1436, %v1454
      %v1473 = vsel %vm390, %v1455, %v1456
      %v1474 = vsel %vm1462, %v1438, %v1473
      %v1475 = vsel %vm390, %v1456, %v1457
      %v1476 = vsel %vm1462, %v1440, %v1475
      %v1477 = vsel %vm390, %v1457, %v1458
      %v1478 = vsel %vm1462, %v1442, %v1477
      %v1479 = vsel %vm390, %v1458, %v1459
      %v1480 = vsel %vm1462, %v1444, %v1479
      %v1481 = vsel %vm390, %v1459, %v1460
      %v1482 = vsel %vm1462, %v1446, %v1481
      %v1483 = vsel %vm1462, %v1448, %v1460
      %1496 = vst [vmem:[#allocation3 + $0x3c8] sm:$0xff] %v1463
      %1497 = vst [vmem:[#allocation3 + $0x3d0] sm:$0xff] %v1465
      %1498 = vst [vmem:[#allocation3 + $0x3d8] sm:$0xff] %v1467
      %1499 = vst [vmem:[#allocation3 + $0x3e0] sm:$0xff] %v1469
      %1500 = vst [vmem:[#allocation3 + $0x3e8] sm:$0xff] %v1471
      %1501 = vst [vmem:[#allocation3 + $0x3f0] sm:$0xf] %v1472
      %1502 = vst [vmem:[#allocation3 + $0x3f4] sm:$0xff] %v1474
      %1503 = vst [vmem:[#allocation3 + $0x3fc] sm:$0xff] %v1476
      %1504 = vst [vmem:[#allocation3 + $0x404] sm:$0xff] %v1478
      %1505 = vst [vmem:[#allocation3 + $0x40c] sm:$0xff] %v1480
      %1506 = vst [vmem:[#allocation3 + $0x414] sm:$0xff] %v1482
      %1507 = vst [vmem:[#allocation3 + $0x41c] sm:$0xf] %v1483
      %v1508 = vld [vmem:[%s221 + $0x8] sm:$0xff]
      %v1509 = vld [vmem:[%s221 + $0x10] sm:$0xff]
      %v1510 = vld [vmem:[%s221 + $0x18] sm:$0xff]
      %v1511 = vld [vmem:[%s221 + $0x20] sm:$0xff]
      %v1512 = vld [vmem:[%s221 + $0x28] sm:$0xff]
      %v1513 = vld [vmem:[%s221 + $0x30] sm:$0xff]
      %v1514 = vld [vmem:[%s221 + $0x4c] sm:$0xff]
      %v1515 = vld [vmem:[%s221 + $0x54] sm:$0xff]
      %v1516 = vld [vmem:[%s221 + $0x5c] sm:$0xff]
      %v1517 = vld [vmem:[%s221 + $0x64] sm:$0xff]
      %v1518 = vld [vmem:[%s221 + $0x6c] sm:$0xff]
      %v1519 = vld [vmem:[%s221 + $0x74] sm:$0xff]
      %1532 = vrot.lane.b32.xlu0 %v1508, 42
      %v1533 = vpop.permute.xlu0 %1532
      %1534 = vrot.lane.b32.xlu0 %v1509, 42
      %v1535 = vpop.permute.xlu0 %1534
      %1536 = vrot.lane.b32.xlu0 %v1510, 42
      %v1537 = vpop.permute.xlu0 %1536
      %1538 = vrot.lane.b32.xlu0 %v1511, 42
      %v1539 = vpop.permute.xlu0 %1538
      %1540 = vrot.lane.b32.xlu0 %v1512, 42
      %v1541 = vpop.permute.xlu0 %1540
      %1542 = vrot.lane.b32.xlu0 %v1513, 42
      %v1543 = vpop.permute.xlu0 %1542
      %1544 = vrot.lane.b32.xlu0 %v1514, 42
      %v1545 = vpop.permute.xlu0 %1544
      %1546 = vrot.lane.b32.xlu0 %v1515, 42
      %v1547 = vpop.permute.xlu0 %1546
      %1548 = vrot.lane.b32.xlu0 %v1516, 42
      %v1549 = vpop.permute.xlu0 %1548
      %1550 = vrot.lane.b32.xlu0 %v1517, 42
      %v1551 = vpop.permute.xlu0 %1550
      %1552 = vrot.lane.b32.xlu0 %v1518, 42
      %v1553 = vpop.permute.xlu0 %1552
      %1554 = vrot.lane.b32.xlu0 %v1519, 42
      %v1555 = vpop.permute.xlu0 %1554
      %v1556 = vrot.slane %v1533, 4
      %v1557 = vrot.slane %v1535, 4
      %v1558 = vrot.slane %v1537, 4
      %v1559 = vrot.slane %v1539, 4
      %v1560 = vrot.slane %v1541, 4
      %v1561 = vrot.slane %v1543, 4
      %v1562 = vrot.slane %v1545, 4
      %v1563 = vrot.slane %v1547, 4
      %v1564 = vrot.slane %v1549, 4
      %v1565 = vrot.slane %v1551, 4
      %v1566 = vrot.slane %v1553, 4
      %v1567 = vrot.slane %v1555, 4
      %v1568 = vsel %vm390, %v1556, %v1557
      %vm1569 = vcmask 343040
      %v1570 = vsel %vm1569, %v1533, %v1568
      %v1571 = vsel %vm390, %v1557, %v1558
      %v1572 = vsel %vm1569, %v1535, %v1571
      %v1573 = vsel %vm390, %v1558, %v1559
      %v1574 = vsel %vm1569, %v1537, %v1573
      %v1575 = vsel %vm390, %v1559, %v1560
      %v1576 = vsel %vm1569, %v1539, %v1575
      %v1577 = vsel %vm390, %v1560, %v1561
      %v1578 = vsel %vm1569, %v1541, %v1577
      %v1579 = vsel %vm1569, %v1543, %v1561
      %v1580 = vsel %vm390, %v1562, %v1563
      %v1581 = vsel %vm1569, %v1545, %v1580
      %v1582 = vsel %vm390, %v1563, %v1564
      %v1583 = vsel %vm1569, %v1547, %v1582
      %v1584 = vsel %vm390, %v1564, %v1565
      %v1585 = vsel %vm1569, %v1549, %v1584
      %v1586 = vsel %vm390, %v1565, %v1566
      %v1587 = vsel %vm1569, %v1551, %v1586
      %v1588 = vsel %vm390, %v1566, %v1567
      %v1589 = vsel %vm1569, %v1553, %v1588
      %v1590 = vsel %vm1569, %v1555, %v1567
      %1603 = vst [vmem:[#allocation3 + $0x420] sm:$0xff] %v1570
      %1604 = vst [vmem:[#allocation3 + $0x428] sm:$0xff] %v1572
      %1605 = vst [vmem:[#allocation3 + $0x430] sm:$0xff] %v1574
      %1606 = vst [vmem:[#allocation3 + $0x438] sm:$0xff] %v1576
      %1607 = vst [vmem:[#allocation3 + $0x440] sm:$0xff] %v1578
      %1608 = vst [vmem:[#allocation3 + $0x448] sm:$0xf] %v1579
      %1609 = vst [vmem:[#allocation3 + $0x44c] sm:$0xff] %v1581
      %1610 = vst [vmem:[#allocation3 + $0x454] sm:$0xff] %v1583
      %1611 = vst [vmem:[#allocation3 + $0x45c] sm:$0xff] %v1585
      %1612 = vst [vmem:[#allocation3 + $0x464] sm:$0xff] %v1587
      %1613 = vst [vmem:[#allocation3 + $0x46c] sm:$0xff] %v1589
      %1614 = vst [vmem:[#allocation3 + $0x474] sm:$0xf] %v1590
      %v1615 = vld [vmem:[%s221 + $0x8] sm:$0xff]
      %v1616 = vld [vmem:[%s221 + $0x10] sm:$0xff]
      %v1617 = vld [vmem:[%s221 + $0x18] sm:$0xff]
      %v1618 = vld [vmem:[%s221 + $0x20] sm:$0xff]
      %v1619 = vld [vmem:[%s221 + $0x28] sm:$0xff]
      %v1620 = vld [vmem:[%s221 + $0x30] sm:$0xff]
      %v1621 = vld [vmem:[%s221 + $0x4c] sm:$0xff]
      %v1622 = vld [vmem:[%s221 + $0x54] sm:$0xff]
      %v1623 = vld [vmem:[%s221 + $0x5c] sm:$0xff]
      %v1624 = vld [vmem:[%s221 + $0x64] sm:$0xff]
      %v1625 = vld [vmem:[%s221 + $0x6c] sm:$0xff]
      %v1626 = vld [vmem:[%s221 + $0x74] sm:$0xff]
      %1639 = vrot.lane.b32.xlu0 %v1615, 41
      %v1640 = vpop.permute.xlu0 %1639
      %1641 = vrot.lane.b32.xlu0 %v1616, 41
      %v1642 = vpop.permute.xlu0 %1641
      %1643 = vrot.lane.b32.xlu0 %v1617, 41
      %v1644 = vpop.permute.xlu0 %1643
      %1645 = vrot.lane.b32.xlu0 %v1618, 41
      %v1646 = vpop.permute.xlu0 %1645
      %1647 = vrot.lane.b32.xlu0 %v1619, 41
      %v1648 = vpop.permute.xlu0 %1647
      %1649 = vrot.lane.b32.xlu0 %v1620, 41
      %v1650 = vpop.permute.xlu0 %1649
      %1651 = vrot.lane.b32.xlu0 %v1621, 41
      %v1652 = vpop.permute.xlu0 %1651
      %1653 = vrot.lane.b32.xlu0 %v1622, 41
      %v1654 = vpop.permute.xlu0 %1653
      %1655 = vrot.lane.b32.xlu0 %v1623, 41
      %v1656 = vpop.permute.xlu0 %1655
      %1657 = vrot.lane.b32.xlu0 %v1624, 41
      %v1658 = vpop.permute.xlu0 %1657
      %1659 = vrot.lane.b32.xlu0 %v1625, 41
      %v1660 = vpop.permute.xlu0 %1659
      %1661 = vrot.lane.b32.xlu0 %v1626, 41
      %v1662 = vpop.permute.xlu0 %1661
      %v1663 = vrot.slane %v1640, 4
      %v1664 = vrot.slane %v1642, 4
      %v1665 = vrot.slane %v1644, 4
      %v1666 = vrot.slane %v1646, 4
      %v1667 = vrot.slane %v1648, 4
      %v1668 = vrot.slane %v1650, 4
      %v1669 = vrot.slane %v1652, 4
      %v1670 = vrot.slane %v1654, 4
      %v1671 = vrot.slane %v1656, 4
      %v1672 = vrot.slane %v1658, 4
      %v1673 = vrot.slane %v1660, 4
      %v1674 = vrot.slane %v1662, 4
      %v1675 = vsel %vm390, %v1663, %v1664
      %vm1676 = vcmask 334848
      %v1677 = vsel %vm1676, %v1640, %v1675
      %v1678 = vsel %vm390, %v1664, %v1665
      %v1679 = vsel %vm1676, %v1642, %v1678
      %v1680 = vsel %vm390, %v1665, %v1666
      %v1681 = vsel %vm1676, %v1644, %v1680
      %v1682 = vsel %vm390, %v1666, %v1667
      %v1683 = vsel %vm1676, %v1646, %v1682
      %v1684 = vsel %vm390, %v1667, %v1668
      %v1685 = vsel %vm1676, %v1648, %v1684
      %v1686 = vsel %vm1676, %v1650, %v1668
      %v1687 = vsel %vm390, %v1669, %v1670
      %v1688 = vsel %vm1676, %v1652, %v1687
      %v1689 = vsel %vm390, %v1670, %v1671
      %v1690 = vsel %vm1676, %v1654, %v1689
      %v1691 = vsel %vm390, %v1671, %v1672
      %v1692 = vsel %vm1676, %v1656, %v1691
      %v1693 = vsel %vm390, %v1672, %v1673
      %v1694 = vsel %vm1676, %v1658, %v1693
      %v1695 = vsel %vm390, %v1673, %v1674
      %v1696 = vsel %vm1676, %v1660, %v1695
      %v1697 = vsel %vm1676, %v1662, %v1674
      %1710 = vst [vmem:[#allocation3 + $0x478] sm:$0xff] %v1677
      %1711 = vst [vmem:[#allocation3 + $0x480] sm:$0xff] %v1679
      %1712 = vst [vmem:[#allocation3 + $0x488] sm:$0xff] %v1681
      %1713 = vst [vmem:[#allocation3 + $0x490] sm:$0xff] %v1683
      %1714 = vst [vmem:[#allocation3 + $0x498] sm:$0xff] %v1685
      %1715 = vst [vmem:[#allocation3 + $0x4a0] sm:$0xf] %v1686
      %1716 = vst [vmem:[#allocation3 + $0x4a4] sm:$0xff] %v1688
      %1717 = vst [vmem:[#allocation3 + $0x4ac] sm:$0xff] %v1690
      %1718 = vst [vmem:[#allocation3 + $0x4b4] sm:$0xff] %v1692
      %1719 = vst [vmem:[#allocation3 + $0x4bc] sm:$0xff] %v1694
      %1720 = vst [vmem:[#allocation3 + $0x4c4] sm:$0xff] %v1696
      %1721 = vst [vmem:[#allocation3 + $0x4cc] sm:$0xf] %v1697
      %v1722 = vld [vmem:[%s221 + $0x8] sm:$0xff]
      %v1723 = vld [vmem:[%s221 + $0x10] sm:$0xff]
      %v1724 = vld [vmem:[%s221 + $0x18] sm:$0xff]
      %v1725 = vld [vmem:[%s221 + $0x20] sm:$0xff]
      %v1726 = vld [vmem:[%s221 + $0x28] sm:$0xff]
      %v1727 = vld [vmem:[%s221 + $0x30] sm:$0xff]
      %v1728 = vld [vmem:[%s221 + $0x4c] sm:$0xff]
      %v1729 = vld [vmem:[%s221 + $0x54] sm:$0xff]
      %v1730 = vld [vmem:[%s221 + $0x5c] sm:$0xff]
      %v1731 = vld [vmem:[%s221 + $0x64] sm:$0xff]
      %v1732 = vld [vmem:[%s221 + $0x6c] sm:$0xff]
      %v1733 = vld [vmem:[%s221 + $0x74] sm:$0xff]
      %1746 = vrot.lane.b32.xlu0 %v1722, 40
      %v1747 = vpop.permute.xlu0 %1746
      %1748 = vrot.lane.b32.xlu0 %v1723, 40
      %v1749 = vpop.permute.xlu0 %1748
      %1750 = vrot.lane.b32.xlu0 %v1724, 40
      %v1751 = vpop.permute.xlu0 %1750
      %1752 = vrot.lane.b32.xlu0 %v1725, 40
      %v1753 = vpop.permute.xlu0 %1752
      %1754 = vrot.lane.b32.xlu0 %v1726, 40
      %v1755 = vpop.permute.xlu0 %1754
      %1756 = vrot.lane.b32.xlu0 %v1727, 40
      %v1757 = vpop.permute.xlu0 %1756
      %1758 = vrot.lane.b32.xlu0 %v1728, 40
      %v1759 = vpop.permute.xlu0 %1758
      %1760 = vrot.lane.b32.xlu0 %v1729, 40
      %v1761 = vpop.permute.xlu0 %1760
      %1762 = vrot.lane.b32.xlu0 %v1730, 40
      %v1763 = vpop.permute.xlu0 %1762
      %1764 = vrot.lane.b32.xlu0 %v1731, 40
      %v1765 = vpop.permute.xlu0 %1764
      %1766 = vrot.lane.b32.xlu0 %v1732, 40
      %v1767 = vpop.permute.xlu0 %1766
      %1768 = vrot.lane.b32.xlu0 %v1733, 40
      %v1769 = vpop.permute.xlu0 %1768
      %v1770 = vrot.slane %v1747, 4
      %v1771 = vrot.slane %v1749, 4
      %v1772 = vrot.slane %v1751, 4
      %v1773 = vrot.slane %v1753, 4
      %v1774 = vrot.slane %v1755, 4
      %v1775 = vrot.slane %v1757, 4
      %v1776 = vrot.slane %v1759, 4
      %v1777 = vrot.slane %v1761, 4
      %v1778 = vrot.slane %v1763, 4
      %v1779 = vrot.slane %v1765, 4
      %v1780 = vrot.slane %v1767, 4
      %v1781 = vrot.slane %v1769, 4
      %v1782 = vsel %vm390, %v1770, %v1771
      %vm1783 = vcmask 326656
      %v1784 = vsel %vm1783, %v1747, %v1782
      %v1785 = vsel %vm390, %v1771, %v1772
      %v1786 = vsel %vm1783, %v1749, %v1785
      %v1787 = vsel %vm390, %v1772, %v1773
      %v1788 = vsel %vm1783, %v1751, %v1787
      %v1789 = vsel %vm390, %v1773, %v1774
      %v1790 = vsel %vm1783, %v1753, %v1789
      %v1791 = vsel %vm390, %v1774, %v1775
      %v1792 = vsel %vm1783, %v1755, %v1791
      %v1793 = vsel %vm1783, %v1757, %v1775
      %v1794 = vsel %vm390, %v1776, %v1777
      %v1795 = vsel %vm1783, %v1759, %v1794
      %v1796 = vsel %vm390, %v1777, %v1778
      %v1797 = vsel %vm1783, %v1761, %v1796
      %v1798 = vsel %vm390, %v1778, %v1779
      %v1799 = vsel %vm1783, %v1763, %v1798
      %v1800 = vsel %vm390, %v1779, %v1780
      %v1801 = vsel %vm1783, %v1765, %v1800
      %v1802 = vsel %vm390, %v1780, %v1781
      %v1803 = vsel %vm1783, %v1767, %v1802
      %v1804 = vsel %vm1783, %v1769, %v1781
      %1817 = vst [vmem:[#allocation3 + $0x4d0] sm:$0xff] %v1784
      %1818 = vst [vmem:[#allocation3 + $0x4d8] sm:$0xff] %v1786
      %1819 = vst [vmem:[#allocation3 + $0x4e0] sm:$0xff] %v1788
      %1820 = vst [vmem:[#allocation3 + $0x4e8] sm:$0xff] %v1790
      %1821 = vst [vmem:[#allocation3 + $0x4f0] sm:$0xff] %v1792
      %1822 = vst [vmem:[#allocation3 + $0x4f8] sm:$0xf] %v1793
      %1823 = vst [vmem:[#allocation3 + $0x4fc] sm:$0xff] %v1795
      %1824 = vst [vmem:[#allocation3 + $0x504] sm:$0xff] %v1797
      %1825 = vst [vmem:[#allocation3 + $0x50c] sm:$0xff] %v1799
      %1826 = vst [vmem:[#allocation3 + $0x514] sm:$0xff] %v1801
      %1827 = vst [vmem:[#allocation3 + $0x51c] sm:$0xff] %v1803
      %1828 = vst [vmem:[#allocation3 + $0x524] sm:$0xf] %v1804
      %v1829 = vld [vmem:[%s221 + $0x8] sm:$0xff]
      %v1830 = vld [vmem:[%s221 + $0x10] sm:$0xff]
      %v1831 = vld [vmem:[%s221 + $0x18] sm:$0xff]
      %v1832 = vld [vmem:[%s221 + $0x20] sm:$0xff]
      %v1833 = vld [vmem:[%s221 + $0x28] sm:$0xff]
      %v1834 = vld [vmem:[%s221 + $0x30] sm:$0xff]
      %v1835 = vld [vmem:[%s221 + $0x4c] sm:$0xff]
      %v1836 = vld [vmem:[%s221 + $0x54] sm:$0xff]
      %v1837 = vld [vmem:[%s221 + $0x5c] sm:$0xff]
      %v1838 = vld [vmem:[%s221 + $0x64] sm:$0xff]
      %v1839 = vld [vmem:[%s221 + $0x6c] sm:$0xff]
      %v1840 = vld [vmem:[%s221 + $0x74] sm:$0xff]
      %1853 = vrot.lane.b32.xlu0 %v1829, 24
      %v1854 = vpop.permute.xlu0 %1853
      %1855 = vrot.lane.b32.xlu0 %v1830, 24
      %v1856 = vpop.permute.xlu0 %1855
      %1857 = vrot.lane.b32.xlu0 %v1831, 24
      %v1858 = vpop.permute.xlu0 %1857
      %1859 = vrot.lane.b32.xlu0 %v1832, 24
      %v1860 = vpop.permute.xlu0 %1859
      %1861 = vrot.lane.b32.xlu0 %v1833, 24
      %v1862 = vpop.permute.xlu0 %1861
      %1863 = vrot.lane.b32.xlu0 %v1834, 24
      %v1864 = vpop.permute.xlu0 %1863
      %1865 = vrot.lane.b32.xlu0 %v1835, 24
      %v1866 = vpop.permute.xlu0 %1865
      %1867 = vrot.lane.b32.xlu0 %v1836, 24
      %v1868 = vpop.permute.xlu0 %1867
      %1869 = vrot.lane.b32.xlu0 %v1837, 24
      %v1870 = vpop.permute.xlu0 %1869
      %1871 = vrot.lane.b32.xlu0 %v1838, 24
      %v1872 = vpop.permute.xlu0 %1871
      %1873 = vrot.lane.b32.xlu0 %v1839, 24
      %v1874 = vpop.permute.xlu0 %1873
      %1875 = vrot.lane.b32.xlu0 %v1840, 24
      %v1876 = vpop.permute.xlu0 %1875
      %v1877 = vrot.slane %v1854, 4
      %v1878 = vrot.slane %v1856, 4
      %v1879 = vrot.slane %v1858, 4
      %v1880 = vrot.slane %v1860, 4
      %v1881 = vrot.slane %v1862, 4
      %v1882 = vrot.slane %v1864, 4
      %v1883 = vrot.slane %v1866, 4
      %v1884 = vrot.slane %v1868, 4
      %v1885 = vrot.slane %v1870, 4
      %v1886 = vrot.slane %v1872, 4
      %v1887 = vrot.slane %v1874, 4
      %v1888 = vrot.slane %v1876, 4
      %v1889 = vsel %vm390, %v1877, %v1878
      %vm1890 = vcmask 195584
      %v1891 = vsel %vm1890, %v1854, %v1889
      %v1892 = vsel %vm390, %v1878, %v1879
      %v1893 = vsel %vm1890, %v1856, %v1892
      %v1894 = vsel %vm390, %v1879, %v1880
      %v1895 = vsel %vm1890, %v1858, %v1894
      %v1896 = vsel %vm390, %v1880, %v1881
      %v1897 = vsel %vm1890, %v1860, %v1896
      %v1898 = vsel %vm390, %v1881, %v1882
      %v1899 = vsel %vm1890, %v1862, %v1898
      %v1900 = vsel %vm1890, %v1864, %v1882
      %v1901 = vsel %vm390, %v1883, %v1884
      %v1902 = vsel %vm1890, %v1866, %v1901
      %v1903 = vsel %vm390, %v1884, %v1885
      %v1904 = vsel %vm1890, %v1868, %v1903
      %v1905 = vsel %vm390, %v1885, %v1886
      %v1906 = vsel %vm1890, %v1870, %v1905
      %v1907 = vsel %vm390, %v1886, %v1887
      %v1908 = vsel %vm1890, %v1872, %v1907
      %v1909 = vsel %vm390, %v1887, %v1888
      %v1910 = vsel %vm1890, %v1874, %v1909
      %v1911 = vsel %vm1890, %v1876, %v1888
      %1924 = vst [vmem:[#allocation3 + $0x528] sm:$0xff] %v1891
      %1925 = vst [vmem:[#allocation3 + $0x530] sm:$0xff] %v1893
      %1926 = vst [vmem:[#allocation3 + $0x538] sm:$0xff] %v1895
      %1927 = vst [vmem:[#allocation3 + $0x540] sm:$0xff] %v1897
      %1928 = vst [vmem:[#allocation3 + $0x548] sm:$0xff] %v1899
      %1929 = vst [vmem:[#allocation3 + $0x550] sm:$0xf] %v1900
      %1930 = vst [vmem:[#allocation3 + $0x554] sm:$0xff] %v1902
      %1931 = vst [vmem:[#allocation3 + $0x55c] sm:$0xff] %v1904
      %1932 = vst [vmem:[#allocation3 + $0x564] sm:$0xff] %v1906
      %1933 = vst [vmem:[#allocation3 + $0x56c] sm:$0xff] %v1908
      %1934 = vst [vmem:[#allocation3 + $0x574] sm:$0xff] %v1910
      %1935 = vst [vmem:[#allocation3 + $0x57c] sm:$0xf] %v1911
      %v1936 = vld [vmem:[%s221 + $0x8] sm:$0xff]
      %v1937 = vld [vmem:[%s221 + $0x10] sm:$0xff]
      %v1938 = vld [vmem:[%s221 + $0x18] sm:$0xff]
      %v1939 = vld [vmem:[%s221 + $0x20] sm:$0xff]
      %v1940 = vld [vmem:[%s221 + $0x28] sm:$0xff]
      %v1941 = vld [vmem:[%s221 + $0x30] sm:$0xff]
      %v1942 = vld [vmem:[%s221 + $0x4c] sm:$0xff]
      %v1943 = vld [vmem:[%s221 + $0x54] sm:$0xff]
      %v1944 = vld [vmem:[%s221 + $0x5c] sm:$0xff]
      %v1945 = vld [vmem:[%s221 + $0x64] sm:$0xff]
      %v1946 = vld [vmem:[%s221 + $0x6c] sm:$0xff]
      %v1947 = vld [vmem:[%s221 + $0x74] sm:$0xff]
      %1960 = vrot.lane.b32.xlu0 %v1936, 23
      %v1961 = vpop.permute.xlu0 %1960
      %1962 = vrot.lane.b32.xlu0 %v1937, 23
      %v1963 = vpop.permute.xlu0 %1962
      %1964 = vrot.lane.b32.xlu0 %v1938, 23
      %v1965 = vpop.permute.xlu0 %1964
      %1966 = vrot.lane.b32.xlu0 %v1939, 23
      %v1967 = vpop.permute.xlu0 %1966
      %1968 = vrot.lane.b32.xlu0 %v1940, 23
      %v1969 = vpop.permute.xlu0 %1968
      %1970 = vrot.lane.b32.xlu0 %v1941, 23
      %v1971 = vpop.permute.xlu0 %1970
      %1972 = vrot.lane.b32.xlu0 %v1942, 23
      %v1973 = vpop.permute.xlu0 %1972
      %1974 = vrot.lane.b32.xlu0 %v1943, 23
      %v1975 = vpop.permute.xlu0 %1974
      %1976 = vrot.lane.b32.xlu0 %v1944, 23
      %v1977 = vpop.permute.xlu0 %1976
      %1978 = vrot.lane.b32.xlu0 %v1945, 23
      %v1979 = vpop.permute.xlu0 %1978
      %1980 = vrot.lane.b32.xlu0 %v1946, 23
      %v1981 = vpop.permute.xlu0 %1980
      %1982 = vrot.lane.b32.xlu0 %v1947, 23
      %v1983 = vpop.permute.xlu0 %1982
      %v1984 = vrot.slane %v1961, 4
      %v1985 = vrot.slane %v1963, 4
      %v1986 = vrot.slane %v1965, 4
      %v1987 = vrot.slane %v1967, 4
      %v1988 = vrot.slane %v1969, 4
      %v1989 = vrot.slane %v1971, 4
      %v1990 = vrot.slane %v1973, 4
      %v1991 = vrot.slane %v1975, 4
      %v1992 = vrot.slane %v1977, 4
      %v1993 = vrot.slane %v1979, 4
      %v1994 = vrot.slane %v1981, 4
      %v1995 = vrot.slane %v1983, 4
      %v1996 = vsel %vm390, %v1984, %v1985
      %vm1997 = vcmask 187392
      %v1998 = vsel %vm1997, %v1961, %v1996
      %v1999 = vsel %vm390, %v1985, %v1986
      %v2000 = vsel %vm1997, %v1963, %v1999
      %v2001 = vsel %vm390, %v1986, %v1987
      %v2002 = vsel %vm1997, %v1965, %v2001
      %v2003 = vsel %vm390, %v1987, %v1988
      %v2004 = vsel %vm1997, %v1967, %v2003
      %v2005 = vsel %vm390, %v1988, %v1989
      %v2006 = vsel %vm1997, %v1969, %v2005
      %v2007 = vsel %vm1997, %v1971, %v1989
      %v2008 = vsel %vm390, %v1990, %v1991
      %v2009 = vsel %vm1997, %v1973, %v2008
      %v2010 = vsel %vm390, %v1991, %v1992
      %v2011 = vsel %vm1997, %v1975, %v2010
      %v2012 = vsel %vm390, %v1992, %v1993
      %v2013 = vsel %vm1997, %v1977, %v2012
      %v2014 = vsel %vm390, %v1993, %v1994
      %v2015 = vsel %vm1997, %v1979, %v2014
      %v2016 = vsel %vm390, %v1994, %v1995
      %v2017 = vsel %vm1997, %v1981, %v2016
      %v2018 = vsel %vm1997, %v1983, %v1995
      %2031 = vst [vmem:[#allocation3 + $0x580] sm:$0xff] %v1998
      %2032 = vst [vmem:[#allocation3 + $0x588] sm:$0xff] %v2000
      %2033 = vst [vmem:[#allocation3 + $0x590] sm:$0xff] %v2002
      %2034 = vst [vmem:[#allocation3 + $0x598] sm:$0xff] %v2004
      %2035 = vst [vmem:[#allocation3 + $0x5a0] sm:$0xff] %v2006
      %2036 = vst [vmem:[#allocation3 + $0x5a8] sm:$0xf] %v2007
      %2037 = vst [vmem:[#allocation3 + $0x5ac] sm:$0xff] %v2009
      %2038 = vst [vmem:[#allocation3 + $0x5b4] sm:$0xff] %v2011
      %2039 = vst [vmem:[#allocation3 + $0x5bc] sm:$0xff] %v2013
      %2040 = vst [vmem:[#allocation3 + $0x5c4] sm:$0xff] %v2015
      %2041 = vst [vmem:[#allocation3 + $0x5cc] sm:$0xff] %v2017
      %2042 = vst [vmem:[#allocation3 + $0x5d4] sm:$0xf] %v2018
      %v2043 = vld [vmem:[%s221 + $0x8] sm:$0xff]
      %v2044 = vld [vmem:[%s221 + $0x10] sm:$0xff]
      %v2045 = vld [vmem:[%s221 + $0x18] sm:$0xff]
      %v2046 = vld [vmem:[%s221 + $0x20] sm:$0xff]
      %v2047 = vld [vmem:[%s221 + $0x28] sm:$0xff]
      %v2048 = vld [vmem:[%s221 + $0x30] sm:$0xff]
      %v2049 = vld [vmem:[%s221 + $0x4c] sm:$0xff]
      %v2050 = vld [vmem:[%s221 + $0x54] sm:$0xff]
      %v2051 = vld [vmem:[%s221 + $0x5c] sm:$0xff]
      %v2052 = vld [vmem:[%s221 + $0x64] sm:$0xff]
      %v2053 = vld [vmem:[%s221 + $0x6c] sm:$0xff]
      %v2054 = vld [vmem:[%s221 + $0x74] sm:$0xff]
      %2067 = vrot.lane.b32.xlu0 %v2043, 22
      %v2068 = vpop.permute.xlu0 %2067
      %2069 = vrot.lane.b32.xlu0 %v2044, 22
      %v2070 = vpop.permute.xlu0 %2069
      %2071 = vrot.lane.b32.xlu0 %v2045, 22
      %v2072 = vpop.permute.xlu0 %2071
      %2073 = vrot.lane.b32.xlu0 %v2046, 22
      %v2074 = vpop.permute.xlu0 %2073
      %2075 = vrot.lane.b32.xlu0 %v2047, 22
      %v2076 = vpop.permute.xlu0 %2075
      %2077 = vrot.lane.b32.xlu0 %v2048, 22
      %v2078 = vpop.permute.xlu0 %2077
      %2079 = vrot.lane.b32.xlu0 %v2049, 22
      %v2080 = vpop.permute.xlu0 %2079
      %2081 = vrot.lane.b32.xlu0 %v2050, 22
      %v2082 = vpop.permute.xlu0 %2081
      %2083 = vrot.lane.b32.xlu0 %v2051, 22
      %v2084 = vpop.permute.xlu0 %2083
      %2085 = vrot.lane.b32.xlu0 %v2052, 22
      %v2086 = vpop.permute.xlu0 %2085
      %2087 = vrot.lane.b32.xlu0 %v2053, 22
      %v2088 = vpop.permute.xlu0 %2087
      %2089 = vrot.lane.b32.xlu0 %v2054, 22
      %v2090 = vpop.permute.xlu0 %2089
      %v2091 = vrot.slane %v2068, 4
      %v2092 = vrot.slane %v2070, 4
      %v2093 = vrot.slane %v2072, 4
      %v2094 = vrot.slane %v2074, 4
      %v2095 = vrot.slane %v2076, 4
      %v2096 = vrot.slane %v2078, 4
      %v2097 = vrot.slane %v2080, 4
      %v2098 = vrot.slane %v2082, 4
      %v2099 = vrot.slane %v2084, 4
      %v2100 = vrot.slane %v2086, 4
      %v2101 = vrot.slane %v2088, 4
      %v2102 = vrot.slane %v2090, 4
      %v2103 = vsel %vm390, %v2091, %v2092
      %vm2104 = vcmask 179200
      %v2105 = vsel %vm2104, %v2068, %v2103
      %v2106 = vsel %vm390, %v2092, %v2093
      %v2107 = vsel %vm2104, %v2070, %v2106
      %v2108 = vsel %vm390, %v2093, %v2094
      %v2109 = vsel %vm2104, %v2072, %v2108
      %v2110 = vsel %vm390, %v2094, %v2095
      %v2111 = vsel %vm2104, %v2074, %v2110
      %v2112 = vsel %vm390, %v2095, %v2096
      %v2113 = vsel %vm2104, %v2076, %v2112
      %v2114 = vsel %vm2104, %v2078, %v2096
      %v2115 = vsel %vm390, %v2097, %v2098
      %v2116 = vsel %vm2104, %v2080, %v2115
      %v2117 = vsel %vm390, %v2098, %v2099
      %v2118 = vsel %vm2104, %v2082, %v2117
      %v2119 = vsel %vm390, %v2099, %v2100
      %v2120 = vsel %vm2104, %v2084, %v2119
      %v2121 = vsel %vm390, %v2100, %v2101
      %v2122 = vsel %vm2104, %v2086, %v2121
      %v2123 = vsel %vm390, %v2101, %v2102
      %v2124 = vsel %vm2104, %v2088, %v2123
      %v2125 = vsel %vm2104, %v2090, %v2102
      %2138 = vst [vmem:[#allocation3 + $0x5d8] sm:$0xff] %v2105
      %2139 = vst [vmem:[#allocation3 + $0x5e0] sm:$0xff] %v2107
      %2140 = vst [vmem:[#allocation3 + $0x5e8] sm:$0xff] %v2109
      %2141 = vst [vmem:[#allocation3 + $0x5f0] sm:$0xff] %v2111
      %2142 = vst [vmem:[#allocation3 + $0x5f8] sm:$0xff] %v2113
      %2143 = vst [vmem:[#allocation3 + $0x600] sm:$0xf] %v2114
      %2144 = vst [vmem:[#allocation3 + $0x604] sm:$0xff] %v2116
      %2145 = vst [vmem:[#allocation3 + $0x60c] sm:$0xff] %v2118
      %2146 = vst [vmem:[#allocation3 + $0x614] sm:$0xff] %v2120
      %2147 = vst [vmem:[#allocation3 + $0x61c] sm:$0xff] %v2122
      %2148 = vst [vmem:[#allocation3 + $0x624] sm:$0xff] %v2124
      %2149 = vst [vmem:[#allocation3 + $0x62c] sm:$0xf] %v2125
      %v2150 = vld [vmem:[%s221 + $0x14] sm:$0xff]
      %v2151 = vld [vmem:[%s221 + $0x1c] sm:$0xff]
      %v2152 = vld [vmem:[%s221 + $0x24] sm:$0xff]
      %v2153 = vld [vmem:[%s221 + $0x2c] sm:$0xff]
      %v2154 = vld [vmem:[%s221 + $0x34] sm:$0xff]
      %v2155 = vld [vmem:[%s221 + $0x3c] sm:$0xff]
      %v2156 = vld [vmem:[%s221 + $0x58] sm:$0xff]
      %v2157 = vld [vmem:[%s221 + $0x60] sm:$0xff]
      %v2158 = vld [vmem:[%s221 + $0x68] sm:$0xff]
      %v2159 = vld [vmem:[%s221 + $0x70] sm:$0xff]
      %v2160 = vld [vmem:[%s221 + $0x78] sm:$0xff]
      %v2161 = vld [vmem:[%s221 + $0x80] sm:$0xff]
      %2174 = vrot.lane.b32.xlu0 %v2150, 120
      %v2175 = vpop.permute.xlu0 %2174
      %2176 = vrot.lane.b32.xlu0 %v2151, 120
      %v2177 = vpop.permute.xlu0 %2176
      %2178 = vrot.lane.b32.xlu0 %v2152, 120
      %v2179 = vpop.permute.xlu0 %2178
      %2180 = vrot.lane.b32.xlu0 %v2153, 120
      %v2181 = vpop.permute.xlu0 %2180
      %2182 = vrot.lane.b32.xlu0 %v2154, 120
      %v2183 = vpop.permute.xlu0 %2182
      %2184 = vrot.lane.b32.xlu0 %v2155, 120
      %v2185 = vpop.permute.xlu0 %2184
      %2186 = vrot.lane.b32.xlu0 %v2156, 120
      %v2187 = vpop.permute.xlu0 %2186
      %2188 = vrot.lane.b32.xlu0 %v2157, 120
      %v2189 = vpop.permute.xlu0 %2188
      %2190 = vrot.lane.b32.xlu0 %v2158, 120
      %v2191 = vpop.permute.xlu0 %2190
      %2192 = vrot.lane.b32.xlu0 %v2159, 120
      %v2193 = vpop.permute.xlu0 %2192
      %2194 = vrot.lane.b32.xlu0 %v2160, 120
      %v2195 = vpop.permute.xlu0 %2194
      %2196 = vrot.lane.b32.xlu0 %v2161, 120
      %v2197 = vpop.permute.xlu0 %2196
      %v2198 = vrot.slane %v2175, 4
      %v2199 = vrot.slane %v2177, 4
      %v2200 = vrot.slane %v2179, 4
      %v2201 = vrot.slane %v2181, 4
      %v2202 = vrot.slane %v2183, 4
      %v2203 = vrot.slane %v2185, 4
      %v2204 = vrot.slane %v2187, 4
      %v2205 = vrot.slane %v2189, 4
      %v2206 = vrot.slane %v2191, 4
      %v2207 = vrot.slane %v2193, 4
      %v2208 = vrot.slane %v2195, 4
      %v2209 = vrot.slane %v2197, 4
      %v2210 = vsel %vm390, %v2198, %v2199
      %vm2211 = vcmask 982016
      %v2212 = vsel %vm2211, %v2175, %v2210
      %v2213 = vsel %vm390, %v2199, %v2200
      %v2214 = vsel %vm2211, %v2177, %v2213
      %v2215 = vsel %vm390, %v2200, %v2201
      %v2216 = vsel %vm2211, %v2179, %v2215
      %v2217 = vsel %vm390, %v2201, %v2202
      %v2218 = vsel %vm2211, %v2181, %v2217
      %v2219 = vsel %vm390, %v2202, %v2203
      %v2220 = vsel %vm2211, %v2183, %v2219
      %v2221 = vsel %vm2211, %v2185, %v2203
      %v2222 = vsel %vm390, %v2204, %v2205
      %v2223 = vsel %vm2211, %v2187, %v2222
      %v2224 = vsel %vm390, %v2205, %v2206
      %v2225 = vsel %vm2211, %v2189, %v2224
      %v2226 = vsel %vm390, %v2206, %v2207
      %v2227 = vsel %vm2211, %v2191, %v2226
      %v2228 = vsel %vm390, %v2207, %v2208
      %v2229 = vsel %vm2211, %v2193, %v2228
      %v2230 = vsel %vm390, %v2208, %v2209
      %v2231 = vsel %vm2211, %v2195, %v2230
      %v2232 = vsel %vm2211, %v2197, %v2209
      %2245 = vst [vmem:[#allocation3 + $0x630] sm:$0xff] %v2212
      %2246 = vst [vmem:[#allocation3 + $0x638] sm:$0xff] %v2214
      %2247 = vst [vmem:[#allocation3 + $0x640] sm:$0xff] %v2216
      %2248 = vst [vmem:[#allocation3 + $0x648] sm:$0xff] %v2218
      %2249 = vst [vmem:[#allocation3 + $0x650] sm:$0xff] %v2220
      %2250 = vst [vmem:[#allocation3 + $0x658] sm:$0xf] %v2221
      %2251 = vst [vmem:[#allocation3 + $0x65c] sm:$0xff] %v2223
      %2252 = vst [vmem:[#allocation3 + $0x664] sm:$0xff] %v2225
      %2253 = vst [vmem:[#allocation3 + $0x66c] sm:$0xff] %v2227
      %2254 = vst [vmem:[#allocation3 + $0x674] sm:$0xff] %v2229
      %2255 = vst [vmem:[#allocation3 + $0x67c] sm:$0xff] %v2231
      %2256 = vst [vmem:[#allocation3 + $0x684] sm:$0xf] %v2232
      %v2257 = vld [vmem:[%s221 + $0x14] sm:$0xff]
      %v2258 = vld [vmem:[%s221 + $0x1c] sm:$0xff]
      %v2259 = vld [vmem:[%s221 + $0x24] sm:$0xff]
      %v2260 = vld [vmem:[%s221 + $0x2c] sm:$0xff]
      %v2261 = vld [vmem:[%s221 + $0x34] sm:$0xff]
      %v2262 = vld [vmem:[%s221 + $0x3c] sm:$0xff]
      %v2263 = vld [vmem:[%s221 + $0x58] sm:$0xff]
      %v2264 = vld [vmem:[%s221 + $0x60] sm:$0xff]
      %v2265 = vld [vmem:[%s221 + $0x68] sm:$0xff]
      %v2266 = vld [vmem:[%s221 + $0x70] sm:$0xff]
      %v2267 = vld [vmem:[%s221 + $0x78] sm:$0xff]
      %v2268 = vld [vmem:[%s221 + $0x80] sm:$0xff]
      %2281 = vrot.lane.b32.xlu0 %v2257, 119
      %v2282 = vpop.permute.xlu0 %2281
      %2283 = vrot.lane.b32.xlu0 %v2258, 119
      %v2284 = vpop.permute.xlu0 %2283
      %2285 = vrot.lane.b32.xlu0 %v2259, 119
      %v2286 = vpop.permute.xlu0 %2285
      %2287 = vrot.lane.b32.xlu0 %v2260, 119
      %v2288 = vpop.permute.xlu0 %2287
      %2289 = vrot.lane.b32.xlu0 %v2261, 119
      %v2290 = vpop.permute.xlu0 %2289
      %2291 = vrot.lane.b32.xlu0 %v2262, 119
      %v2292 = vpop.permute.xlu0 %2291
      %2293 = vrot.lane.b32.xlu0 %v2263, 119
      %v2294 = vpop.permute.xlu0 %2293
      %2295 = vrot.lane.b32.xlu0 %v2264, 119
      %v2296 = vpop.permute.xlu0 %2295
      %2297 = vrot.lane.b32.xlu0 %v2265, 119
      %v2298 = vpop.permute.xlu0 %2297
      %2299 = vrot.lane.b32.xlu0 %v2266, 119
      %v2300 = vpop.permute.xlu0 %2299
      %2301 = vrot.lane.b32.xlu0 %v2267, 119
      %v2302 = vpop.permute.xlu0 %2301
      %2303 = vrot.lane.b32.xlu0 %v2268, 119
      %v2304 = vpop.permute.xlu0 %2303
      %v2305 = vrot.slane %v2282, 4
      %v2306 = vrot.slane %v2284, 4
      %v2307 = vrot.slane %v2286, 4
      %v2308 = vrot.slane %v2288, 4
      %v2309 = vrot.slane %v2290, 4
      %v2310 = vrot.slane %v2292, 4
      %v2311 = vrot.slane %v2294, 4
      %v2312 = vrot.slane %v2296, 4
      %v2313 = vrot.slane %v2298, 4
      %v2314 = vrot.slane %v2300, 4
      %v2315 = vrot.slane %v2302, 4
      %v2316 = vrot.slane %v2304, 4
      %v2317 = vsel %vm390, %v2305, %v2306
      %vm2318 = vcmask 973824
      %v2319 = vsel %vm2318, %v2282, %v2317
      %v2320 = vsel %vm390, %v2306, %v2307
      %v2321 = vsel %vm2318, %v2284, %v2320
      %v2322 = vsel %vm390, %v2307, %v2308
      %v2323 = vsel %vm2318, %v2286, %v2322
      %v2324 = vsel %vm390, %v2308, %v2309
      %v2325 = vsel %vm2318, %v2288, %v2324
      %v2326 = vsel %vm390, %v2309, %v2310
      %v2327 = vsel %vm2318, %v2290, %v2326
      %v2328 = vsel %vm2318, %v2292, %v2310
      %v2329 = vsel %vm390, %v2311, %v2312
      %v2330 = vsel %vm2318, %v2294, %v2329
      %v2331 = vsel %vm390, %v2312, %v2313
      %v2332 = vsel %vm2318, %v2296, %v2331
      %v2333 = vsel %vm390, %v2313, %v2314
      %v2334 = vsel %vm2318, %v2298, %v2333
      %v2335 = vsel %vm390, %v2314, %v2315
      %v2336 = vsel %vm2318, %v2300, %v2335
      %v2337 = vsel %vm390, %v2315, %v2316
      %v2338 = vsel %vm2318, %v2302, %v2337
      %v2339 = vsel %vm2318, %v2304, %v2316
      %2352 = vst [vmem:[#allocation3 + $0x688] sm:$0xff] %v2319
      %2353 = vst [vmem:[#allocation3 + $0x690] sm:$0xff] %v2321
      %2354 = vst [vmem:[#allocation3 + $0x698] sm:$0xff] %v2323
      %2355 = vst [vmem:[#allocation3 + $0x6a0] sm:$0xff] %v2325
      %2356 = vst [vmem:[#allocation3 + $0x6a8] sm:$0xff] %v2327
      %2357 = vst [vmem:[#allocation3 + $0x6b0] sm:$0xf] %v2328
      %2358 = vst [vmem:[#allocation3 + $0x6b4] sm:$0xff] %v2330
      %2359 = vst [vmem:[#allocation3 + $0x6bc] sm:$0xff] %v2332
      %2360 = vst [vmem:[#allocation3 + $0x6c4] sm:$0xff] %v2334
      %2361 = vst [vmem:[#allocation3 + $0x6cc] sm:$0xff] %v2336
      %2362 = vst [vmem:[#allocation3 + $0x6d4] sm:$0xff] %v2338
      %2363 = vst [vmem:[#allocation3 + $0x6dc] sm:$0xf] %v2339
      %v2364 = vld [vmem:[%s221 + $0x14] sm:$0xff]
      %v2365 = vld [vmem:[%s221 + $0x1c] sm:$0xff]
      %v2366 = vld [vmem:[%s221 + $0x24] sm:$0xff]
      %v2367 = vld [vmem:[%s221 + $0x2c] sm:$0xff]
      %v2368 = vld [vmem:[%s221 + $0x34] sm:$0xff]
      %v2369 = vld [vmem:[%s221 + $0x3c] sm:$0xff]
      %v2370 = vld [vmem:[%s221 + $0x58] sm:$0xff]
      %v2371 = vld [vmem:[%s221 + $0x60] sm:$0xff]
      %v2372 = vld [vmem:[%s221 + $0x68] sm:$0xff]
      %v2373 = vld [vmem:[%s221 + $0x70] sm:$0xff]
      %v2374 = vld [vmem:[%s221 + $0x78] sm:$0xff]
      %v2375 = vld [vmem:[%s221 + $0x80] sm:$0xff]
      %2388 = vrot.lane.b32.xlu0 %v2364, 118
      %v2389 = vpop.permute.xlu0 %2388
      %2390 = vrot.lane.b32.xlu0 %v2365, 118
      %v2391 = vpop.permute.xlu0 %2390
      %2392 = vrot.lane.b32.xlu0 %v2366, 118
      %v2393 = vpop.permute.xlu0 %2392
      %2394 = vrot.lane.b32.xlu0 %v2367, 118
      %v2395 = vpop.permute.xlu0 %2394
      %2396 = vrot.lane.b32.xlu0 %v2368, 118
      %v2397 = vpop.permute.xlu0 %2396
      %2398 = vrot.lane.b32.xlu0 %v2369, 118
      %v2399 = vpop.permute.xlu0 %2398
      %2400 = vrot.lane.b32.xlu0 %v2370, 118
      %v2401 = vpop.permute.xlu0 %2400
      %2402 = vrot.lane.b32.xlu0 %v2371, 118
      %v2403 = vpop.permute.xlu0 %2402
      %2404 = vrot.lane.b32.xlu0 %v2372, 118
      %v2405 = vpop.permute.xlu0 %2404
      %2406 = vrot.lane.b32.xlu0 %v2373, 118
      %v2407 = vpop.permute.xlu0 %2406
      %2408 = vrot.lane.b32.xlu0 %v2374, 118
      %v2409 = vpop.permute.xlu0 %2408
      %2410 = vrot.lane.b32.xlu0 %v2375, 118
      %v2411 = vpop.permute.xlu0 %2410
      %v2412 = vrot.slane %v2389, 4
      %v2413 = vrot.slane %v2391, 4
      %v2414 = vrot.slane %v2393, 4
      %v2415 = vrot.slane %v2395, 4
      %v2416 = vrot.slane %v2397, 4
      %v2417 = vrot.slane %v2399, 4
      %v2418 = vrot.slane %v2401, 4
      %v2419 = vrot.slane %v2403, 4
      %v2420 = vrot.slane %v2405, 4
      %v2421 = vrot.slane %v2407, 4
      %v2422 = vrot.slane %v2409, 4
      %v2423 = vrot.slane %v2411, 4
      %v2424 = vsel %vm390, %v2412, %v2413
      %vm2425 = vcmask 965632
      %v2426 = vsel %vm2425, %v2389, %v2424
      %v2427 = vsel %vm390, %v2413, %v2414
      %v2428 = vsel %vm2425, %v2391, %v2427
      %v2429 = vsel %vm390, %v2414, %v2415
      %v2430 = vsel %vm2425, %v2393, %v2429
      %v2431 = vsel %vm390, %v2415, %v2416
      %v2432 = vsel %vm2425, %v2395, %v2431
      %v2433 = vsel %vm390, %v2416, %v2417
      %v2434 = vsel %vm2425, %v2397, %v2433
      %v2435 = vsel %vm2425, %v2399, %v2417
      %v2436 = vsel %vm390, %v2418, %v2419
      %v2437 = vsel %vm2425, %v2401, %v2436
      %v2438 = vsel %vm390, %v2419, %v2420
      %v2439 = vsel %vm2425, %v2403, %v2438
      %v2440 = vsel %vm390, %v2420, %v2421
      %v2441 = vsel %vm2425, %v2405, %v2440
      %v2442 = vsel %vm390, %v2421, %v2422
      %v2443 = vsel %vm2425, %v2407, %v2442
      %v2444 = vsel %vm390, %v2422, %v2423
      %v2445 = vsel %vm2425, %v2409, %v2444
      %v2446 = vsel %vm2425, %v2411, %v2423
      %2459 = vst [vmem:[#allocation3 + $0x6e0] sm:$0xff] %v2426
      %2460 = vst [vmem:[#allocation3 + $0x6e8] sm:$0xff] %v2428
      %2461 = vst [vmem:[#allocation3 + $0x6f0] sm:$0xff] %v2430
      %2462 = vst [vmem:[#allocation3 + $0x6f8] sm:$0xff] %v2432
      %2463 = vst [vmem:[#allocation3 + $0x700] sm:$0xff] %v2434
      %2464 = vst [vmem:[#allocation3 + $0x708] sm:$0xf] %v2435
      %2465 = vst [vmem:[#allocation3 + $0x70c] sm:$0xff] %v2437
      %2466 = vst [vmem:[#allocation3 + $0x714] sm:$0xff] %v2439
      %2467 = vst [vmem:[#allocation3 + $0x71c] sm:$0xff] %v2441
      %2468 = vst [vmem:[#allocation3 + $0x724] sm:$0xff] %v2443
      %2469 = vst [vmem:[#allocation3 + $0x72c] sm:$0xff] %v2445
      %2470 = vst [vmem:[#allocation3 + $0x734] sm:$0xf] %v2446
      %v2471 = vld [vmem:[%s221 + $0x14] sm:$0xff]
      %v2472 = vld [vmem:[%s221 + $0x1c] sm:$0xff]
      %v2473 = vld [vmem:[%s221 + $0x24] sm:$0xff]
      %v2474 = vld [vmem:[%s221 + $0x2c] sm:$0xff]
      %v2475 = vld [vmem:[%s221 + $0x34] sm:$0xff]
      %v2476 = vld [vmem:[%s221 + $0x3c] sm:$0xff]
      %v2477 = vld [vmem:[%s221 + $0x58] sm:$0xff]
      %v2478 = vld [vmem:[%s221 + $0x60] sm:$0xff]
      %v2479 = vld [vmem:[%s221 + $0x68] sm:$0xff]
      %v2480 = vld [vmem:[%s221 + $0x70] sm:$0xff]
      %v2481 = vld [vmem:[%s221 + $0x78] sm:$0xff]
      %v2482 = vld [vmem:[%s221 + $0x80] sm:$0xff]
      %2495 = vrot.lane.b32.xlu0 %v2471, 102
      %v2496 = vpop.permute.xlu0 %2495
      %2497 = vrot.lane.b32.xlu0 %v2472, 102
      %v2498 = vpop.permute.xlu0 %2497
      %2499 = vrot.lane.b32.xlu0 %v2473, 102
      %v2500 = vpop.permute.xlu0 %2499
      %2501 = vrot.lane.b32.xlu0 %v2474, 102
      %v2502 = vpop.permute.xlu0 %2501
      %2503 = vrot.lane.b32.xlu0 %v2475, 102
      %v2504 = vpop.permute.xlu0 %2503
      %2505 = vrot.lane.b32.xlu0 %v2476, 102
      %v2506 = vpop.permute.xlu0 %2505
      %2507 = vrot.lane.b32.xlu0 %v2477, 102
      %v2508 = vpop.permute.xlu0 %2507
      %2509 = vrot.lane.b32.xlu0 %v2478, 102
      %v2510 = vpop.permute.xlu0 %2509
      %2511 = vrot.lane.b32.xlu0 %v2479, 102
      %v2512 = vpop.permute.xlu0 %2511
      %2513 = vrot.lane.b32.xlu0 %v2480, 102
      %v2514 = vpop.permute.xlu0 %2513
      %2515 = vrot.lane.b32.xlu0 %v2481, 102
      %v2516 = vpop.permute.xlu0 %2515
      %2517 = vrot.lane.b32.xlu0 %v2482, 102
      %v2518 = vpop.permute.xlu0 %2517
      %v2519 = vrot.slane %v2496, 4
      %v2520 = vrot.slane %v2498, 4
      %v2521 = vrot.slane %v2500, 4
      %v2522 = vrot.slane %v2502, 4
      %v2523 = vrot.slane %v2504, 4
      %v2524 = vrot.slane %v2506, 4
      %v2525 = vrot.slane %v2508, 4
      %v2526 = vrot.slane %v2510, 4
      %v2527 = vrot.slane %v2512, 4
      %v2528 = vrot.slane %v2514, 4
      %v2529 = vrot.slane %v2516, 4
      %v2530 = vrot.slane %v2518, 4
      %v2531 = vsel %vm390, %v2519, %v2520
      %vm2532 = vcmask 834560
      %v2533 = vsel %vm2532, %v2496, %v2531
      %v2534 = vsel %vm390, %v2520, %v2521
      %v2535 = vsel %vm2532, %v2498, %v2534
      %v2536 = vsel %vm390, %v2521, %v2522
      %v2537 = vsel %vm2532, %v2500, %v2536
      %v2538 = vsel %vm390, %v2522, %v2523
      %v2539 = vsel %vm2532, %v2502, %v2538
      %v2540 = vsel %vm390, %v2523, %v2524
      %v2541 = vsel %vm2532, %v2504, %v2540
      %v2542 = vsel %vm2532, %v2506, %v2524
      %v2543 = vsel %vm390, %v2525, %v2526
      %v2544 = vsel %vm2532, %v2508, %v2543
      %v2545 = vsel %vm390, %v2526, %v2527
      %v2546 = vsel %vm2532, %v2510, %v2545
      %v2547 = vsel %vm390, %v2527, %v2528
      %v2548 = vsel %vm2532, %v2512, %v2547
      %v2549 = vsel %vm390, %v2528, %v2529
      %v2550 = vsel %vm2532, %v2514, %v2549
      %v2551 = vsel %vm390, %v2529, %v2530
      %v2552 = vsel %vm2532, %v2516, %v2551
      %v2553 = vsel %vm2532, %v2518, %v2530
      %2566 = vst [vmem:[#allocation3 + $0x738] sm:$0xff] %v2533
      %2567 = vst [vmem:[#allocation3 + $0x740] sm:$0xff] %v2535
      %2568 = vst [vmem:[#allocation3 + $0x748] sm:$0xff] %v2537
      %2569 = vst [vmem:[#allocation3 + $0x750] sm:$0xff] %v2539
      %2570 = vst [vmem:[#allocation3 + $0x758] sm:$0xff] %v2541
      %2571 = vst [vmem:[#allocation3 + $0x760] sm:$0xf] %v2542
      %2572 = vst [vmem:[#allocation3 + $0x764] sm:$0xff] %v2544
      %2573 = vst [vmem:[#allocation3 + $0x76c] sm:$0xff] %v2546
      %2574 = vst [vmem:[#allocation3 + $0x774] sm:$0xff] %v2548
      %2575 = vst [vmem:[#allocation3 + $0x77c] sm:$0xff] %v2550
      %2576 = vst [vmem:[#allocation3 + $0x784] sm:$0xff] %v2552
      %2577 = vst [vmem:[#allocation3 + $0x78c] sm:$0xf] %v2553
      %v2578 = vld [vmem:[%s221 + $0x14] sm:$0xff]
      %v2579 = vld [vmem:[%s221 + $0x1c] sm:$0xff]
      %v2580 = vld [vmem:[%s221 + $0x24] sm:$0xff]
      %v2581 = vld [vmem:[%s221 + $0x2c] sm:$0xff]
      %v2582 = vld [vmem:[%s221 + $0x34] sm:$0xff]
      %v2583 = vld [vmem:[%s221 + $0x3c] sm:$0xff]
      %v2584 = vld [vmem:[%s221 + $0x58] sm:$0xff]
      %v2585 = vld [vmem:[%s221 + $0x60] sm:$0xff]
      %v2586 = vld [vmem:[%s221 + $0x68] sm:$0xff]
      %v2587 = vld [vmem:[%s221 + $0x70] sm:$0xff]
      %v2588 = vld [vmem:[%s221 + $0x78] sm:$0xff]
      %v2589 = vld [vmem:[%s221 + $0x80] sm:$0xff]
      %2602 = vrot.lane.b32.xlu0 %v2578, 101
      %v2603 = vpop.permute.xlu0 %2602
      %2604 = vrot.lane.b32.xlu0 %v2579, 101
      %v2605 = vpop.permute.xlu0 %2604
      %2606 = vrot.lane.b32.xlu0 %v2580, 101
      %v2607 = vpop.permute.xlu0 %2606
      %2608 = vrot.lane.b32.xlu0 %v2581, 101
      %v2609 = vpop.permute.xlu0 %2608
      %2610 = vrot.lane.b32.xlu0 %v2582, 101
      %v2611 = vpop.permute.xlu0 %2610
      %2612 = vrot.lane.b32.xlu0 %v2583, 101
      %v2613 = vpop.permute.xlu0 %2612
      %2614 = vrot.lane.b32.xlu0 %v2584, 101
      %v2615 = vpop.permute.xlu0 %2614
      %2616 = vrot.lane.b32.xlu0 %v2585, 101
      %v2617 = vpop.permute.xlu0 %2616
      %2618 = vrot.lane.b32.xlu0 %v2586, 101
      %v2619 = vpop.permute.xlu0 %2618
      %2620 = vrot.lane.b32.xlu0 %v2587, 101
      %v2621 = vpop.permute.xlu0 %2620
      %2622 = vrot.lane.b32.xlu0 %v2588, 101
      %v2623 = vpop.permute.xlu0 %2622
      %2624 = vrot.lane.b32.xlu0 %v2589, 101
      %v2625 = vpop.permute.xlu0 %2624
      %v2626 = vrot.slane %v2603, 4
      %v2627 = vrot.slane %v2605, 4
      %v2628 = vrot.slane %v2607, 4
      %v2629 = vrot.slane %v2609, 4
      %v2630 = vrot.slane %v2611, 4
      %v2631 = vrot.slane %v2613, 4
      %v2632 = vrot.slane %v2615, 4
      %v2633 = vrot.slane %v2617, 4
      %v2634 = vrot.slane %v2619, 4
      %v2635 = vrot.slane %v2621, 4
      %v2636 = vrot.slane %v2623, 4
      %v2637 = vrot.slane %v2625, 4
      %v2638 = vsel %vm390, %v2626, %v2627
      %vm2639 = vcmask 826368
      %v2640 = vsel %vm2639, %v2603, %v2638
      %v2641 = vsel %vm390, %v2627, %v2628
      %v2642 = vsel %vm2639, %v2605, %v2641
      %v2643 = vsel %vm390, %v2628, %v2629
      %v2644 = vsel %vm2639, %v2607, %v2643
      %v2645 = vsel %vm390, %v2629, %v2630
      %v2646 = vsel %vm2639, %v2609, %v2645
      %v2647 = vsel %vm390, %v2630, %v2631
      %v2648 = vsel %vm2639, %v2611, %v2647
      %v2649 = vsel %vm2639, %v2613, %v2631
      %v2650 = vsel %vm390, %v2632, %v2633
      %v2651 = vsel %vm2639, %v2615, %v2650
      %v2652 = vsel %vm390, %v2633, %v2634
      %v2653 = vsel %vm2639, %v2617, %v2652
      %v2654 = vsel %vm390, %v2634, %v2635
      %v2655 = vsel %vm2639, %v2619, %v2654
      %v2656 = vsel %vm390, %v2635, %v2636
      %v2657 = vsel %vm2639, %v2621, %v2656
      %v2658 = vsel %vm390, %v2636, %v2637
      %v2659 = vsel %vm2639, %v2623, %v2658
      %v2660 = vsel %vm2639, %v2625, %v2637
      %2673 = vst [vmem:[#allocation3 + $0x790] sm:$0xff] %v2640
      %2674 = vst [vmem:[#allocation3 + $0x798] sm:$0xff] %v2642
      %2675 = vst [vmem:[#allocation3 + $0x7a0] sm:$0xff] %v2644
      %2676 = vst [vmem:[#allocation3 + $0x7a8] sm:$0xff] %v2646
      %2677 = vst [vmem:[#allocation3 + $0x7b0] sm:$0xff] %v2648
      %2678 = vst [vmem:[#allocation3 + $0x7b8] sm:$0xf] %v2649
      %2679 = vst [vmem:[#allocation3 + $0x7bc] sm:$0xff] %v2651
      %2680 = vst [vmem:[#allocation3 + $0x7c4] sm:$0xff] %v2653
      %2681 = vst [vmem:[#allocation3 + $0x7cc] sm:$0xff] %v2655
      %2682 = vst [vmem:[#allocation3 + $0x7d4] sm:$0xff] %v2657
      %2683 = vst [vmem:[#allocation3 + $0x7dc] sm:$0xff] %v2659
      %2684 = vst [vmem:[#allocation3 + $0x7e4] sm:$0xf] %v2660
      %v2685 = vld [vmem:[%s221 + $0x14] sm:$0xff]
      %v2686 = vld [vmem:[%s221 + $0x1c] sm:$0xff]
      %v2687 = vld [vmem:[%s221 + $0x24] sm:$0xff]
      %v2688 = vld [vmem:[%s221 + $0x2c] sm:$0xff]
      %v2689 = vld [vmem:[%s221 + $0x34] sm:$0xff]
      %v2690 = vld [vmem:[%s221 + $0x3c] sm:$0xff]
      %v2691 = vld [vmem:[%s221 + $0x58] sm:$0xff]
      %v2692 = vld [vmem:[%s221 + $0x60] sm:$0xff]
      %v2693 = vld [vmem:[%s221 + $0x68] sm:$0xff]
      %v2694 = vld [vmem:[%s221 + $0x70] sm:$0xff]
      %v2695 = vld [vmem:[%s221 + $0x78] sm:$0xff]
      %v2696 = vld [vmem:[%s221 + $0x80] sm:$0xff]
      %2709 = vrot.lane.b32.xlu0 %v2685, 100
      %v2710 = vpop.permute.xlu0 %2709
      %2711 = vrot.lane.b32.xlu0 %v2686, 100
      %v2712 = vpop.permute.xlu0 %2711
      %2713 = vrot.lane.b32.xlu0 %v2687, 100
      %v2714 = vpop.permute.xlu0 %2713
      %2715 = vrot.lane.b32.xlu0 %v2688, 100
      %v2716 = vpop.permute.xlu0 %2715
      %2717 = vrot.lane.b32.xlu0 %v2689, 100
      %v2718 = vpop.permute.xlu0 %2717
      %2719 = vrot.lane.b32.xlu0 %v2690, 100
      %v2720 = vpop.permute.xlu0 %2719
      %2721 = vrot.lane.b32.xlu0 %v2691, 100
      %v2722 = vpop.permute.xlu0 %2721
      %2723 = vrot.lane.b32.xlu0 %v2692, 100
      %v2724 = vpop.permute.xlu0 %2723
      %2725 = vrot.lane.b32.xlu0 %v2693, 100
      %v2726 = vpop.permute.xlu0 %2725
      %2727 = vrot.lane.b32.xlu0 %v2694, 100
      %v2728 = vpop.permute.xlu0 %2727
      %2729 = vrot.lane.b32.xlu0 %v2695, 100
      %v2730 = vpop.permute.xlu0 %2729
      %2731 = vrot.lane.b32.xlu0 %v2696, 100
      %v2732 = vpop.permute.xlu0 %2731
      %v2733 = vrot.slane %v2710, 4
      %v2734 = vrot.slane %v2712, 4
      %v2735 = vrot.slane %v2714, 4
      %v2736 = vrot.slane %v2716, 4
      %v2737 = vrot.slane %v2718, 4
      %v2738 = vrot.slane %v2720, 4
      %v2739 = vrot.slane %v2722, 4
      %v2740 = vrot.slane %v2724, 4
      %v2741 = vrot.slane %v2726, 4
      %v2742 = vrot.slane %v2728, 4
      %v2743 = vrot.slane %v2730, 4
      %v2744 = vrot.slane %v2732, 4
      %v2745 = vsel %vm390, %v2733, %v2734
      %vm2746 = vcmask 818176
      %v2747 = vsel %vm2746, %v2710, %v2745
      %v2748 = vsel %vm390, %v2734, %v2735
      %v2749 = vsel %vm2746, %v2712, %v2748
      %v2750 = vsel %vm390, %v2735, %v2736
      %v2751 = vsel %vm2746, %v2714, %v2750
      %v2752 = vsel %vm390, %v2736, %v2737
      %v2753 = vsel %vm2746, %v2716, %v2752
      %v2754 = vsel %vm390, %v2737, %v2738
      %v2755 = vsel %vm2746, %v2718, %v2754
      %v2756 = vsel %vm2746, %v2720, %v2738
      %v2757 = vsel %vm390, %v2739, %v2740
      %v2758 = vsel %vm2746, %v2722, %v2757
      %v2759 = vsel %vm390, %v2740, %v2741
      %v2760 = vsel %vm2746, %v2724, %v2759
      %v2761 = vsel %vm390, %v2741, %v2742
      %v2762 = vsel %vm2746, %v2726, %v2761
      %v2763 = vsel %vm390, %v2742, %v2743
      %v2764 = vsel %vm2746, %v2728, %v2763
      %v2765 = vsel %vm390, %v2743, %v2744
      %v2766 = vsel %vm2746, %v2730, %v2765
      %v2767 = vsel %vm2746, %v2732, %v2744
      %2780 = vst [vmem:[#allocation3 + $0x7e8] sm:$0xff] %v2747
      %2781 = vst [vmem:[#allocation3 + $0x7f0] sm:$0xff] %v2749
      %2782 = vst [vmem:[#allocation3 + $0x7f8] sm:$0xff] %v2751
      %2783 = vst [vmem:[#allocation3 + $0x800] sm:$0xff] %v2753
      %2784 = vst [vmem:[#allocation3 + $0x808] sm:$0xff] %v2755
      %2785 = vst [vmem:[#allocation3 + $0x810] sm:$0xf] %v2756
      %2786 = vst [vmem:[#allocation3 + $0x814] sm:$0xff] %v2758
      %2787 = vst [vmem:[#allocation3 + $0x81c] sm:$0xff] %v2760
      %2788 = vst [vmem:[#allocation3 + $0x824] sm:$0xff] %v2762
      %2789 = vst [vmem:[#allocation3 + $0x82c] sm:$0xff] %v2764
      %2790 = vst [vmem:[#allocation3 + $0x834] sm:$0xff] %v2766
      %2791 = vst [vmem:[#allocation3 + $0x83c] sm:$0xf] %v2767
      %v2792 = vld [vmem:[%s221 + $0x14] sm:$0xff]
      %v2793 = vld [vmem:[%s221 + $0x1c] sm:$0xff]
      %v2794 = vld [vmem:[%s221 + $0x24] sm:$0xff]
      %v2795 = vld [vmem:[%s221 + $0x2c] sm:$0xff]
      %v2796 = vld [vmem:[%s221 + $0x34] sm:$0xff]
      %v2797 = vld [vmem:[%s221 + $0x3c] sm:$0xff]
      %v2798 = vld [vmem:[%s221 + $0x58] sm:$0xff]
      %v2799 = vld [vmem:[%s221 + $0x60] sm:$0xff]
      %v2800 = vld [vmem:[%s221 + $0x68] sm:$0xff]
      %v2801 = vld [vmem:[%s221 + $0x70] sm:$0xff]
      %v2802 = vld [vmem:[%s221 + $0x78] sm:$0xff]
      %v2803 = vld [vmem:[%s221 + $0x80] sm:$0xff]
      %2816 = vrot.lane.b32.xlu0 %v2792, 84
      %v2817 = vpop.permute.xlu0 %2816
      %2818 = vrot.lane.b32.xlu0 %v2793, 84
      %v2819 = vpop.permute.xlu0 %2818
      %2820 = vrot.lane.b32.xlu0 %v2794, 84
      %v2821 = vpop.permute.xlu0 %2820
      %2822 = vrot.lane.b32.xlu0 %v2795, 84
      %v2823 = vpop.permute.xlu0 %2822
      %2824 = vrot.lane.b32.xlu0 %v2796, 84
      %v2825 = vpop.permute.xlu0 %2824
      %2826 = vrot.lane.b32.xlu0 %v2797, 84
      %v2827 = vpop.permute.xlu0 %2826
      %2828 = vrot.lane.b32.xlu0 %v2798, 84
      %v2829 = vpop.permute.xlu0 %2828
      %2830 = vrot.lane.b32.xlu0 %v2799, 84
      %v2831 = vpop.permute.xlu0 %2830
      %2832 = vrot.lane.b32.xlu0 %v2800, 84
      %v2833 = vpop.permute.xlu0 %2832
      %2834 = vrot.lane.b32.xlu0 %v2801, 84
      %v2835 = vpop.permute.xlu0 %2834
      %2836 = vrot.lane.b32.xlu0 %v2802, 84
      %v2837 = vpop.permute.xlu0 %2836
      %2838 = vrot.lane.b32.xlu0 %v2803, 84
      %v2839 = vpop.permute.xlu0 %2838
      %v2840 = vrot.slane %v2817, 4
      %v2841 = vrot.slane %v2819, 4
      %v2842 = vrot.slane %v2821, 4
      %v2843 = vrot.slane %v2823, 4
      %v2844 = vrot.slane %v2825, 4
      %v2845 = vrot.slane %v2827, 4
      %v2846 = vrot.slane %v2829, 4
      %v2847 = vrot.slane %v2831, 4
      %v2848 = vrot.slane %v2833, 4
      %v2849 = vrot.slane %v2835, 4
      %v2850 = vrot.slane %v2837, 4
      %v2851 = vrot.slane %v2839, 4
      %v2852 = vsel %vm390, %v2840, %v2841
      %vm2853 = vcmask 687104
      %v2854 = vsel %vm2853, %v2817, %v2852
      %v2855 = vsel %vm390, %v2841, %v2842
      %v2856 = vsel %vm2853, %v2819, %v2855
      %v2857 = vsel %vm390, %v2842, %v2843
      %v2858 = vsel %vm2853, %v2821, %v2857
      %v2859 = vsel %vm390, %v2843, %v2844
      %v2860 = vsel %vm2853, %v2823, %v2859
      %v2861 = vsel %vm390, %v2844, %v2845
      %v2862 = vsel %vm2853, %v2825, %v2861
      %v2863 = vsel %vm2853, %v2827, %v2845
      %v2864 = vsel %vm390, %v2846, %v2847
      %v2865 = vsel %vm2853, %v2829, %v2864
      %v2866 = vsel %vm390, %v2847, %v2848
      %v2867 = vsel %vm2853, %v2831, %v2866
      %v2868 = vsel %vm390, %v2848, %v2849
      %v2869 = vsel %vm2853, %v2833, %v2868
      %v2870 = vsel %vm390, %v2849, %v2850
      %v2871 = vsel %vm2853, %v2835, %v2870
      %v2872 = vsel %vm390, %v2850, %v2851
      %v2873 = vsel %vm2853, %v2837, %v2872
      %v2874 = vsel %vm2853, %v2839, %v2851
      %2887 = vst [vmem:[#allocation3 + $0x840] sm:$0xff] %v2854
      %2888 = vst [vmem:[#allocation3 + $0x848] sm:$0xff] %v2856
      %2889 = vst [vmem:[#allocation3 + $0x850] sm:$0xff] %v2858
      %2890 = vst [vmem:[#allocation3 + $0x858] sm:$0xff] %v2860
      %2891 = vst [vmem:[#allocation3 + $0x860] sm:$0xff] %v2862
      %2892 = vst [vmem:[#allocation3 + $0x868] sm:$0xf] %v2863
      %2893 = vst [vmem:[#allocation3 + $0x86c] sm:$0xff] %v2865
      %2894 = vst [vmem:[#allocation3 + $0x874] sm:$0xff] %v2867
      %2895 = vst [vmem:[#allocation3 + $0x87c] sm:$0xff] %v2869
      %2896 = vst [vmem:[#allocation3 + $0x884] sm:$0xff] %v2871
      %2897 = vst [vmem:[#allocation3 + $0x88c] sm:$0xff] %v2873
      %2898 = vst [vmem:[#allocation3 + $0x894] sm:$0xf] %v2874
      %v2899 = vld [vmem:[%s221 + $0x14] sm:$0xff]
      %v2900 = vld [vmem:[%s221 + $0x1c] sm:$0xff]
      %v2901 = vld [vmem:[%s221 + $0x24] sm:$0xff]
      %v2902 = vld [vmem:[%s221 + $0x2c] sm:$0xff]
      %v2903 = vld [vmem:[%s221 + $0x34] sm:$0xff]
      %v2904 = vld [vmem:[%s221 + $0x3c] sm:$0xff]
      %v2905 = vld [vmem:[%s221 + $0x58] sm:$0xff]
      %v2906 = vld [vmem:[%s221 + $0x60] sm:$0xff]
      %v2907 = vld [vmem:[%s221 + $0x68] sm:$0xff]
      %v2908 = vld [vmem:[%s221 + $0x70] sm:$0xff]
      %v2909 = vld [vmem:[%s221 + $0x78] sm:$0xff]
      %v2910 = vld [vmem:[%s221 + $0x80] sm:$0xff]
      %2923 = vrot.lane.b32.xlu0 %v2899, 83
      %v2924 = vpop.permute.xlu0 %2923
      %2925 = vrot.lane.b32.xlu0 %v2900, 83
      %v2926 = vpop.permute.xlu0 %2925
      %2927 = vrot.lane.b32.xlu0 %v2901, 83
      %v2928 = vpop.permute.xlu0 %2927
      %2929 = vrot.lane.b32.xlu0 %v2902, 83
      %v2930 = vpop.permute.xlu0 %2929
      %2931 = vrot.lane.b32.xlu0 %v2903, 83
      %v2932 = vpop.permute.xlu0 %2931
      %2933 = vrot.lane.b32.xlu0 %v2904, 83
      %v2934 = vpop.permute.xlu0 %2933
      %2935 = vrot.lane.b32.xlu0 %v2905, 83
      %v2936 = vpop.permute.xlu0 %2935
      %2937 = vrot.lane.b32.xlu0 %v2906, 83
      %v2938 = vpop.permute.xlu0 %2937
      %2939 = vrot.lane.b32.xlu0 %v2907, 83
      %v2940 = vpop.permute.xlu0 %2939
      %2941 = vrot.lane.b32.xlu0 %v2908, 83
      %v2942 = vpop.permute.xlu0 %2941
      %2943 = vrot.lane.b32.xlu0 %v2909, 83
      %v2944 = vpop.permute.xlu0 %2943
      %2945 = vrot.lane.b32.xlu0 %v2910, 83
      %v2946 = vpop.permute.xlu0 %2945
      %v2947 = vrot.slane %v2924, 4
      %v2948 = vrot.slane %v2926, 4
      %v2949 = vrot.slane %v2928, 4
      %v2950 = vrot.slane %v2930, 4
      %v2951 = vrot.slane %v2932, 4
      %v2952 = vrot.slane %v2934, 4
      %v2953 = vrot.slane %v2936, 4
      %v2954 = vrot.slane %v2938, 4
      %v2955 = vrot.slane %v2940, 4
      %v2956 = vrot.slane %v2942, 4
      %v2957 = vrot.slane %v2944, 4
      %v2958 = vrot.slane %v2946, 4
      %v2959 = vsel %vm390, %v2947, %v2948
      %vm2960 = vcmask 678912
      %v2961 = vsel %vm2960, %v2924, %v2959
      %v2962 = vsel %vm390, %v2948, %v2949
      %v2963 = vsel %vm2960, %v2926, %v2962
      %v2964 = vsel %vm390, %v2949, %v2950
      %v2965 = vsel %vm2960, %v2928, %v2964
      %v2966 = vsel %vm390, %v2950, %v2951
      %v2967 = vsel %vm2960, %v2930, %v2966
      %v2968 = vsel %vm390, %v2951, %v2952
      %v2969 = vsel %vm2960, %v2932, %v2968
      %v2970 = vsel %vm2960, %v2934, %v2952
      %v2971 = vsel %vm390, %v2953, %v2954
      %v2972 = vsel %vm2960, %v2936, %v2971
      %v2973 = vsel %vm390, %v2954, %v2955
      %v2974 = vsel %vm2960, %v2938, %v2973
      %v2975 = vsel %vm390, %v2955, %v2956
      %v2976 = vsel %vm2960, %v2940, %v2975
      %v2977 = vsel %vm390, %v2956, %v2957
      %v2978 = vsel %vm2960, %v2942, %v2977
      %v2979 = vsel %vm390, %v2957, %v2958
      %v2980 = vsel %vm2960, %v2944, %v2979
      %v2981 = vsel %vm2960, %v2946, %v2958
      %2994 = vst [vmem:[#allocation3 + $0x898] sm:$0xff] %v2961
      %2995 = vst [vmem:[#allocation3 + $0x8a0] sm:$0xff] %v2963
      %2996 = vst [vmem:[#allocation3 + $0x8a8] sm:$0xff] %v2965
      %2997 = vst [vmem:[#allocation3 + $0x8b0] sm:$0xff] %v2967
      %2998 = vst [vmem:[#allocation3 + $0x8b8] sm:$0xff] %v2969
      %2999 = vst [vmem:[#allocation3 + $0x8c0] sm:$0xf] %v2970
      %3000 = vst [vmem:[#allocation3 + $0x8c4] sm:$0xff] %v2972
      %3001 = vst [vmem:[#allocation3 + $0x8cc] sm:$0xff] %v2974
      %3002 = vst [vmem:[#allocation3 + $0x8d4] sm:$0xff] %v2976
      %3003 = vst [vmem:[#allocation3 + $0x8dc] sm:$0xff] %v2978
      %3004 = vst [vmem:[#allocation3 + $0x8e4] sm:$0xff] %v2980
      %3005 = vst [vmem:[#allocation3 + $0x8ec] sm:$0xf] %v2981
      %v3006 = vld [vmem:[%s221 + $0x14] sm:$0xff]
      %v3007 = vld [vmem:[%s221 + $0x1c] sm:$0xff]
      %v3008 = vld [vmem:[%s221 + $0x24] sm:$0xff]
      %v3009 = vld [vmem:[%s221 + $0x2c] sm:$0xff]
      %v3010 = vld [vmem:[%s221 + $0x34] sm:$0xff]
      %v3011 = vld [vmem:[%s221 + $0x3c] sm:$0xff]
      %v3012 = vld [vmem:[%s221 + $0x58] sm:$0xff]
      %v3013 = vld [vmem:[%s221 + $0x60] sm:$0xff]
      %v3014 = vld [vmem:[%s221 + $0x68] sm:$0xff]
      %v3015 = vld [vmem:[%s221 + $0x70] sm:$0xff]
      %v3016 = vld [vmem:[%s221 + $0x78] sm:$0xff]
      %v3017 = vld [vmem:[%s221 + $0x80] sm:$0xff]
      %3030 = vrot.lane.b32.xlu0 %v3006, 82
      %v3031 = vpop.permute.xlu0 %3030
      %3032 = vrot.lane.b32.xlu0 %v3007, 82
      %v3033 = vpop.permute.xlu0 %3032
      %3034 = vrot.lane.b32.xlu0 %v3008, 82
      %v3035 = vpop.permute.xlu0 %3034
      %3036 = vrot.lane.b32.xlu0 %v3009, 82
      %v3037 = vpop.permute.xlu0 %3036
      %3038 = vrot.lane.b32.xlu0 %v3010, 82
      %v3039 = vpop.permute.xlu0 %3038
      %3040 = vrot.lane.b32.xlu0 %v3011, 82
      %v3041 = vpop.permute.xlu0 %3040
      %3042 = vrot.lane.b32.xlu0 %v3012, 82
      %v3043 = vpop.permute.xlu0 %3042
      %3044 = vrot.lane.b32.xlu0 %v3013, 82
      %v3045 = vpop.permute.xlu0 %3044
      %3046 = vrot.lane.b32.xlu0 %v3014, 82
      %v3047 = vpop.permute.xlu0 %3046
      %3048 = vrot.lane.b32.xlu0 %v3015, 82
      %v3049 = vpop.permute.xlu0 %3048
      %3050 = vrot.lane.b32.xlu0 %v3016, 82
      %v3051 = vpop.permute.xlu0 %3050
      %3052 = vrot.lane.b32.xlu0 %v3017, 82
      %v3053 = vpop.permute.xlu0 %3052
      %v3054 = vrot.slane %v3031, 4
      %v3055 = vrot.slane %v3033, 4
      %v3056 = vrot.slane %v3035, 4
      %v3057 = vrot.slane %v3037, 4
      %v3058 = vrot.slane %v3039, 4
      %v3059 = vrot.slane %v3041, 4
      %v3060 = vrot.slane %v3043, 4
      %v3061 = vrot.slane %v3045, 4
      %v3062 = vrot.slane %v3047, 4
      %v3063 = vrot.slane %v3049, 4
      %v3064 = vrot.slane %v3051, 4
      %v3065 = vrot.slane %v3053, 4
      %v3066 = vsel %vm390, %v3054, %v3055
      %vm3067 = vcmask 670720
      %v3068 = vsel %vm3067, %v3031, %v3066
      %v3069 = vsel %vm390, %v3055, %v3056
      %v3070 = vsel %vm3067, %v3033, %v3069
      %v3071 = vsel %vm390, %v3056, %v3057
      %v3072 = vsel %vm3067, %v3035, %v3071
      %v3073 = vsel %vm390, %v3057, %v3058
      %v3074 = vsel %vm3067, %v3037, %v3073
      %v3075 = vsel %vm390, %v3058, %v3059
      %v3076 = vsel %vm3067, %v3039, %v3075
      %v3077 = vsel %vm3067, %v3041, %v3059
      %v3078 = vsel %vm390, %v3060, %v3061
      %v3079 = vsel %vm3067, %v3043, %v3078
      %v3080 = vsel %vm390, %v3061, %v3062
      %v3081 = vsel %vm3067, %v3045, %v3080
      %v3082 = vsel %vm390, %v3062, %v3063
      %v3083 = vsel %vm3067, %v3047, %v3082
      %v3084 = vsel %vm390, %v3063, %v3064
      %v3085 = vsel %vm3067, %v3049, %v3084
      %v3086 = vsel %vm390, %v3064, %v3065
      %v3087 = vsel %vm3067, %v3051, %v3086
      %v3088 = vsel %vm3067, %v3053, %v3065
      %3101 = vst [vmem:[#allocation3 + $0x8f0] sm:$0xff] %v3068
      %3102 = vst [vmem:[#allocation3 + $0x8f8] sm:$0xff] %v3070
      %3103 = vst [vmem:[#allocation3 + $0x900] sm:$0xff] %v3072
      %3104 = vst [vmem:[#allocation3 + $0x908] sm:$0xff] %v3074
      %3105 = vst [vmem:[#allocation3 + $0x910] sm:$0xff] %v3076
      %3106 = vst [vmem:[#allocation3 + $0x918] sm:$0xf] %v3077
      %3107 = vst [vmem:[#allocation3 + $0x91c] sm:$0xff] %v3079
      %3108 = vst [vmem:[#allocation3 + $0x924] sm:$0xff] %v3081
      %3109 = vst [vmem:[#allocation3 + $0x92c] sm:$0xff] %v3083
      %3110 = vst [vmem:[#allocation3 + $0x934] sm:$0xff] %v3085
      %3111 = vst [vmem:[#allocation3 + $0x93c] sm:$0xff] %v3087
      %3112 = vst [vmem:[#allocation3 + $0x944] sm:$0xf] %v3088
      %v3113 = vld [vmem:[%s1] sm:$0xff]
      %v3114 = vld [vmem:[%s1 + $0x8] sm:$0xff]
      %v3115 = vld [vmem:[#allocation3] sm:$0xff]
      %v3116 = vld [vmem:[#allocation3 + $0x8] sm:$0xff]
      %v3117 = vld [vmem:[#allocation3 + $0x10] sm:$0xff]
      %v3118 = vld [vmem:[#allocation3 + $0x18] sm:$0xff]
      %v3119 = vld [vmem:[#allocation3 + $0x20] sm:$0xff]
      %v3120 = vld [vmem:[#allocation3 + $0x28] sm:$0xf]
      %v3121 = vld [vmem:[#allocation3 + $0x2c] sm:$0xff]
      %v3122 = vld [vmem:[#allocation3 + $0x34] sm:$0xff]
      %v3123 = vld [vmem:[#allocation3 + $0x3c] sm:$0xff]
      %v3124 = vld [vmem:[#allocation3 + $0x44] sm:$0xff]
      %v3125 = vld [vmem:[#allocation3 + $0x4c] sm:$0xff]
      %v3126 = vld [vmem:[#allocation3 + $0x54] sm:$0xf]
      %v3127 = vld [vmem:[#allocation3 + $0x58] sm:$0xff]
      %v3128 = vld [vmem:[#allocation3 + $0x60] sm:$0xff]
      %v3129 = vld [vmem:[#allocation3 + $0x68] sm:$0xff]
      %v3130 = vld [vmem:[#allocation3 + $0x70] sm:$0xff]
      %v3131 = vld [vmem:[#allocation3 + $0x78] sm:$0xff]
      %v3132 = vld [vmem:[#allocation3 + $0x80] sm:$0xf]
      %v3133 = vld [vmem:[#allocation3 + $0x84] sm:$0xff]
      %v3134 = vld [vmem:[#allocation3 + $0x8c] sm:$0xff]
      %v3135 = vld [vmem:[#allocation3 + $0x94] sm:$0xff]
      %v3136 = vld [vmem:[#allocation3 + $0x9c] sm:$0xff]
      %v3137 = vld [vmem:[#allocation3 + $0xa4] sm:$0xff]
      %v3138 = vld [vmem:[#allocation3 + $0xac] sm:$0xf]
      %v3139 = vld [vmem:[#allocation3 + $0xb0] sm:$0xff]
      %v3140 = vld [vmem:[#allocation3 + $0xb8] sm:$0xff]
      %v3141 = vld [vmem:[#allocation3 + $0xc0] sm:$0xff]
      %v3142 = vld [vmem:[#allocation3 + $0xc8] sm:$0xff]
      %v3143 = vld [vmem:[#allocation3 + $0xd0] sm:$0xff]
      %v3144 = vld [vmem:[#allocation3 + $0xd8] sm:$0xf]
      %v3145 = vld [vmem:[#allocation3 + $0xdc] sm:$0xff]
      %v3146 = vld [vmem:[#allocation3 + $0xe4] sm:$0xff]
      %v3147 = vld [vmem:[#allocation3 + $0xec] sm:$0xff]
      %v3148 = vld [vmem:[#allocation3 + $0xf4] sm:$0xff]
      %v3149 = vld [vmem:[#allocation3 + $0xfc] sm:$0xff]
      %v3150 = vld [vmem:[#allocation3 + $0x104] sm:$0xf]
      %v3151 = vld [vmem:[#allocation3 + $0x108] sm:$0xff]
      %v3152 = vld [vmem:[#allocation3 + $0x110] sm:$0xff]
      %v3153 = vld [vmem:[#allocation3 + $0x118] sm:$0xff]
      %v3154 = vld [vmem:[#allocation3 + $0x120] sm:$0xff]
      %v3155 = vld [vmem:[#allocation3 + $0x128] sm:$0xff]
      %v3156 = vld [vmem:[#allocation3 + $0x130] sm:$0xf]
      %v3157 = vld [vmem:[#allocation3 + $0x134] sm:$0xff]
      %v3158 = vld [vmem:[#allocation3 + $0x13c] sm:$0xff]
      %v3159 = vld [vmem:[#allocation3 + $0x144] sm:$0xff]
      %v3160 = vld [vmem:[#allocation3 + $0x14c] sm:$0xff]
      %v3161 = vld [vmem:[#allocation3 + $0x154] sm:$0xff]
      %v3162 = vld [vmem:[#allocation3 + $0x15c] sm:$0xf]
      %v3163 = vld [vmem:[#allocation3 + $0x160] sm:$0xff]
      %v3164 = vld [vmem:[#allocation3 + $0x168] sm:$0xff]
      %v3165 = vld [vmem:[#allocation3 + $0x170] sm:$0xff]
      %v3166 = vld [vmem:[#allocation3 + $0x178] sm:$0xff]
      %v3167 = vld [vmem:[#allocation3 + $0x180] sm:$0xff]
      %v3168 = vld [vmem:[#allocation3 + $0x188] sm:$0xf]
      %v3169 = vld [vmem:[#allocation3 + $0x18c] sm:$0xff]
      %v3170 = vld [vmem:[#allocation3 + $0x194] sm:$0xff]
      %v3171 = vld [vmem:[#allocation3 + $0x19c] sm:$0xff]
      %v3172 = vld [vmem:[#allocation3 + $0x1a4] sm:$0xff]
      %v3173 = vld [vmem:[#allocation3 + $0x1ac] sm:$0xff]
      %v3174 = vld [vmem:[#allocation3 + $0x1b4] sm:$0xf]
      %v3175 = vld [vmem:[#allocation3 + $0x1b8] sm:$0xff]
      %v3176 = vld [vmem:[#allocation3 + $0x1c0] sm:$0xff]
      %v3177 = vld [vmem:[#allocation3 + $0x1c8] sm:$0xff]
      %v3178 = vld [vmem:[#allocation3 + $0x1d0] sm:$0xff]
      %v3179 = vld [vmem:[#allocation3 + $0x1d8] sm:$0xff]
      %v3180 = vld [vmem:[#allocation3 + $0x1e0] sm:$0xf]
      %v3181 = vld [vmem:[#allocation3 + $0x1e4] sm:$0xff]
      %v3182 = vld [vmem:[#allocation3 + $0x1ec] sm:$0xff]
      %v3183 = vld [vmem:[#allocation3 + $0x1f4] sm:$0xff]
      %v3184 = vld [vmem:[#allocation3 + $0x1fc] sm:$0xff]
      %v3185 = vld [vmem:[#allocation3 + $0x204] sm:$0xff]
      %v3186 = vld [vmem:[#allocation3 + $0x20c] sm:$0xf]
      %v3187 = vld [vmem:[#allocation3 + $0x210] sm:$0xff]
      %v3188 = vld [vmem:[#allocation3 + $0x218] sm:$0xff]
      %v3189 = vld [vmem:[#allocation3 + $0x220] sm:$0xff]
      %v3190 = vld [vmem:[#allocation3 + $0x228] sm:$0xff]
      %v3191 = vld [vmem:[#allocation3 + $0x230] sm:$0xff]
      %v3192 = vld [vmem:[#allocation3 + $0x238] sm:$0xf]
      %v3193 = vld [vmem:[#allocation3 + $0x23c] sm:$0xff]
      %v3194 = vld [vmem:[#allocation3 + $0x244] sm:$0xff]
      %v3195 = vld [vmem:[#allocation3 + $0x24c] sm:$0xff]
      %v3196 = vld [vmem:[#allocation3 + $0x254] sm:$0xff]
      %v3197 = vld [vmem:[#allocation3 + $0x25c] sm:$0xff]
      %v3198 = vld [vmem:[#allocation3 + $0x264] sm:$0xf]
      %v3199 = vld [vmem:[#allocation3 + $0x268] sm:$0xff]
      %v3200 = vld [vmem:[#allocation3 + $0x270] sm:$0xff]
      %v3201 = vld [vmem:[#allocation3 + $0x278] sm:$0xff]
      %v3202 = vld [vmem:[#allocation3 + $0x280] sm:$0xff]
      %v3203 = vld [vmem:[#allocation3 + $0x288] sm:$0xff]
      %v3204 = vld [vmem:[#allocation3 + $0x290] sm:$0xf]
      %v3205 = vld [vmem:[#allocation3 + $0x294] sm:$0xff]
      %v3206 = vld [vmem:[#allocation3 + $0x29c] sm:$0xff]
      %v3207 = vld [vmem:[#allocation3 + $0x2a4] sm:$0xff]
      %v3208 = vld [vmem:[#allocation3 + $0x2ac] sm:$0xff]
      %v3209 = vld [vmem:[#allocation3 + $0x2b4] sm:$0xff]
      %v3210 = vld [vmem:[#allocation3 + $0x2bc] sm:$0xf]
      %v3211 = vld [vmem:[#allocation3 + $0x2c0] sm:$0xff]
      %v3212 = vld [vmem:[#allocation3 + $0x2c8] sm:$0xff]
      %v3213 = vld [vmem:[#allocation3 + $0x2d0] sm:$0xff]
      %v3214 = vld [vmem:[#allocation3 + $0x2d8] sm:$0xff]
      %v3215 = vld [vmem:[#allocation3 + $0x2e0] sm:$0xff]
      %v3216 = vld [vmem:[#allocation3 + $0x2e8] sm:$0xf]
      %v3217 = vld [vmem:[#allocation3 + $0x2ec] sm:$0xff]
      %v3218 = vld [vmem:[#allocation3 + $0x2f4] sm:$0xff]
      %v3219 = vld [vmem:[#allocation3 + $0x2fc] sm:$0xff]
      %v3220 = vld [vmem:[#allocation3 + $0x304] sm:$0xff]
      %v3221 = vld [vmem:[#allocation3 + $0x30c] sm:$0xff]
      %v3222 = vld [vmem:[#allocation3 + $0x314] sm:$0xf]
      %v3223 = vld [vmem:[#allocation3 + $0x318] sm:$0xff]
      %v3224 = vld [vmem:[#allocation3 + $0x320] sm:$0xff]
      %v3225 = vld [vmem:[#allocation3 + $0x328] sm:$0xff]
      %v3226 = vld [vmem:[#allocation3 + $0x330] sm:$0xff]
      %v3227 = vld [vmem:[#allocation3 + $0x338] sm:$0xff]
      %v3228 = vld [vmem:[#allocation3 + $0x340] sm:$0xf]
      %v3229 = vld [vmem:[#allocation3 + $0x344] sm:$0xff]
      %v3230 = vld [vmem:[#allocation3 + $0x34c] sm:$0xff]
      %v3231 = vld [vmem:[#allocation3 + $0x354] sm:$0xff]
      %v3232 = vld [vmem:[#allocation3 + $0x35c] sm:$0xff]
      %v3233 = vld [vmem:[#allocation3 + $0x364] sm:$0xff]
      %v3234 = vld [vmem:[#allocation3 + $0x36c] sm:$0xf]
      %v3235 = vld [vmem:[#allocation3 + $0x370] sm:$0xff]
      %v3236 = vld [vmem:[#allocation3 + $0x378] sm:$0xff]
      %v3237 = vld [vmem:[#allocation3 + $0x380] sm:$0xff]
      %v3238 = vld [vmem:[#allocation3 + $0x388] sm:$0xff]
      %v3239 = vld [vmem:[#allocation3 + $0x390] sm:$0xff]
      %v3240 = vld [vmem:[#allocation3 + $0x398] sm:$0xf]
      %v3241 = vld [vmem:[#allocation3 + $0x39c] sm:$0xff]
      %v3242 = vld [vmem:[#allocation3 + $0x3a4] sm:$0xff]
      %v3243 = vld [vmem:[#allocation3 + $0x3ac] sm:$0xff]
      %v3244 = vld [vmem:[#allocation3 + $0x3b4] sm:$0xff]
      %v3245 = vld [vmem:[#allocation3 + $0x3bc] sm:$0xff]
      %v3246 = vld [vmem:[#allocation3 + $0x3c4] sm:$0xf]
      %v3247 = vld [vmem:[#allocation3 + $0x3c8] sm:$0xff]
      %v3248 = vld [vmem:[#allocation3 + $0x3d0] sm:$0xff]
      %v3249 = vld [vmem:[#allocation3 + $0x3d8] sm:$0xff]
      %v3250 = vld [vmem:[#allocation3 + $0x3e0] sm:$0xff]
      %v3251 = vld [vmem:[#allocation3 + $0x3e8] sm:$0xff]
      %v3252 = vld [vmem:[#allocation3 + $0x3f0] sm:$0xf]
      %v3253 = vld [vmem:[#allocation3 + $0x3f4] sm:$0xff]
      %v3254 = vld [vmem:[#allocation3 + $0x3fc] sm:$0xff]
      %v3255 = vld [vmem:[#allocation3 + $0x404] sm:$0xff]
      %v3256 = vld [vmem:[#allocation3 + $0x40c] sm:$0xff]
      %v3257 = vld [vmem:[#allocation3 + $0x414] sm:$0xff]
      %v3258 = vld [vmem:[#allocation3 + $0x41c] sm:$0xf]
      %v3259 = vld [vmem:[#allocation3 + $0x420] sm:$0xff]
      %v3260 = vld [vmem:[#allocation3 + $0x428] sm:$0xff]
      %v3261 = vld [vmem:[#allocation3 + $0x430] sm:$0xff]
      %v3262 = vld [vmem:[#allocation3 + $0x438] sm:$0xff]
      %v3263 = vld [vmem:[#allocation3 + $0x440] sm:$0xff]
      %v3264 = vld [vmem:[#allocation3 + $0x448] sm:$0xf]
      %v3265 = vld [vmem:[#allocation3 + $0x44c] sm:$0xff]
      %v3266 = vld [vmem:[#allocation3 + $0x454] sm:$0xff]
      %v3267 = vld [vmem:[#allocation3 + $0x45c] sm:$0xff]
      %v3268 = vld [vmem:[#allocation3 + $0x464] sm:$0xff]
      %v3269 = vld [vmem:[#allocation3 + $0x46c] sm:$0xff]
      %v3270 = vld [vmem:[#allocation3 + $0x474] sm:$0xf]
      %v3271 = vld [vmem:[#allocation3 + $0x478] sm:$0xff]
      %v3272 = vld [vmem:[#allocation3 + $0x480] sm:$0xff]
      %v3273 = vld [vmem:[#allocation3 + $0x488] sm:$0xff]
      %v3274 = vld [vmem:[#allocation3 + $0x490] sm:$0xff]
      %v3275 = vld [vmem:[#allocation3 + $0x498] sm:$0xff]
      %v3276 = vld [vmem:[#allocation3 + $0x4a0] sm:$0xf]
      %v3277 = vld [vmem:[#allocation3 + $0x4a4] sm:$0xff]
      %v3278 = vld [vmem:[#allocation3 + $0x4ac] sm:$0xff]
      %v3279 = vld [vmem:[#allocation3 + $0x4b4] sm:$0xff]
      %v3280 = vld [vmem:[#allocation3 + $0x4bc] sm:$0xff]
      %v3281 = vld [vmem:[#allocation3 + $0x4c4] sm:$0xff]
      %v3282 = vld [vmem:[#allocation3 + $0x4cc] sm:$0xf]
      %v3283 = vld [vmem:[#allocation3 + $0x4d0] sm:$0xff]
      %v3284 = vld [vmem:[#allocation3 + $0x4d8] sm:$0xff]
      %v3285 = vld [vmem:[#allocation3 + $0x4e0] sm:$0xff]
      %v3286 = vld [vmem:[#allocation3 + $0x4e8] sm:$0xff]
      %v3287 = vld [vmem:[#allocation3 + $0x4f0] sm:$0xff]
      %v3288 = vld [vmem:[#allocation3 + $0x4f8] sm:$0xf]
      %v3289 = vld [vmem:[#allocation3 + $0x4fc] sm:$0xff]
      %v3290 = vld [vmem:[#allocation3 + $0x504] sm:$0xff]
      %v3291 = vld [vmem:[#allocation3 + $0x50c] sm:$0xff]
      %v3292 = vld [vmem:[#allocation3 + $0x514] sm:$0xff]
      %v3293 = vld [vmem:[#allocation3 + $0x51c] sm:$0xff]
      %v3294 = vld [vmem:[#allocation3 + $0x524] sm:$0xf]
      %v3295 = vld [vmem:[#allocation3 + $0x528] sm:$0xff]
      %v3296 = vld [vmem:[#allocation3 + $0x530] sm:$0xff]
      %v3297 = vld [vmem:[#allocation3 + $0x538] sm:$0xff]
      %v3298 = vld [vmem:[#allocation3 + $0x540] sm:$0xff]
      %v3299 = vld [vmem:[#allocation3 + $0x548] sm:$0xff]
      %v3300 = vld [vmem:[#allocation3 + $0x550] sm:$0xf]
      %v3301 = vld [vmem:[#allocation3 + $0x554] sm:$0xff]
      %v3302 = vld [vmem:[#allocation3 + $0x55c] sm:$0xff]
      %v3303 = vld [vmem:[#allocation3 + $0x564] sm:$0xff]
      %v3304 = vld [vmem:[#allocation3 + $0x56c] sm:$0xff]
      %v3305 = vld [vmem:[#allocation3 + $0x574] sm:$0xff]
      %v3306 = vld [vmem:[#allocation3 + $0x57c] sm:$0xf]
      %v3307 = vld [vmem:[#allocation3 + $0x580] sm:$0xff]
      %v3308 = vld [vmem:[#allocation3 + $0x588] sm:$0xff]
      %v3309 = vld [vmem:[#allocation3 + $0x590] sm:$0xff]
      %v3310 = vld [vmem:[#allocation3 + $0x598] sm:$0xff]
      %v3311 = vld [vmem:[#allocation3 + $0x5a0] sm:$0xff]
      %v3312 = vld [vmem:[#allocation3 + $0x5a8] sm:$0xf]
      %v3313 = vld [vmem:[#allocation3 + $0x5ac] sm:$0xff]
      %v3314 = vld [vmem:[#allocation3 + $0x5b4] sm:$0xff]
      %v3315 = vld [vmem:[#allocation3 + $0x5bc] sm:$0xff]
      %v3316 = vld [vmem:[#allocation3 + $0x5c4] sm:$0xff]
      %v3317 = vld [vmem:[#allocation3 + $0x5cc] sm:$0xff]
      %v3318 = vld [vmem:[#allocation3 + $0x5d4] sm:$0xf]
      %v3319 = vld [vmem:[#allocation3 + $0x5d8] sm:$0xff]
      %v3320 = vld [vmem:[#allocation3 + $0x5e0] sm:$0xff]
      %v3321 = vld [vmem:[#allocation3 + $0x5e8] sm:$0xff]
      %v3322 = vld [vmem:[#allocation3 + $0x5f0] sm:$0xff]
      %v3323 = vld [vmem:[#allocation3 + $0x5f8] sm:$0xff]
      %v3324 = vld [vmem:[#allocation3 + $0x600] sm:$0xf]
      %v3325 = vld [vmem:[#allocation3 + $0x604] sm:$0xff]
      %v3326 = vld [vmem:[#allocation3 + $0x60c] sm:$0xff]
      %v3327 = vld [vmem:[#allocation3 + $0x614] sm:$0xff]
      %v3328 = vld [vmem:[#allocation3 + $0x61c] sm:$0xff]
      %v3329 = vld [vmem:[#allocation3 + $0x624] sm:$0xff]
      %v3330 = vld [vmem:[#allocation3 + $0x62c] sm:$0xf]
      %v3331 = vld [vmem:[#allocation3 + $0x630] sm:$0xff]
      %v3332 = vld [vmem:[#allocation3 + $0x638] sm:$0xff]
      %v3333 = vld [vmem:[#allocation3 + $0x640] sm:$0xff]
      %v3334 = vld [vmem:[#allocation3 + $0x648] sm:$0xff]
      %v3335 = vld [vmem:[#allocation3 + $0x650] sm:$0xff]
      %v3336 = vld [vmem:[#allocation3 + $0x658] sm:$0xf]
      %v3337 = vld [vmem:[#allocation3 + $0x65c] sm:$0xff]
      %v3338 = vld [vmem:[#allocation3 + $0x664] sm:$0xff]
      %v3339 = vld [vmem:[#allocation3 + $0x66c] sm:$0xff]
      %v3340 = vld [vmem:[#allocation3 + $0x674] sm:$0xff]
      %v3341 = vld [vmem:[#allocation3 + $0x67c] sm:$0xff]
      %v3342 = vld [vmem:[#allocation3 + $0x684] sm:$0xf]
      %v3343 = vld [vmem:[#allocation3 + $0x688] sm:$0xff]
      %v3344 = vld [vmem:[#allocation3 + $0x690] sm:$0xff]
      %v3345 = vld [vmem:[#allocation3 + $0x698] sm:$0xff]
      %v3346 = vld [vmem:[#allocation3 + $0x6a0] sm:$0xff]
      %v3347 = vld [vmem:[#allocation3 + $0x6a8] sm:$0xff]
      %v3348 = vld [vmem:[#allocation3 + $0x6b0] sm:$0xf]
      %v3349 = vld [vmem:[#allocation3 + $0x6b4] sm:$0xff]
      %v3350 = vld [vmem:[#allocation3 + $0x6bc] sm:$0xff]
      %v3351 = vld [vmem:[#allocation3 + $0x6c4] sm:$0xff]
      %v3352 = vld [vmem:[#allocation3 + $0x6cc] sm:$0xff]
      %v3353 = vld [vmem:[#allocation3 + $0x6d4] sm:$0xff]
      %v3354 = vld [vmem:[#allocation3 + $0x6dc] sm:$0xf]
      %v3355 = vld [vmem:[#allocation3 + $0x6e0] sm:$0xff]
      %v3356 = vld [vmem:[#allocation3 + $0x6e8] sm:$0xff]
      %v3357 = vld [vmem:[#allocation3 + $0x6f0] sm:$0xff]
      %v3358 = vld [vmem:[#allocation3 + $0x6f8] sm:$0xff]
      %v3359 = vld [vmem:[#allocation3 + $0x700] sm:$0xff]
      %v3360 = vld [vmem:[#allocation3 + $0x708] sm:$0xf]
      %v3361 = vld [vmem:[#allocation3 + $0x70c] sm:$0xff]
      %v3362 = vld [vmem:[#allocation3 + $0x714] sm:$0xff]
      %v3363 = vld [vmem:[#allocation3 + $0x71c] sm:$0xff]
      %v3364 = vld [vmem:[#allocation3 + $0x724] sm:$0xff]
      %v3365 = vld [vmem:[#allocation3 + $0x72c] sm:$0xff]
      %v3366 = vld [vmem:[#allocation3 + $0x734] sm:$0xf]
      %v3367 = vld [vmem:[#allocation3 + $0x738] sm:$0xff]
      %v3368 = vld [vmem:[#allocation3 + $0x740] sm:$0xff]
      %v3369 = vld [vmem:[#allocation3 + $0x748] sm:$0xff]
      %v3370 = vld [vmem:[#allocation3 + $0x750] sm:$0xff]
      %v3371 = vld [vmem:[#allocation3 + $0x758] sm:$0xff]
      %v3372 = vld [vmem:[#allocation3 + $0x760] sm:$0xf]
      %v3373 = vld [vmem:[#allocation3 + $0x764] sm:$0xff]
      %v3374 = vld [vmem:[#allocation3 + $0x76c] sm:$0xff]
      %v3375 = vld [vmem:[#allocation3 + $0x774] sm:$0xff]
      %v3376 = vld [vmem:[#allocation3 + $0x77c] sm:$0xff]
      %v3377 = vld [vmem:[#allocation3 + $0x784] sm:$0xff]
      %v3378 = vld [vmem:[#allocation3 + $0x78c] sm:$0xf]
      %v3379 = vld [vmem:[#allocation3 + $0x790] sm:$0xff]
      %v3380 = vld [vmem:[#allocation3 + $0x798] sm:$0xff]
      %v3381 = vld [vmem:[#allocation3 + $0x7a0] sm:$0xff]
      %v3382 = vld [vmem:[#allocation3 + $0x7a8] sm:$0xff]
      %v3383 = vld [vmem:[#allocation3 + $0x7b0] sm:$0xff]
      %v3384 = vld [vmem:[#allocation3 + $0x7b8] sm:$0xf]
      %v3385 = vld [vmem:[#allocation3 + $0x7bc] sm:$0xff]
      %v3386 = vld [vmem:[#allocation3 + $0x7c4] sm:$0xff]
      %v3387 = vld [vmem:[#allocation3 + $0x7cc] sm:$0xff]
      %v3388 = vld [vmem:[#allocation3 + $0x7d4] sm:$0xff]
      %v3389 = vld [vmem:[#allocation3 + $0x7dc] sm:$0xff]
      %v3390 = vld [vmem:[#allocation3 + $0x7e4] sm:$0xf]
      %v3391 = vld [vmem:[#allocation3 + $0x7e8] sm:$0xff]
      %v3392 = vld [vmem:[#allocation3 + $0x7f0] sm:$0xff]
      %v3393 = vld [vmem:[#allocation3 + $0x7f8] sm:$0xff]
      %v3394 = vld [vmem:[#allocation3 + $0x800] sm:$0xff]
      %v3395 = vld [vmem:[#allocation3 + $0x808] sm:$0xff]
      %v3396 = vld [vmem:[#allocation3 + $0x810] sm:$0xf]
      %v3397 = vld [vmem:[#allocation3 + $0x814] sm:$0xff]
      %v3398 = vld [vmem:[#allocation3 + $0x81c] sm:$0xff]
      %v3399 = vld [vmem:[#allocation3 + $0x824] sm:$0xff]
      %v3400 = vld [vmem:[#allocation3 + $0x82c] sm:$0xff]
      %v3401 = vld [vmem:[#allocation3 + $0x834] sm:$0xff]
      %v3402 = vld [vmem:[#allocation3 + $0x83c] sm:$0xf]
      %v3403 = vld [vmem:[#allocation3 + $0x840] sm:$0xff]
      %v3404 = vld [vmem:[#allocation3 + $0x848] sm:$0xff]
      %v3405 = vld [vmem:[#allocation3 + $0x850] sm:$0xff]
      %v3406 = vld [vmem:[#allocation3 + $0x858] sm:$0xff]
      %v3407 = vld [vmem:[#allocation3 + $0x860] sm:$0xff]
      %v3408 = vld [vmem:[#allocation3 + $0x868] sm:$0xf]
      %v3409 = vld [vmem:[#allocation3 + $0x86c] sm:$0xff]
      %v3410 = vld [vmem:[#allocation3 + $0x874] sm:$0xff]
      %v3411 = vld [vmem:[#allocation3 + $0x87c] sm:$0xff]
      %v3412 = vld [vmem:[#allocation3 + $0x884] sm:$0xff]
      %v3413 = vld [vmem:[#allocation3 + $0x88c] sm:$0xff]
      %v3414 = vld [vmem:[#allocation3 + $0x894] sm:$0xf]
      %v3415 = vld [vmem:[#allocation3 + $0x898] sm:$0xff]
      %v3416 = vld [vmem:[#allocation3 + $0x8a0] sm:$0xff]
      %v3417 = vld [vmem:[#allocation3 + $0x8a8] sm:$0xff]
      %v3418 = vld [vmem:[#allocation3 + $0x8b0] sm:$0xff]
      %v3419 = vld [vmem:[#allocation3 + $0x8b8] sm:$0xff]
      %v3420 = vld [vmem:[#allocation3 + $0x8c0] sm:$0xf]
      %v3421 = vld [vmem:[#allocation3 + $0x8c4] sm:$0xff]
      %v3422 = vld [vmem:[#allocation3 + $0x8cc] sm:$0xff]
      %v3423 = vld [vmem:[#allocation3 + $0x8d4] sm:$0xff]
      %v3424 = vld [vmem:[#allocation3 + $0x8dc] sm:$0xff]
      %v3425 = vld [vmem:[#allocation3 + $0x8e4] sm:$0xff]
      %v3426 = vld [vmem:[#allocation3 + $0x8ec] sm:$0xf]
      %v3427 = vld [vmem:[#allocation3 + $0x8f0] sm:$0xff]
      %v3428 = vld [vmem:[#allocation3 + $0x8f8] sm:$0xff]
      %v3429 = vld [vmem:[#allocation3 + $0x900] sm:$0xff]
      %v3430 = vld [vmem:[#allocation3 + $0x908] sm:$0xff]
      %v3431 = vld [vmem:[#allocation3 + $0x910] sm:$0xff]
      %v3432 = vld [vmem:[#allocation3 + $0x918] sm:$0xf]
      %v3433 = vld [vmem:[#allocation3 + $0x91c] sm:$0xff]
      %v3434 = vld [vmem:[#allocation3 + $0x924] sm:$0xff]
      %v3435 = vld [vmem:[#allocation3 + $0x92c] sm:$0xff]
      %v3436 = vld [vmem:[#allocation3 + $0x934] sm:$0xff]
      %v3437 = vld [vmem:[#allocation3 + $0x93c] sm:$0xff]
      %v3438 = vld [vmem:[#allocation3 + $0x944] sm:$0xf]
      %v3439 = vld [vmem:[%s2] sm:$0xff]
      %3441 = vset.pattern.permute.xlu0 0
      %3442 = vperm.xlu0 %3441, %v3439
      %v3443 = vpop.permute.xlu0 %3442
      %v3447 = vunpack.c.l.b16 %v3113
      %v3448 = vunpack.c.h.b16 %v3113
      %v3449 = vunpack.c.l.b16 %v3114
      %v3450 = vunpack.c.h.b16 %v3114
      %v3451 = vpack.c.b16 %v3447, %v3447
      %v3452 = vpack.c.b16 %v3448, %v3448
      %v3453 = vpack.c.b16 %v3449, %v3449
      %v3454 = vpack.c.b16 %v3450, %v3450
      %v3782 = vunpack.c.l.b16 %v3115
      %v3783 = vunpack.c.h.b16 %v3115
      %v3784 = vunpack.c.l.b16 %v3116
      %v3785 = vunpack.c.h.b16 %v3116
      %v3786 = vunpack.c.l.b16 %v3117
      %v3787 = vunpack.c.h.b16 %v3117
      %v3788 = vunpack.c.l.b16 %v3118
      %v3789 = vunpack.c.h.b16 %v3118
      %v3790 = vunpack.c.l.b16 %v3119
      %v3791 = vunpack.c.h.b16 %v3119
      %v3792 = vunpack.c.l.b16 %v3120
      %v3793 = vunpack.c.l.b16 %v3121
      %v3794 = vunpack.c.h.b16 %v3121
      %v3795 = vunpack.c.l.b16 %v3122
      %v3796 = vunpack.c.h.b16 %v3122
      %v3797 = vunpack.c.l.b16 %v3123
      %v3798 = vunpack.c.h.b16 %v3123
      %v3799 = vunpack.c.l.b16 %v3124
      %v3800 = vunpack.c.h.b16 %v3124
      %v3801 = vunpack.c.l.b16 %v3125
      %v3802 = vunpack.c.h.b16 %v3125
      %v3803 = vunpack.c.l.b16 %v3126
      %v3804 = vunpack.c.l.b16 %v3127
      %v3805 = vunpack.c.h.b16 %v3127
      %v3806 = vunpack.c.l.b16 %v3128
      %v3807 = vunpack.c.h.b16 %v3128
      %v3808 = vunpack.c.l.b16 %v3129
      %v3809 = vunpack.c.h.b16 %v3129
      %v3810 = vunpack.c.l.b16 %v3130
      %v3811 = vunpack.c.h.b16 %v3130
      %v3812 = vunpack.c.l.b16 %v3131
      %v3813 = vunpack.c.h.b16 %v3131
      %v3814 = vunpack.c.l.b16 %v3132
      %v3815 = vunpack.c.l.b16 %v3133
      %v3816 = vunpack.c.h.b16 %v3133
      %v3817 = vunpack.c.l.b16 %v3134
      %v3818 = vunpack.c.h.b16 %v3134
      %v3819 = vunpack.c.l.b16 %v3135
      %v3820 = vunpack.c.h.b16 %v3135
      %v3821 = vunpack.c.l.b16 %v3136
      %v3822 = vunpack.c.h.b16 %v3136
      %v3823 = vunpack.c.l.b16 %v3137
      %v3824 = vunpack.c.h.b16 %v3137
      %v3825 = vunpack.c.l.b16 %v3138
      %v3826 = vunpack.c.l.b16 %v3139
      %v3827 = vunpack.c.h.b16 %v3139
      %v3828 = vunpack.c.l.b16 %v3140
      %v3829 = vunpack.c.h.b16 %v3140
      %v3830 = vunpack.c.l.b16 %v3141
      %v3831 = vunpack.c.h.b16 %v3141
      %v3832 = vunpack.c.l.b16 %v3142
      %v3833 = vunpack.c.h.b16 %v3142
      %v3834 = vunpack.c.l.b16 %v3143
      %v3835 = vunpack.c.h.b16 %v3143
      %v3836 = vunpack.c.l.b16 %v3144
      %v3837 = vunpack.c.l.b16 %v3145
      %v3838 = vunpack.c.h.b16 %v3145
      %v3839 = vunpack.c.l.b16 %v3146
      %v3840 = vunpack.c.h.b16 %v3146
      %v3841 = vunpack.c.l.b16 %v3147
      %v3842 = vunpack.c.h.b16 %v3147
      %v3843 = vunpack.c.l.b16 %v3148
      %v3844 = vunpack.c.h.b16 %v3148
      %v3845 = vunpack.c.l.b16 %v3149
      %v3846 = vunpack.c.h.b16 %v3149
      %v3847 = vunpack.c.l.b16 %v3150
      %v3848 = vunpack.c.l.b16 %v3151
      %v3849 = vunpack.c.h.b16 %v3151
      %v3850 = vunpack.c.l.b16 %v3152
      %v3851 = vunpack.c.h.b16 %v3152
      %v3852 = vunpack.c.l.b16 %v3153
      %v3853 = vunpack.c.h.b16 %v3153
      %v3854 = vunpack.c.l.b16 %v3154
      %v3855 = vunpack.c.h.b16 %v3154
      %v3856 = vunpack.c.l.b16 %v3155
      %v3857 = vunpack.c.h.b16 %v3155
      %v3858 = vunpack.c.l.b16 %v3156
      %v3859 = vunpack.c.l.b16 %v3157
      %v3860 = vunpack.c.h.b16 %v3157
      %v3861 = vunpack.c.l.b16 %v3158
      %v3862 = vunpack.c.h.b16 %v3158
      %v3863 = vunpack.c.l.b16 %v3159
      %v3864 = vunpack.c.h.b16 %v3159
      %v3865 = vunpack.c.l.b16 %v3160
      %v3866 = vunpack.c.h.b16 %v3160
      %v3867 = vunpack.c.l.b16 %v3161
      %v3868 = vunpack.c.h.b16 %v3161
      %v3869 = vunpack.c.l.b16 %v3162
      %v3870 = vunpack.c.l.b16 %v3163
      %v3871 = vunpack.c.h.b16 %v3163
      %v3872 = vunpack.c.l.b16 %v3164
      %v3873 = vunpack.c.h.b16 %v3164
      %v3874 = vunpack.c.l.b16 %v3165
      %v3875 = vunpack.c.h.b16 %v3165
      %v3876 = vunpack.c.l.b16 %v3166
      %v3877 = vunpack.c.h.b16 %v3166
      %v3878 = vunpack.c.l.b16 %v3167
      %v3879 = vunpack.c.h.b16 %v3167
      %v3880 = vunpack.c.l.b16 %v3168
      %v3881 = vunpack.c.l.b16 %v3169
      %v3882 = vunpack.c.h.b16 %v3169
      %v3883 = vunpack.c.l.b16 %v3170
      %v3884 = vunpack.c.h.b16 %v3170
      %v3885 = vunpack.c.l.b16 %v3171
      %v3886 = vunpack.c.h.b16 %v3171
      %v3887 = vunpack.c.l.b16 %v3172
      %v3888 = vunpack.c.h.b16 %v3172
      %v3889 = vunpack.c.l.b16 %v3173
      %v3890 = vunpack.c.h.b16 %v3173
      %v3891 = vunpack.c.l.b16 %v3174
      %v3892 = vunpack.c.l.b16 %v3175
      %v3893 = vunpack.c.h.b16 %v3175
      %v3894 = vunpack.c.l.b16 %v3176
      %v3895 = vunpack.c.h.b16 %v3176
      %v3896 = vunpack.c.l.b16 %v3177
      %v3897 = vunpack.c.h.b16 %v3177
      %v3898 = vunpack.c.l.b16 %v3178
      %v3899 = vunpack.c.h.b16 %v3178
      %v3900 = vunpack.c.l.b16 %v3179
      %v3901 = vunpack.c.h.b16 %v3179
      %v3902 = vunpack.c.l.b16 %v3180
      %v3903 = vunpack.c.l.b16 %v3181
      %v3904 = vunpack.c.h.b16 %v3181
      %v3905 = vunpack.c.l.b16 %v3182
      %v3906 = vunpack.c.h.b16 %v3182
      %v3907 = vunpack.c.l.b16 %v3183
      %v3908 = vunpack.c.h.b16 %v3183
      %v3909 = vunpack.c.l.b16 %v3184
      %v3910 = vunpack.c.h.b16 %v3184
      %v3911 = vunpack.c.l.b16 %v3185
      %v3912 = vunpack.c.h.b16 %v3185
      %v3913 = vunpack.c.l.b16 %v3186
      %v3914 = vunpack.c.l.b16 %v3187
      %v3915 = vunpack.c.h.b16 %v3187
      %v3916 = vunpack.c.l.b16 %v3188
      %v3917 = vunpack.c.h.b16 %v3188
      %v3918 = vunpack.c.l.b16 %v3189
      %v3919 = vunpack.c.h.b16 %v3189
      %v3920 = vunpack.c.l.b16 %v3190
      %v3921 = vunpack.c.h.b16 %v3190
      %v3922 = vunpack.c.l.b16 %v3191
      %v3923 = vunpack.c.h.b16 %v3191
      %v3924 = vunpack.c.l.b16 %v3192
      %v3925 = vunpack.c.l.b16 %v3193
      %v3926 = vunpack.c.h.b16 %v3193
      %v3927 = vunpack.c.l.b16 %v3194
      %v3928 = vunpack.c.h.b16 %v3194
      %v3929 = vunpack.c.l.b16 %v3195
      %v3930 = vunpack.c.h.b16 %v3195
      %v3931 = vunpack.c.l.b16 %v3196
      %v3932 = vunpack.c.h.b16 %v3196
      %v3933 = vunpack.c.l.b16 %v3197
      %v3934 = vunpack.c.h.b16 %v3197
      %v3935 = vunpack.c.l.b16 %v3198
      %v3936 = vunpack.c.l.b16 %v3199
      %v3937 = vunpack.c.h.b16 %v3199
      %v3938 = vunpack.c.l.b16 %v3200
      %v3939 = vunpack.c.h.b16 %v3200
      %v3940 = vunpack.c.l.b16 %v3201
      %v3941 = vunpack.c.h.b16 %v3201
      %v3942 = vunpack.c.l.b16 %v3202
      %v3943 = vunpack.c.h.b16 %v3202
      %v3944 = vunpack.c.l.b16 %v3203
      %v3945 = vunpack.c.h.b16 %v3203
      %v3946 = vunpack.c.l.b16 %v3204
      %v3947 = vunpack.c.l.b16 %v3205
      %v3948 = vunpack.c.h.b16 %v3205
      %v3949 = vunpack.c.l.b16 %v3206
      %v3950 = vunpack.c.h.b16 %v3206
      %v3951 = vunpack.c.l.b16 %v3207
      %v3952 = vunpack.c.h.b16 %v3207
      %v3953 = vunpack.c.l.b16 %v3208
      %v3954 = vunpack.c.h.b16 %v3208
      %v3955 = vunpack.c.l.b16 %v3209
      %v3956 = vunpack.c.h.b16 %v3209
      %v3957 = vunpack.c.l.b16 %v3210
      %v3958 = vunpack.c.l.b16 %v3211
      %v3959 = vunpack.c.h.b16 %v3211
      %v3960 = vunpack.c.l.b16 %v3212
      %v3961 = vunpack.c.h.b16 %v3212
      %v3962 = vunpack.c.l.b16 %v3213
      %v3963 = vunpack.c.h.b16 %v3213
      %v3964 = vunpack.c.l.b16 %v3214
      %v3965 = vunpack.c.h.b16 %v3214
      %v3966 = vunpack.c.l.b16 %v3215
      %v3967 = vunpack.c.h.b16 %v3215
      %v3968 = vunpack.c.l.b16 %v3216
      %v3969 = vunpack.c.l.b16 %v3217
      %v3970 = vunpack.c.h.b16 %v3217
      %v3971 = vunpack.c.l.b16 %v3218
      %v3972 = vunpack.c.h.b16 %v3218
      %v3973 = vunpack.c.l.b16 %v3219
      %v3974 = vunpack.c.h.b16 %v3219
      %v3975 = vunpack.c.l.b16 %v3220
      %v3976 = vunpack.c.h.b16 %v3220
      %v3977 = vunpack.c.l.b16 %v3221
      %v3978 = vunpack.c.h.b16 %v3221
      %v3979 = vunpack.c.l.b16 %v3222
      %v3980 = vunpack.c.l.b16 %v3223
      %v3981 = vunpack.c.h.b16 %v3223
      %v3982 = vunpack.c.l.b16 %v3224
      %v3983 = vunpack.c.h.b16 %v3224
      %v3984 = vunpack.c.l.b16 %v3225
      %v3985 = vunpack.c.h.b16 %v3225
      %v3986 = vunpack.c.l.b16 %v3226
      %v3987 = vunpack.c.h.b16 %v3226
      %v3988 = vunpack.c.l.b16 %v3227
      %v3989 = vunpack.c.h.b16 %v3227
      %v3990 = vunpack.c.l.b16 %v3228
      %v3991 = vunpack.c.l.b16 %v3229
      %v3992 = vunpack.c.h.b16 %v3229
      %v3993 = vunpack.c.l.b16 %v3230
      %v3994 = vunpack.c.h.b16 %v3230
      %v3995 = vunpack.c.l.b16 %v3231
      %v3996 = vunpack.c.h.b16 %v3231
      %v3997 = vunpack.c.l.b16 %v3232
      %v3998 = vunpack.c.h.b16 %v3232
      %v3999 = vunpack.c.l.b16 %v3233
      %v4000 = vunpack.c.h.b16 %v3233
      %v4001 = vunpack.c.l.b16 %v3234
      %v4002 = vunpack.c.l.b16 %v3235
      %v4003 = vunpack.c.h.b16 %v3235
      %v4004 = vunpack.c.l.b16 %v3236
      %v4005 = vunpack.c.h.b16 %v3236
      %v4006 = vunpack.c.l.b16 %v3237
      %v4007 = vunpack.c.h.b16 %v3237
      %v4008 = vunpack.c.l.b16 %v3238
      %v4009 = vunpack.c.h.b16 %v3238
      %v4010 = vunpack.c.l.b16 %v3239
      %v4011 = vunpack.c.h.b16 %v3239
      %v4012 = vunpack.c.l.b16 %v3240
      %v4013 = vunpack.c.l.b16 %v3241
      %v4014 = vunpack.c.h.b16 %v3241
      %v4015 = vunpack.c.l.b16 %v3242
      %v4016 = vunpack.c.h.b16 %v3242
      %v4017 = vunpack.c.l.b16 %v3243
      %v4018 = vunpack.c.h.b16 %v3243
      %v4019 = vunpack.c.l.b16 %v3244
      %v4020 = vunpack.c.h.b16 %v3244
      %v4021 = vunpack.c.l.b16 %v3245
      %v4022 = vunpack.c.h.b16 %v3245
      %v4023 = vunpack.c.l.b16 %v3246
      %v4024 = vunpack.c.l.b16 %v3247
      %v4025 = vunpack.c.h.b16 %v3247
      %v4026 = vunpack.c.l.b16 %v3248
      %v4027 = vunpack.c.h.b16 %v3248
      %v4028 = vunpack.c.l.b16 %v3249
      %v4029 = vunpack.c.h.b16 %v3249
      %v4030 = vunpack.c.l.b16 %v3250
      %v4031 = vunpack.c.h.b16 %v3250
      %v4032 = vunpack.c.l.b16 %v3251
      %v4033 = vunpack.c.h.b16 %v3251
      %v4034 = vunpack.c.l.b16 %v3252
      %v4035 = vunpack.c.l.b16 %v3253
      %v4036 = vunpack.c.h.b16 %v3253
      %v4037 = vunpack.c.l.b16 %v3254
      %v4038 = vunpack.c.h.b16 %v3254
      %v4039 = vunpack.c.l.b16 %v3255
      %v4040 = vunpack.c.h.b16 %v3255
      %v4041 = vunpack.c.l.b16 %v3256
      %v4042 = vunpack.c.h.b16 %v3256
      %v4043 = vunpack.c.l.b16 %v3257
      %v4044 = vunpack.c.h.b16 %v3257
      %v4045 = vunpack.c.l.b16 %v3258
      %v4046 = vunpack.c.l.b16 %v3259
      %v4047 = vunpack.c.h.b16 %v3259
      %v4048 = vunpack.c.l.b16 %v3260
      %v4049 = vunpack.c.h.b16 %v3260
      %v4050 = vunpack.c.l.b16 %v3261
      %v4051 = vunpack.c.h.b16 %v3261
      %v4052 = vunpack.c.l.b16 %v3262
      %v4053 = vunpack.c.h.b16 %v3262
      %v4054 = vunpack.c.l.b16 %v3263
      %v4055 = vunpack.c.h.b16 %v3263
      %v4056 = vunpack.c.l.b16 %v3264
      %v4057 = vunpack.c.l.b16 %v3265
      %v4058 = vunpack.c.h.b16 %v3265
      %v4059 = vunpack.c.l.b16 %v3266
      %v4060 = vunpack.c.h.b16 %v3266
      %v4061 = vunpack.c.l.b16 %v3267
      %v4062 = vunpack.c.h.b16 %v3267
      %v4063 = vunpack.c.l.b16 %v3268
      %v4064 = vunpack.c.h.b16 %v3268
      %v4065 = vunpack.c.l.b16 %v3269
      %v4066 = vunpack.c.h.b16 %v3269
      %v4067 = vunpack.c.l.b16 %v3270
      %v4068 = vunpack.c.l.b16 %v3271
      %v4069 = vunpack.c.h.b16 %v3271
      %v4070 = vunpack.c.l.b16 %v3272
      %v4071 = vunpack.c.h.b16 %v3272
      %v4072 = vunpack.c.l.b16 %v3273
      %v4073 = vunpack.c.h.b16 %v3273
      %v4074 = vunpack.c.l.b16 %v3274
      %v4075 = vunpack.c.h.b16 %v3274
      %v4076 = vunpack.c.l.b16 %v3275
      %v4077 = vunpack.c.h.b16 %v3275
      %v4078 = vunpack.c.l.b16 %v3276
      %v4079 = vunpack.c.l.b16 %v3277
      %v4080 = vunpack.c.h.b16 %v3277
      %v4081 = vunpack.c.l.b16 %v3278
      %v4082 = vunpack.c.h.b16 %v3278
      %v4083 = vunpack.c.l.b16 %v3279
      %v4084 = vunpack.c.h.b16 %v3279
      %v4085 = vunpack.c.l.b16 %v3280
      %v4086 = vunpack.c.h.b16 %v3280
      %v4087 = vunpack.c.l.b16 %v3281
      %v4088 = vunpack.c.h.b16 %v3281
      %v4089 = vunpack.c.l.b16 %v3282
      %v4090 = vunpack.c.l.b16 %v3283
      %v4091 = vunpack.c.h.b16 %v3283
      %v4092 = vunpack.c.l.b16 %v3284
      %v4093 = vunpack.c.h.b16 %v3284
      %v4094 = vunpack.c.l.b16 %v3285
      %v4095 = vunpack.c.h.b16 %v3285
      %v4096 = vunpack.c.l.b16 %v3286
      %v4097 = vunpack.c.h.b16 %v3286
      %v4098 = vunpack.c.l.b16 %v3287
      %v4099 = vunpack.c.h.b16 %v3287
      %v4100 = vunpack.c.l.b16 %v3288
      %v4101 = vunpack.c.l.b16 %v3289
      %v4102 = vunpack.c.h.b16 %v3289
      %v4103 = vunpack.c.l.b16 %v3290
      %v4104 = vunpack.c.h.b16 %v3290
      %v4105 = vunpack.c.l.b16 %v3291
      %v4106 = vunpack.c.h.b16 %v3291
      %v4107 = vunpack.c.l.b16 %v3292
      %v4108 = vunpack.c.h.b16 %v3292
      %v4109 = vunpack.c.l.b16 %v3293
      %v4110 = vunpack.c.h.b16 %v3293
      %v4111 = vunpack.c.l.b16 %v3294
      %v4112 = vunpack.c.l.b16 %v3295
      %v4113 = vunpack.c.h.b16 %v3295
      %v4114 = vunpack.c.l.b16 %v3296
      %v4115 = vunpack.c.h.b16 %v3296
      %v4116 = vunpack.c.l.b16 %v3297
      %v4117 = vunpack.c.h.b16 %v3297
      %v4118 = vunpack.c.l.b16 %v3298
      %v4119 = vunpack.c.h.b16 %v3298
      %v4120 = vunpack.c.l.b16 %v3299
      %v4121 = vunpack.c.h.b16 %v3299
      %v4122 = vunpack.c.l.b16 %v3300
      %v4123 = vunpack.c.l.b16 %v3301
      %v4124 = vunpack.c.h.b16 %v3301
      %v4125 = vunpack.c.l.b16 %v3302
      %v4126 = vunpack.c.h.b16 %v3302
      %v4127 = vunpack.c.l.b16 %v3303
      %v4128 = vunpack.c.h.b16 %v3303
      %v4129 = vunpack.c.l.b16 %v3304
      %v4130 = vunpack.c.h.b16 %v3304
      %v4131 = vunpack.c.l.b16 %v3305
      %v4132 = vunpack.c.h.b16 %v3305
      %v4133 = vunpack.c.l.b16 %v3306
      %v4134 = vunpack.c.l.b16 %v3307
      %v4135 = vunpack.c.h.b16 %v3307
      %v4136 = vunpack.c.l.b16 %v3308
      %v4137 = vunpack.c.h.b16 %v3308
      %v4138 = vunpack.c.l.b16 %v3309
      %v4139 = vunpack.c.h.b16 %v3309
      %v4140 = vunpack.c.l.b16 %v3310
      %v4141 = vunpack.c.h.b16 %v3310
      %v4142 = vunpack.c.l.b16 %v3311
      %v4143 = vunpack.c.h.b16 %v3311
      %v4144 = vunpack.c.l.b16 %v3312
      %v4145 = vunpack.c.l.b16 %v3313
      %v4146 = vunpack.c.h.b16 %v3313
      %v4147 = vunpack.c.l.b16 %v3314
      %v4148 = vunpack.c.h.b16 %v3314
      %v4149 = vunpack.c.l.b16 %v3315
      %v4150 = vunpack.c.h.b16 %v3315
      %v4151 = vunpack.c.l.b16 %v3316
      %v4152 = vunpack.c.h.b16 %v3316
      %v4153 = vunpack.c.l.b16 %v3317
      %v4154 = vunpack.c.h.b16 %v3317
      %v4155 = vunpack.c.l.b16 %v3318
      %v4156 = vunpack.c.l.b16 %v3319
      %v4157 = vunpack.c.h.b16 %v3319
      %v4158 = vunpack.c.l.b16 %v3320
      %v4159 = vunpack.c.h.b16 %v3320
      %v4160 = vunpack.c.l.b16 %v3321
      %v4161 = vunpack.c.h.b16 %v3321
      %v4162 = vunpack.c.l.b16 %v3322
      %v4163 = vunpack.c.h.b16 %v3322
      %v4164 = vunpack.c.l.b16 %v3323
      %v4165 = vunpack.c.h.b16 %v3323
      %v4166 = vunpack.c.l.b16 %v3324
      %v4167 = vunpack.c.l.b16 %v3325
      %v4168 = vunpack.c.h.b16 %v3325
      %v4169 = vunpack.c.l.b16 %v3326
      %v4170 = vunpack.c.h.b16 %v3326
      %v4171 = vunpack.c.l.b16 %v3327
      %v4172 = vunpack.c.h.b16 %v3327
      %v4173 = vunpack.c.l.b16 %v3328
      %v4174 = vunpack.c.h.b16 %v3328
      %v4175 = vunpack.c.l.b16 %v3329
      %v4176 = vunpack.c.h.b16 %v3329
      %v4177 = vunpack.c.l.b16 %v3330
      %v4178 = vunpack.c.l.b16 %v3331
      %v4179 = vunpack.c.h.b16 %v3331
      %v4180 = vunpack.c.l.b16 %v3332
      %v4181 = vunpack.c.h.b16 %v3332
      %v4182 = vunpack.c.l.b16 %v3333
      %v4183 = vunpack.c.h.b16 %v3333
      %v4184 = vunpack.c.l.b16 %v3334
      %v4185 = vunpack.c.h.b16 %v3334
      %v4186 = vunpack.c.l.b16 %v3335
      %v4187 = vunpack.c.h.b16 %v3335
      %v4188 = vunpack.c.l.b16 %v3336
      %v4189 = vunpack.c.l.b16 %v3337
      %v4190 = vunpack.c.h.b16 %v3337
      %v4191 = vunpack.c.l.b16 %v3338
      %v4192 = vunpack.c.h.b16 %v3338
      %v4193 = vunpack.c.l.b16 %v3339
      %v4194 = vunpack.c.h.b16 %v3339
      %v4195 = vunpack.c.l.b16 %v3340
      %v4196 = vunpack.c.h.b16 %v3340
      %v4197 = vunpack.c.l.b16 %v3341
      %v4198 = vunpack.c.h.b16 %v3341
      %v4199 = vunpack.c.l.b16 %v3342
      %v4200 = vunpack.c.l.b16 %v3343
      %v4201 = vunpack.c.h.b16 %v3343
      %v4202 = vunpack.c.l.b16 %v3344
      %v4203 = vunpack.c.h.b16 %v3344
      %v4204 = vunpack.c.l.b16 %v3345
      %v4205 = vunpack.c.h.b16 %v3345
      %v4206 = vunpack.c.l.b16 %v3346
      %v4207 = vunpack.c.h.b16 %v3346
      %v4208 = vunpack.c.l.b16 %v3347
      %v4209 = vunpack.c.h.b16 %v3347
      %v4210 = vunpack.c.l.b16 %v3348
      %v4211 = vunpack.c.l.b16 %v3349
      %v4212 = vunpack.c.h.b16 %v3349
      %v4213 = vunpack.c.l.b16 %v3350
      %v4214 = vunpack.c.h.b16 %v3350
      %v4215 = vunpack.c.l.b16 %v3351
      %v4216 = vunpack.c.h.b16 %v3351
      %v4217 = vunpack.c.l.b16 %v3352
      %v4218 = vunpack.c.h.b16 %v3352
      %v4219 = vunpack.c.l.b16 %v3353
      %v4220 = vunpack.c.h.b16 %v3353
      %v4221 = vunpack.c.l.b16 %v3354
      %v4222 = vunpack.c.l.b16 %v3355
      %v4223 = vunpack.c.h.b16 %v3355
      %v4224 = vunpack.c.l.b16 %v3356
      %v4225 = vunpack.c.h.b16 %v3356
      %v4226 = vunpack.c.l.b16 %v3357
      %v4227 = vunpack.c.h.b16 %v3357
      %v4228 = vunpack.c.l.b16 %v3358
      %v4229 = vunpack.c.h.b16 %v3358
      %v4230 = vunpack.c.l.b16 %v3359
      %v4231 = vunpack.c.h.b16 %v3359
      %v4232 = vunpack.c.l.b16 %v3360
      %v4233 = vunpack.c.l.b16 %v3361
      %v4234 = vunpack.c.h.b16 %v3361
      %v4235 = vunpack.c.l.b16 %v3362
      %v4236 = vunpack.c.h.b16 %v3362
      %v4237 = vunpack.c.l.b16 %v3363
      %v4238 = vunpack.c.h.b16 %v3363
      %v4239 = vunpack.c.l.b16 %v3364
      %v4240 = vunpack.c.h.b16 %v3364
      %v4241 = vunpack.c.l.b16 %v3365
      %v4242 = vunpack.c.h.b16 %v3365
      %v4243 = vunpack.c.l.b16 %v3366
      %v4244 = vunpack.c.l.b16 %v3367
      %v4245 = vunpack.c.h.b16 %v3367
      %v4246 = vunpack.c.l.b16 %v3368
      %v4247 = vunpack.c.h.b16 %v3368
      %v4248 = vunpack.c.l.b16 %v3369
      %v4249 = vunpack.c.h.b16 %v3369
      %v4250 = vunpack.c.l.b16 %v3370
      %v4251 = vunpack.c.h.b16 %v3370
      %v4252 = vunpack.c.l.b16 %v3371
      %v4253 = vunpack.c.h.b16 %v3371
      %v4254 = vunpack.c.l.b16 %v3372
      %v4255 = vunpack.c.l.b16 %v3373
      %v4256 = vunpack.c.h.b16 %v3373
      %v4257 = vunpack.c.l.b16 %v3374
      %v4258 = vunpack.c.h.b16 %v3374
      %v4259 = vunpack.c.l.b16 %v3375
      %v4260 = vunpack.c.h.b16 %v3375
      %v4261 = vunpack.c.l.b16 %v3376
      %v4262 = vunpack.c.h.b16 %v3376
      %v4263 = vunpack.c.l.b16 %v3377
      %v4264 = vunpack.c.h.b16 %v3377
      %v4265 = vunpack.c.l.b16 %v3378
      %v4266 = vunpack.c.l.b16 %v3379
      %v4267 = vunpack.c.h.b16 %v3379
      %v4268 = vunpack.c.l.b16 %v3380
      %v4269 = vunpack.c.h.b16 %v3380
      %v4270 = vunpack.c.l.b16 %v3381
      %v4271 = vunpack.c.h.b16 %v3381
      %v4272 = vunpack.c.l.b16 %v3382
      %v4273 = vunpack.c.h.b16 %v3382
      %v4274 = vunpack.c.l.b16 %v3383
      %v4275 = vunpack.c.h.b16 %v3383
      %v4276 = vunpack.c.l.b16 %v3384
      %v4277 = vunpack.c.l.b16 %v3385
      %v4278 = vunpack.c.h.b16 %v3385
      %v4279 = vunpack.c.l.b16 %v3386
      %v4280 = vunpack.c.h.b16 %v3386
      %v4281 = vunpack.c.l.b16 %v3387
      %v4282 = vunpack.c.h.b16 %v3387
      %v4283 = vunpack.c.l.b16 %v3388
      %v4284 = vunpack.c.h.b16 %v3388
      %v4285 = vunpack.c.l.b16 %v3389
      %v4286 = vunpack.c.h.b16 %v3389
      %v4287 = vunpack.c.l.b16 %v3390
      %v4288 = vunpack.c.l.b16 %v3391
      %v4289 = vunpack.c.h.b16 %v3391
      %v4290 = vunpack.c.l.b16 %v3392
      %v4291 = vunpack.c.h.b16 %v3392
      %v4292 = vunpack.c.l.b16 %v3393
      %v4293 = vunpack.c.h.b16 %v3393
      %v4294 = vunpack.c.l.b16 %v3394
      %v4295 = vunpack.c.h.b16 %v3394
      %v4296 = vunpack.c.l.b16 %v3395
      %v4297 = vunpack.c.h.b16 %v3395
      %v4298 = vunpack.c.l.b16 %v3396
      %v4299 = vunpack.c.l.b16 %v3397
      %v4300 = vunpack.c.h.b16 %v3397
      %v4301 = vunpack.c.l.b16 %v3398
      %v4302 = vunpack.c.h.b16 %v3398
      %v4303 = vunpack.c.l.b16 %v3399
      %v4304 = vunpack.c.h.b16 %v3399
      %v4305 = vunpack.c.l.b16 %v3400
      %v4306 = vunpack.c.h.b16 %v3400
      %v4307 = vunpack.c.l.b16 %v3401
      %v4308 = vunpack.c.h.b16 %v3401
      %v4309 = vunpack.c.l.b16 %v3402
      %v4310 = vunpack.c.l.b16 %v3403
      %v4311 = vunpack.c.h.b16 %v3403
      %v4312 = vunpack.c.l.b16 %v3404
      %v4313 = vunpack.c.h.b16 %v3404
      %v4314 = vunpack.c.l.b16 %v3405
      %v4315 = vunpack.c.h.b16 %v3405
      %v4316 = vunpack.c.l.b16 %v3406
      %v4317 = vunpack.c.h.b16 %v3406
      %v4318 = vunpack.c.l.b16 %v3407
      %v4319 = vunpack.c.h.b16 %v3407
      %v4320 = vunpack.c.l.b16 %v3408
      %v4321 = vunpack.c.l.b16 %v3409
      %v4322 = vunpack.c.h.b16 %v3409
      %v4323 = vunpack.c.l.b16 %v3410
      %v4324 = vunpack.c.h.b16 %v3410
      %v4325 = vunpack.c.l.b16 %v3411
      %v4326 = vunpack.c.h.b16 %v3411
      %v4327 = vunpack.c.l.b16 %v3412
      %v4328 = vunpack.c.h.b16 %v3412
      %v4329 = vunpack.c.l.b16 %v3413
      %v4330 = vunpack.c.h.b16 %v3413
      %v4331 = vunpack.c.l.b16 %v3414
      %v4332 = vunpack.c.l.b16 %v3415
      %v4333 = vunpack.c.h.b16 %v3415
      %v4334 = vunpack.c.l.b16 %v3416
      %v4335 = vunpack.c.h.b16 %v3416
      %v4336 = vunpack.c.l.b16 %v3417
      %v4337 = vunpack.c.h.b16 %v3417
      %v4338 = vunpack.c.l.b16 %v3418
      %v4339 = vunpack.c.h.b16 %v3418
      %v4340 = vunpack.c.l.b16 %v3419
      %v4341 = vunpack.c.h.b16 %v3419
      %v4342 = vunpack.c.l.b16 %v3420
      %v4343 = vunpack.c.l.b16 %v3421
      %v4344 = vunpack.c.h.b16 %v3421
      %v4345 = vunpack.c.l.b16 %v3422
      %v4346 = vunpack.c.h.b16 %v3422
      %v4347 = vunpack.c.l.b16 %v3423
      %v4348 = vunpack.c.h.b16 %v3423
      %v4349 = vunpack.c.l.b16 %v3424
      %v4350 = vunpack.c.h.b16 %v3424
      %v4351 = vunpack.c.l.b16 %v3425
      %v4352 = vunpack.c.h.b16 %v3425
      %v4353 = vunpack.c.l.b16 %v3426
      %v4354 = vunpack.c.l.b16 %v3427
      %v4355 = vunpack.c.h.b16 %v3427
      %v4356 = vunpack.c.l.b16 %v3428
      %v4357 = vunpack.c.h.b16 %v3428
      %v4358 = vunpack.c.l.b16 %v3429
      %v4359 = vunpack.c.h.b16 %v3429
      %v4360 = vunpack.c.l.b16 %v3430
      %v4361 = vunpack.c.h.b16 %v3430
      %v4362 = vunpack.c.l.b16 %v3431
      %v4363 = vunpack.c.h.b16 %v3431
      %v4364 = vunpack.c.l.b16 %v3432
      %v4365 = vunpack.c.l.b16 %v3433
      %v4366 = vunpack.c.h.b16 %v3433
      %v4367 = vunpack.c.l.b16 %v3434
      %v4368 = vunpack.c.h.b16 %v3434
      %v4369 = vunpack.c.l.b16 %v3435
      %v4370 = vunpack.c.h.b16 %v3435
      %v4371 = vunpack.c.l.b16 %v3436
      %v4372 = vunpack.c.h.b16 %v3436
      %v4373 = vunpack.c.l.b16 %v3437
      %v4374 = vunpack.c.h.b16 %v3437
      %v4375 = vunpack.c.l.b16 %v3438
      %v4376 = vpack.c.b16 %v3793, %v3782
      %v4377 = vpack.c.b16 %v3794, %v3783
      %v4378 = vpack.c.b16 %v3795, %v3784
      %v4379 = vpack.c.b16 %v3796, %v3785
      %v4380 = vpack.c.b16 %v3797, %v3786
      %v4381 = vpack.c.b16 %v3798, %v3787
      %v4382 = vpack.c.b16 %v3799, %v3788
      %v4383 = vpack.c.b16 %v3800, %v3789
      %v4384 = vpack.c.b16 %v3801, %v3790
      %v4385 = vpack.c.b16 %v3802, %v3791
      %v4386 = vpack.c.b16 %v3803, %v3792
      %v4387 = vpack.c.b16 %v3815, %v3804
      %v4388 = vpack.c.b16 %v3816, %v3805
      %v4389 = vpack.c.b16 %v3817, %v3806
      %v4390 = vpack.c.b16 %v3818, %v3807
      %v4391 = vpack.c.b16 %v3819, %v3808
      %v4392 = vpack.c.b16 %v3820, %v3809
      %v4393 = vpack.c.b16 %v3821, %v3810
      %v4394 = vpack.c.b16 %v3822, %v3811
      %v4395 = vpack.c.b16 %v3823, %v3812
      %v4396 = vpack.c.b16 %v3824, %v3813
      %v4397 = vpack.c.b16 %v3825, %v3814
      %v4398 = vpack.c.b16 %v3837, %v3826
      %v4399 = vpack.c.b16 %v3838, %v3827
      %v4400 = vpack.c.b16 %v3839, %v3828
      %v4401 = vpack.c.b16 %v3840, %v3829
      %v4402 = vpack.c.b16 %v3841, %v3830
      %v4403 = vpack.c.b16 %v3842, %v3831
      %v4404 = vpack.c.b16 %v3843, %v3832
      %v4405 = vpack.c.b16 %v3844, %v3833
      %v4406 = vpack.c.b16 %v3845, %v3834
      %v4407 = vpack.c.b16 %v3846, %v3835
      %v4408 = vpack.c.b16 %v3847, %v3836
      %v4409 = vpack.c.b16 %v3859, %v3848
      %v4410 = vpack.c.b16 %v3860, %v3849
      %v4411 = vpack.c.b16 %v3861, %v3850
      %v4412 = vpack.c.b16 %v3862, %v3851
      %v4413 = vpack.c.b16 %v3863, %v3852
      %v4414 = vpack.c.b16 %v3864, %v3853
      %v4415 = vpack.c.b16 %v3865, %v3854
      %v4416 = vpack.c.b16 %v3866, %v3855
      %v4417 = vpack.c.b16 %v3867, %v3856
      %v4418 = vpack.c.b16 %v3868, %v3857
      %v4419 = vpack.c.b16 %v3869, %v3858
      %v4420 = vpack.c.b16 %v3881, %v3870
      %v4421 = vpack.c.b16 %v3882, %v3871
      %v4422 = vpack.c.b16 %v3883, %v3872
      %v4423 = vpack.c.b16 %v3884, %v3873
      %v4424 = vpack.c.b16 %v3885, %v3874
      %v4425 = vpack.c.b16 %v3886, %v3875
      %v4426 = vpack.c.b16 %v3887, %v3876
      %v4427 = vpack.c.b16 %v3888, %v3877
      %v4428 = vpack.c.b16 %v3889, %v3878
      %v4429 = vpack.c.b16 %v3890, %v3879
      %v4430 = vpack.c.b16 %v3891, %v3880
      %v4431 = vpack.c.b16 %v3903, %v3892
      %v4432 = vpack.c.b16 %v3904, %v3893
      %v4433 = vpack.c.b16 %v3905, %v3894
      %v4434 = vpack.c.b16 %v3906, %v3895
      %v4435 = vpack.c.b16 %v3907, %v3896
      %v4436 = vpack.c.b16 %v3908, %v3897
      %v4437 = vpack.c.b16 %v3909, %v3898
      %v4438 = vpack.c.b16 %v3910, %v3899
      %v4439 = vpack.c.b16 %v3911, %v3900
      %v4440 = vpack.c.b16 %v3912, %v3901
      %v4441 = vpack.c.b16 %v3913, %v3902
      %v4442 = vpack.c.b16 %v3925, %v3914
      %v4443 = vpack.c.b16 %v3926, %v3915
      %v4444 = vpack.c.b16 %v3927, %v3916
      %v4445 = vpack.c.b16 %v3928, %v3917
      %v4446 = vpack.c.b16 %v3929, %v3918
      %v4447 = vpack.c.b16 %v3930, %v3919
      %v4448 = vpack.c.b16 %v3931, %v3920
      %v4449 = vpack.c.b16 %v3932, %v3921
      %v4450 = vpack.c.b16 %v3933, %v3922
      %v4451 = vpack.c.b16 %v3934, %v3923
      %v4452 = vpack.c.b16 %v3935, %v3924
      %v4453 = vpack.c.b16 %v3947, %v3936
      %v4454 = vpack.c.b16 %v3948, %v3937
      %v4455 = vpack.c.b16 %v3949, %v3938
      %v4456 = vpack.c.b16 %v3950, %v3939
      %v4457 = vpack.c.b16 %v3951, %v3940
      %v4458 = vpack.c.b16 %v3952, %v3941
      %v4459 = vpack.c.b16 %v3953, %v3942
      %v4460 = vpack.c.b16 %v3954, %v3943
      %v4461 = vpack.c.b16 %v3955, %v3944
      %v4462 = vpack.c.b16 %v3956, %v3945
      %v4463 = vpack.c.b16 %v3957, %v3946
      %v4464 = vpack.c.b16 %v3969, %v3958
      %v4465 = vpack.c.b16 %v3970, %v3959
      %v4466 = vpack.c.b16 %v3971, %v3960
      %v4467 = vpack.c.b16 %v3972, %v3961
      %v4468 = vpack.c.b16 %v3973, %v3962
      %v4469 = vpack.c.b16 %v3974, %v3963
      %v4470 = vpack.c.b16 %v3975, %v3964
      %v4471 = vpack.c.b16 %v3976, %v3965
      %v4472 = vpack.c.b16 %v3977, %v3966
      %v4473 = vpack.c.b16 %v3978, %v3967
      %v4474 = vpack.c.b16 %v3979, %v3968
      %v4475 = vpack.c.b16 %v3991, %v3980
      %v4476 = vpack.c.b16 %v3992, %v3981
      %v4477 = vpack.c.b16 %v3993, %v3982
      %v4478 = vpack.c.b16 %v3994, %v3983
      %v4479 = vpack.c.b16 %v3995, %v3984
      %v4480 = vpack.c.b16 %v3996, %v3985
      %v4481 = vpack.c.b16 %v3997, %v3986
      %v4482 = vpack.c.b16 %v3998, %v3987
      %v4483 = vpack.c.b16 %v3999, %v3988
      %v4484 = vpack.c.b16 %v4000, %v3989
      %v4485 = vpack.c.b16 %v4001, %v3990
      %v4486 = vpack.c.b16 %v4013, %v4002
      %v4487 = vpack.c.b16 %v4014, %v4003
      %v4488 = vpack.c.b16 %v4015, %v4004
      %v4489 = vpack.c.b16 %v4016, %v4005
      %v4490 = vpack.c.b16 %v4017, %v4006
      %v4491 = vpack.c.b16 %v4018, %v4007
      %v4492 = vpack.c.b16 %v4019, %v4008
      %v4493 = vpack.c.b16 %v4020, %v4009
      %v4494 = vpack.c.b16 %v4021, %v4010
      %v4495 = vpack.c.b16 %v4022, %v4011
      %v4496 = vpack.c.b16 %v4023, %v4012
      %v4497 = vpack.c.b16 %v4035, %v4024
      %v4498 = vpack.c.b16 %v4036, %v4025
      %v4499 = vpack.c.b16 %v4037, %v4026
      %v4500 = vpack.c.b16 %v4038, %v4027
      %v4501 = vpack.c.b16 %v4039, %v4028
      %v4502 = vpack.c.b16 %v4040, %v4029
      %v4503 = vpack.c.b16 %v4041, %v4030
      %v4504 = vpack.c.b16 %v4042, %v4031
      %v4505 = vpack.c.b16 %v4043, %v4032
      %v4506 = vpack.c.b16 %v4044, %v4033
      %v4507 = vpack.c.b16 %v4045, %v4034
      %v4508 = vpack.c.b16 %v4057, %v4046
      %v4509 = vpack.c.b16 %v4058, %v4047
      %v4510 = vpack.c.b16 %v4059, %v4048
      %v4511 = vpack.c.b16 %v4060, %v4049
      %v4512 = vpack.c.b16 %v4061, %v4050
      %v4513 = vpack.c.b16 %v4062, %v4051
      %v4514 = vpack.c.b16 %v4063, %v4052
      %v4515 = vpack.c.b16 %v4064, %v4053
      %v4516 = vpack.c.b16 %v4065, %v4054
      %v4517 = vpack.c.b16 %v4066, %v4055
      %v4518 = vpack.c.b16 %v4067, %v4056
      %v4519 = vpack.c.b16 %v4079, %v4068
      %v4520 = vpack.c.b16 %v4080, %v4069
      %v4521 = vpack.c.b16 %v4081, %v4070
      %v4522 = vpack.c.b16 %v4082, %v4071
      %v4523 = vpack.c.b16 %v4083, %v4072
      %v4524 = vpack.c.b16 %v4084, %v4073
      %v4525 = vpack.c.b16 %v4085, %v4074
      %v4526 = vpack.c.b16 %v4086, %v4075
      %v4527 = vpack.c.b16 %v4087, %v4076
      %v4528 = vpack.c.b16 %v4088, %v4077
      %v4529 = vpack.c.b16 %v4089, %v4078
      %v4530 = vpack.c.b16 %v4101, %v4090
      %v4531 = vpack.c.b16 %v4102, %v4091
      %v4532 = vpack.c.b16 %v4103, %v4092
      %v4533 = vpack.c.b16 %v4104, %v4093
      %v4534 = vpack.c.b16 %v4105, %v4094
      %v4535 = vpack.c.b16 %v4106, %v4095
      %v4536 = vpack.c.b16 %v4107, %v4096
      %v4537 = vpack.c.b16 %v4108, %v4097
      %v4538 = vpack.c.b16 %v4109, %v4098
      %v4539 = vpack.c.b16 %v4110, %v4099
      %v4540 = vpack.c.b16 %v4111, %v4100
      %v4541 = vpack.c.b16 %v4123, %v4112
      %v4542 = vpack.c.b16 %v4124, %v4113
      %v4543 = vpack.c.b16 %v4125, %v4114
      %v4544 = vpack.c.b16 %v4126, %v4115
      %v4545 = vpack.c.b16 %v4127, %v4116
      %v4546 = vpack.c.b16 %v4128, %v4117
      %v4547 = vpack.c.b16 %v4129, %v4118
      %v4548 = vpack.c.b16 %v4130, %v4119
      %v4549 = vpack.c.b16 %v4131, %v4120
      %v4550 = vpack.c.b16 %v4132, %v4121
      %v4551 = vpack.c.b16 %v4133, %v4122
      %v4552 = vpack.c.b16 %v4145, %v4134
      %v4553 = vpack.c.b16 %v4146, %v4135
      %v4554 = vpack.c.b16 %v4147, %v4136
      %v4555 = vpack.c.b16 %v4148, %v4137
      %v4556 = vpack.c.b16 %v4149, %v4138
      %v4557 = vpack.c.b16 %v4150, %v4139
      %v4558 = vpack.c.b16 %v4151, %v4140
      %v4559 = vpack.c.b16 %v4152, %v4141
      %v4560 = vpack.c.b16 %v4153, %v4142
      %v4561 = vpack.c.b16 %v4154, %v4143
      %v4562 = vpack.c.b16 %v4155, %v4144
      %v4563 = vpack.c.b16 %v4167, %v4156
      %v4564 = vpack.c.b16 %v4168, %v4157
      %v4565 = vpack.c.b16 %v4169, %v4158
      %v4566 = vpack.c.b16 %v4170, %v4159
      %v4567 = vpack.c.b16 %v4171, %v4160
      %v4568 = vpack.c.b16 %v4172, %v4161
      %v4569 = vpack.c.b16 %v4173, %v4162
      %v4570 = vpack.c.b16 %v4174, %v4163
      %v4571 = vpack.c.b16 %v4175, %v4164
      %v4572 = vpack.c.b16 %v4176, %v4165
      %v4573 = vpack.c.b16 %v4177, %v4166
      %v4574 = vpack.c.b16 %v4189, %v4178
      %v4575 = vpack.c.b16 %v4190, %v4179
      %v4576 = vpack.c.b16 %v4191, %v4180
      %v4577 = vpack.c.b16 %v4192, %v4181
      %v4578 = vpack.c.b16 %v4193, %v4182
      %v4579 = vpack.c.b16 %v4194, %v4183
      %v4580 = vpack.c.b16 %v4195, %v4184
      %v4581 = vpack.c.b16 %v4196, %v4185
      %v4582 = vpack.c.b16 %v4197, %v4186
      %v4583 = vpack.c.b16 %v4198, %v4187
      %v4584 = vpack.c.b16 %v4199, %v4188
      %v4585 = vpack.c.b16 %v4211, %v4200
      %v4586 = vpack.c.b16 %v4212, %v4201
      %v4587 = vpack.c.b16 %v4213, %v4202
      %v4588 = vpack.c.b16 %v4214, %v4203
      %v4589 = vpack.c.b16 %v4215, %v4204
      %v4590 = vpack.c.b16 %v4216, %v4205
      %v4591 = vpack.c.b16 %v4217, %v4206
      %v4592 = vpack.c.b16 %v4218, %v4207
      %v4593 = vpack.c.b16 %v4219, %v4208
      %v4594 = vpack.c.b16 %v4220, %v4209
      %v4595 = vpack.c.b16 %v4221, %v4210
      %v4596 = vpack.c.b16 %v4233, %v4222
      %v4597 = vpack.c.b16 %v4234, %v4223
      %v4598 = vpack.c.b16 %v4235, %v4224
      %v4599 = vpack.c.b16 %v4236, %v4225
      %v4600 = vpack.c.b16 %v4237, %v4226
      %v4601 = vpack.c.b16 %v4238, %v4227
      %v4602 = vpack.c.b16 %v4239, %v4228
      %v4603 = vpack.c.b16 %v4240, %v4229
      %v4604 = vpack.c.b16 %v4241, %v4230
      %v4605 = vpack.c.b16 %v4242, %v4231
      %v4606 = vpack.c.b16 %v4243, %v4232
      %v4607 = vpack.c.b16 %v4255, %v4244
      %v4608 = vpack.c.b16 %v4256, %v4245
      %v4609 = vpack.c.b16 %v4257, %v4246
      %v4610 = vpack.c.b16 %v4258, %v4247
      %v4611 = vpack.c.b16 %v4259, %v4248
      %v4612 = vpack.c.b16 %v4260, %v4249
      %v4613 = vpack.c.b16 %v4261, %v4250
      %v4614 = vpack.c.b16 %v4262, %v4251
      %v4615 = vpack.c.b16 %v4263, %v4252
      %v4616 = vpack.c.b16 %v4264, %v4253
      %v4617 = vpack.c.b16 %v4265, %v4254
      %v4618 = vpack.c.b16 %v4277, %v4266
      %v4619 = vpack.c.b16 %v4278, %v4267
      %v4620 = vpack.c.b16 %v4279, %v4268
      %v4621 = vpack.c.b16 %v4280, %v4269
      %v4622 = vpack.c.b16 %v4281, %v4270
      %v4623 = vpack.c.b16 %v4282, %v4271
      %v4624 = vpack.c.b16 %v4283, %v4272
      %v4625 = vpack.c.b16 %v4284, %v4273
      %v4626 = vpack.c.b16 %v4285, %v4274
      %v4627 = vpack.c.b16 %v4286, %v4275
      %v4628 = vpack.c.b16 %v4287, %v4276
      %v4629 = vpack.c.b16 %v4299, %v4288
      %v4630 = vpack.c.b16 %v4300, %v4289
      %v4631 = vpack.c.b16 %v4301, %v4290
      %v4632 = vpack.c.b16 %v4302, %v4291
      %v4633 = vpack.c.b16 %v4303, %v4292
      %v4634 = vpack.c.b16 %v4304, %v4293
      %v4635 = vpack.c.b16 %v4305, %v4294
      %v4636 = vpack.c.b16 %v4306, %v4295
      %v4637 = vpack.c.b16 %v4307, %v4296
      %v4638 = vpack.c.b16 %v4308, %v4297
      %v4639 = vpack.c.b16 %v4309, %v4298
      %v4640 = vpack.c.b16 %v4321, %v4310
      %v4641 = vpack.c.b16 %v4322, %v4311
      %v4642 = vpack.c.b16 %v4323, %v4312
      %v4643 = vpack.c.b16 %v4324, %v4313
      %v4644 = vpack.c.b16 %v4325, %v4314
      %v4645 = vpack.c.b16 %v4326, %v4315
      %v4646 = vpack.c.b16 %v4327, %v4316
      %v4647 = vpack.c.b16 %v4328, %v4317
      %v4648 = vpack.c.b16 %v4329, %v4318
      %v4649 = vpack.c.b16 %v4330, %v4319
      %v4650 = vpack.c.b16 %v4331, %v4320
      %v4651 = vpack.c.b16 %v4343, %v4332
      %v4652 = vpack.c.b16 %v4344, %v4333
      %v4653 = vpack.c.b16 %v4345, %v4334
      %v4654 = vpack.c.b16 %v4346, %v4335
      %v4655 = vpack.c.b16 %v4347, %v4336
      %v4656 = vpack.c.b16 %v4348, %v4337
      %v4657 = vpack.c.b16 %v4349, %v4338
      %v4658 = vpack.c.b16 %v4350, %v4339
      %v4659 = vpack.c.b16 %v4351, %v4340
      %v4660 = vpack.c.b16 %v4352, %v4341
      %v4661 = vpack.c.b16 %v4353, %v4342
      %v4662 = vpack.c.b16 %v4365, %v4354
      %v4663 = vpack.c.b16 %v4366, %v4355
      %v4664 = vpack.c.b16 %v4367, %v4356
      %v4665 = vpack.c.b16 %v4368, %v4357
      %v4666 = vpack.c.b16 %v4369, %v4358
      %v4667 = vpack.c.b16 %v4370, %v4359
      %v4668 = vpack.c.b16 %v4371, %v4360
      %v4669 = vpack.c.b16 %v4372, %v4361
      %v4670 = vpack.c.b16 %v4373, %v4362
      %v4671 = vpack.c.b16 %v4374, %v4363
      %v4672 = vpack.c.b16 %v4375, %v4364
      %vm4970 = vcmask 392192
      %v4972 = vsel %vm4970, %v3454, 0
      %4974 = vmatpush.bf16.msra.mxu0 %v4453
      %4975 = vmatpush.bf16.msra.mxu0 %v4442
      %4976 = vmatpush.bf16.msra.mxu0 %v4431
      %4977 = vmatpush.bf16.msra.mxu0 %v4420
      %4978 = vmatpush.bf16.msra.mxu0 %v4409
      %4979 = vmatpush.bf16.msra.mxu0 %v4398
      %4980 = vmatpush.bf16.msra.mxu0 %v4387
      %4981 = vmatpush.bf16.msra.mxu0 %v4376
      %4982 = vmatmul.bf16.gmra.mxu0 %v3451
      %v4983 = vpop.f32.mrf.mxu0
      %v4984 = vadd.f32 %v3443, %v4983
      %v4985 = vpop.f32.mrf.mxu0
      %4986 = vdwg.mxu0
      %4987 = vmatpush.bf16.msra.mxu0 %v4541
      %4988 = vmatpush.bf16.msra.mxu0 %v4530
      %4989 = vmatpush.bf16.msra.mxu0 %v4519
      %4990 = vmatpush.bf16.msra.mxu0 %v4508
      %4991 = vmatpush.bf16.msra.mxu0 %v4497
      %4992 = vmatpush.bf16.msra.mxu0 %v4486
      %4993 = vmatpush.bf16.msra.mxu0 %v4475
      %4994 = vmatpush.bf16.msra.mxu0 %v4464
      %4995 = vmatmul.bf16.gmra.mxu0 %v3452
      %v4996 = vpop.f32.mrf.mxu0
      %v4997 = vadd.f32 %v4984, %v4996
      %v4998 = vpop.f32.mrf.mxu0
      %4999 = vdwg.mxu0
      %5000 = vmatpush.bf16.msra.mxu0 %v4629
      %5001 = vmatpush.bf16.msra.mxu0 %v4618
      %5002 = vmatpush.bf16.msra.mxu0 %v4607
      %5003 = vmatpush.bf16.msra.mxu0 %v4596
      %5004 = vmatpush.bf16.msra.mxu0 %v4585
      %5005 = vmatpush.bf16.msra.mxu0 %v4574
      %5006 = vmatpush.bf16.msra.mxu0 %v4563
      %5007 = vmatpush.bf16.msra.mxu0 %v4552
      %5008 = vmatmul.bf16.gmra.mxu0 %v3453
      %v5009 = vpop.f32.mrf.mxu0
      %v5010 = vadd.f32 %v4997, %v5009
      %v5011 = vpop.f32.mrf.mxu0
      %5012 = vdwg.mxu0
      %5013 = vmatpush.bf16.msra.mxu0 0
      %5014 = vmatpush.bf16.msra.mxu0 0
      %5015 = vmatpush.bf16.msra.mxu0 0
      %5016 = vmatpush.bf16.msra.mxu0 0
      %5017 = vmatpush.bf16.msra.mxu0 0
      %5018 = vmatpush.bf16.msra.mxu0 %v4662
      %5019 = vmatpush.bf16.msra.mxu0 %v4651
      %5020 = vmatpush.bf16.msra.mxu0 %v4640
      %5021 = vmatmul.bf16.gmra.mxu0 %v4972
      %v5022 = vpop.f32.mrf.mxu0
      %v5023 = vadd.f32 %v5010, %v5022
      %v5024 = vpop.f32.mrf.mxu0
      %5025 = vdwg.mxu0
      %5026 = vmatpush.bf16.msra.mxu0 %v4454
      %5027 = vmatpush.bf16.msra.mxu0 %v4443
      %5028 = vmatpush.bf16.msra.mxu0 %v4432
      %5029 = vmatpush.bf16.msra.mxu0 %v4421
      %5030 = vmatpush.bf16.msra.mxu0 %v4410
      %5031 = vmatpush.bf16.msra.mxu0 %v4399
      %5032 = vmatpush.bf16.msra.mxu0 %v4388
      %5033 = vmatpush.bf16.msra.mxu0 %v4377
      %5034 = vmatmul.bf16.gmra.mxu0 %v3451
      %v5035 = vpop.f32.mrf.mxu0
      %v5036 = vadd.f32 %v3443, %v5035
      %v5037 = vpop.f32.mrf.mxu0
      %5038 = vdwg.mxu0
      %5039 = vmatpush.bf16.msra.mxu0 %v4542
      %5040 = vmatpush.bf16.msra.mxu0 %v4531
      %5041 = vmatpush.bf16.msra.mxu0 %v4520
      %5042 = vmatpush.bf16.msra.mxu0 %v4509
      %5043 = vmatpush.bf16.msra.mxu0 %v4498
      %5044 = vmatpush.bf16.msra.mxu0 %v4487
      %5045 = vmatpush.bf16.msra.mxu0 %v4476
      %5046 = vmatpush.bf16.msra.mxu0 %v4465
      %5047 = vmatmul.bf16.gmra.mxu0 %v3452
      %v5048 = vpop.f32.mrf.mxu0
      %v5049 = vadd.f32 %v5036, %v5048
      %v5050 = vpop.f32.mrf.mxu0
      %5051 = vdwg.mxu0
      %5052 = vmatpush.bf16.msra.mxu0 %v4630
      %5053 = vmatpush.bf16.msra.mxu0 %v4619
      %5054 = vmatpush.bf16.msra.mxu0 %v4608
      %5055 = vmatpush.bf16.msra.mxu0 %v4597
      %5056 = vmatpush.bf16.msra.mxu0 %v4586
      %5057 = vmatpush.bf16.msra.mxu0 %v4575
      %5058 = vmatpush.bf16.msra.mxu0 %v4564
      %5059 = vmatpush.bf16.msra.mxu0 %v4553
      %5060 = vmatmul.bf16.gmra.mxu0 %v3453
      %v5061 = vpop.f32.mrf.mxu0
      %v5062 = vadd.f32 %v5049, %v5061
      %v5063 = vpop.f32.mrf.mxu0
      %5064 = vdwg.mxu0
      %5065 = vmatpush.bf16.msra.mxu0 0
      %5066 = vmatpush.bf16.msra.mxu0 0
      %5067 = vmatpush.bf16.msra.mxu0 0
      %5068 = vmatpush.bf16.msra.mxu0 0
      %5069 = vmatpush.bf16.msra.mxu0 0
      %5070 = vmatpush.bf16.msra.mxu0 %v4663
      %5071 = vmatpush.bf16.msra.mxu0 %v4652
      %5072 = vmatpush.bf16.msra.mxu0 %v4641
      %5073 = vmatmul.bf16.gmra.mxu0 %v4972
      %v5074 = vpop.f32.mrf.mxu0
      %v5075 = vadd.f32 %v5062, %v5074
      %v5076 = vpop.f32.mrf.mxu0
      %5077 = vdwg.mxu0
      %5078 = vmatpush.bf16.msra.mxu0 %v4455
      %5079 = vmatpush.bf16.msra.mxu0 %v4444
      %5080 = vmatpush.bf16.msra.mxu0 %v4433
      %5081 = vmatpush.bf16.msra.mxu0 %v4422
      %5082 = vmatpush.bf16.msra.mxu0 %v4411
      %5083 = vmatpush.bf16.msra.mxu0 %v4400
      %5084 = vmatpush.bf16.msra.mxu0 %v4389
      %5085 = vmatpush.bf16.msra.mxu0 %v4378
      %5086 = vmatmul.bf16.gmra.mxu0 %v3451
      %v5087 = vpop.f32.mrf.mxu0
      %v5088 = vadd.f32 %v3443, %v5087
      %v5089 = vpop.f32.mrf.mxu0
      %5090 = vdwg.mxu0
      %5091 = vmatpush.bf16.msra.mxu0 %v4543
      %5092 = vmatpush.bf16.msra.mxu0 %v4532
      %5093 = vmatpush.bf16.msra.mxu0 %v4521
      %5094 = vmatpush.bf16.msra.mxu0 %v4510
      %5095 = vmatpush.bf16.msra.mxu0 %v4499
      %5096 = vmatpush.bf16.msra.mxu0 %v4488
      %5097 = vmatpush.bf16.msra.mxu0 %v4477
      %5098 = vmatpush.bf16.msra.mxu0 %v4466
      %5099 = vmatmul.bf16.gmra.mxu0 %v3452
      %v5100 = vpop.f32.mrf.mxu0
      %v5101 = vadd.f32 %v5088, %v5100
      %v5102 = vpop.f32.mrf.mxu0
      %5103 = vdwg.mxu0
      %5104 = vmatpush.bf16.msra.mxu0 %v4631
      %5105 = vmatpush.bf16.msra.mxu0 %v4620
      %5106 = vmatpush.bf16.msra.mxu0 %v4609
      %5107 = vmatpush.bf16.msra.mxu0 %v4598
      %5108 = vmatpush.bf16.msra.mxu0 %v4587
      %5109 = vmatpush.bf16.msra.mxu0 %v4576
      %5110 = vmatpush.bf16.msra.mxu0 %v4565
      %5111 = vmatpush.bf16.msra.mxu0 %v4554
      %5112 = vmatmul.bf16.gmra.mxu0 %v3453
      %v5113 = vpop.f32.mrf.mxu0
      %v5114 = vadd.f32 %v5101, %v5113
      %v5115 = vpop.f32.mrf.mxu0
      %5116 = vdwg.mxu0
      %5117 = vmatpush.bf16.msra.mxu0 0
      %5118 = vmatpush.bf16.msra.mxu0 0
      %5119 = vmatpush.bf16.msra.mxu0 0
      %5120 = vmatpush.bf16.msra.mxu0 0
      %5121 = vmatpush.bf16.msra.mxu0 0
      %5122 = vmatpush.bf16.msra.mxu0 %v4664
      %5123 = vmatpush.bf16.msra.mxu0 %v4653
      %5124 = vmatpush.bf16.msra.mxu0 %v4642
      %5125 = vmatmul.bf16.gmra.mxu0 %v4972
      %v5126 = vpop.f32.mrf.mxu0
      %v5127 = vadd.f32 %v5114, %v5126
      %v5128 = vpop.f32.mrf.mxu0
      %5129 = vdwg.mxu0
      %5130 = vmatpush.bf16.msra.mxu0 %v4456
      %5131 = vmatpush.bf16.msra.mxu0 %v4445
      %5132 = vmatpush.bf16.msra.mxu0 %v4434
      %5133 = vmatpush.bf16.msra.mxu0 %v4423
      %5134 = vmatpush.bf16.msra.mxu0 %v4412
      %5135 = vmatpush.bf16.msra.mxu0 %v4401
      %5136 = vmatpush.bf16.msra.mxu0 %v4390
      %5137 = vmatpush.bf16.msra.mxu0 %v4379
      %5138 = vmatmul.bf16.gmra.mxu0 %v3451
      %v5139 = vpop.f32.mrf.mxu0
      %v5140 = vadd.f32 %v3443, %v5139
      %v5141 = vpop.f32.mrf.mxu0
      %5142 = vdwg.mxu0
      %5143 = vmatpush.bf16.msra.mxu0 %v4544
      %5144 = vmatpush.bf16.msra.mxu0 %v4533
      %5145 = vmatpush.bf16.msra.mxu0 %v4522
      %5146 = vmatpush.bf16.msra.mxu0 %v4511
      %5147 = vmatpush.bf16.msra.mxu0 %v4500
      %5148 = vmatpush.bf16.msra.mxu0 %v4489
      %5149 = vmatpush.bf16.msra.mxu0 %v4478
      %5150 = vmatpush.bf16.msra.mxu0 %v4467
      %5151 = vmatmul.bf16.gmra.mxu0 %v3452
      %v5152 = vpop.f32.mrf.mxu0
      %v5153 = vadd.f32 %v5140, %v5152
      %v5154 = vpop.f32.mrf.mxu0
      %5155 = vdwg.mxu0
      %5156 = vmatpush.bf16.msra.mxu0 %v4632
      %5157 = vmatpush.bf16.msra.mxu0 %v4621
      %5158 = vmatpush.bf16.msra.mxu0 %v4610
      %5159 = vmatpush.bf16.msra.mxu0 %v4599
      %5160 = vmatpush.bf16.msra.mxu0 %v4588
      %5161 = vmatpush.bf16.msra.mxu0 %v4577
      %5162 = vmatpush.bf16.msra.mxu0 %v4566
      %5163 = vmatpush.bf16.msra.mxu0 %v4555
      %5164 = vmatmul.bf16.gmra.mxu0 %v3453
      %v5165 = vpop.f32.mrf.mxu0
      %v5166 = vadd.f32 %v5153, %v5165
      %v5167 = vpop.f32.mrf.mxu0
      %5168 = vdwg.mxu0
      %5169 = vmatpush.bf16.msra.mxu0 0
      %5170 = vmatpush.bf16.msra.mxu0 0
      %5171 = vmatpush.bf16.msra.mxu0 0
      %5172 = vmatpush.bf16.msra.mxu0 0
      %5173 = vmatpush.bf16.msra.mxu0 0
      %5174 = vmatpush.bf16.msra.mxu0 %v4665
      %5175 = vmatpush.bf16.msra.mxu0 %v4654
      %5176 = vmatpush.bf16.msra.mxu0 %v4643
      %5177 = vmatmul.bf16.gmra.mxu0 %v4972
      %v5178 = vpop.f32.mrf.mxu0
      %v5179 = vadd.f32 %v5166, %v5178
      %v5180 = vpop.f32.mrf.mxu0
      %5181 = vdwg.mxu0
      %5182 = vmatpush.bf16.msra.mxu0 %v4457
      %5183 = vmatpush.bf16.msra.mxu0 %v4446
      %5184 = vmatpush.bf16.msra.mxu0 %v4435
      %5185 = vmatpush.bf16.msra.mxu0 %v4424
      %5186 = vmatpush.bf16.msra.mxu0 %v4413
      %5187 = vmatpush.bf16.msra.mxu0 %v4402
      %5188 = vmatpush.bf16.msra.mxu0 %v4391
      %5189 = vmatpush.bf16.msra.mxu0 %v4380
      %5190 = vmatmul.bf16.gmra.mxu0 %v3451
      %v5191 = vpop.f32.mrf.mxu0
      %v5192 = vadd.f32 %v3443, %v5191
      %v5193 = vpop.f32.mrf.mxu0
      %5194 = vdwg.mxu0
      %5195 = vmatpush.bf16.msra.mxu0 %v4545
      %5196 = vmatpush.bf16.msra.mxu0 %v4534
      %5197 = vmatpush.bf16.msra.mxu0 %v4523
      %5198 = vmatpush.bf16.msra.mxu0 %v4512
      %5199 = vmatpush.bf16.msra.mxu0 %v4501
      %5200 = vmatpush.bf16.msra.mxu0 %v4490
      %5201 = vmatpush.bf16.msra.mxu0 %v4479
      %5202 = vmatpush.bf16.msra.mxu0 %v4468
      %5203 = vmatmul.bf16.gmra.mxu0 %v3452
      %v5204 = vpop.f32.mrf.mxu0
      %v5205 = vadd.f32 %v5192, %v5204
      %v5206 = vpop.f32.mrf.mxu0
      %5207 = vdwg.mxu0
      %5208 = vmatpush.bf16.msra.mxu0 %v4633
      %5209 = vmatpush.bf16.msra.mxu0 %v4622
      %5210 = vmatpush.bf16.msra.mxu0 %v4611
      %5211 = vmatpush.bf16.msra.mxu0 %v4600
      %5212 = vmatpush.bf16.msra.mxu0 %v4589
      %5213 = vmatpush.bf16.msra.mxu0 %v4578
      %5214 = vmatpush.bf16.msra.mxu0 %v4567
      %5215 = vmatpush.bf16.msra.mxu0 %v4556
      %5216 = vmatmul.bf16.gmra.mxu0 %v3453
      %v5217 = vpop.f32.mrf.mxu0
      %v5218 = vadd.f32 %v5205, %v5217
      %v5219 = vpop.f32.mrf.mxu0
      %5220 = vdwg.mxu0
      %5221 = vmatpush.bf16.msra.mxu0 0
      %5222 = vmatpush.bf16.msra.mxu0 0
      %5223 = vmatpush.bf16.msra.mxu0 0
      %5224 = vmatpush.bf16.msra.mxu0 0
      %5225 = vmatpush.bf16.msra.mxu0 0
      %5226 = vmatpush.bf16.msra.mxu0 %v4666
      %5227 = vmatpush.bf16.msra.mxu0 %v4655
      %5228 = vmatpush.bf16.msra.mxu0 %v4644
      %5229 = vmatmul.bf16.gmra.mxu0 %v4972
      %v5230 = vpop.f32.mrf.mxu0
      %v5231 = vadd.f32 %v5218, %v5230
      %v5232 = vpop.f32.mrf.mxu0
      %5233 = vdwg.mxu0
      %5234 = vmatpush.bf16.msra.mxu0 %v4458
      %5235 = vmatpush.bf16.msra.mxu0 %v4447
      %5236 = vmatpush.bf16.msra.mxu0 %v4436
      %5237 = vmatpush.bf16.msra.mxu0 %v4425
      %5238 = vmatpush.bf16.msra.mxu0 %v4414
      %5239 = vmatpush.bf16.msra.mxu0 %v4403
      %5240 = vmatpush.bf16.msra.mxu0 %v4392
      %5241 = vmatpush.bf16.msra.mxu0 %v4381
      %5242 = vmatmul.bf16.gmra.mxu0 %v3451
      %v5243 = vpop.f32.mrf.mxu0
      %v5244 = vadd.f32 %v3443, %v5243
      %v5245 = vpop.f32.mrf.mxu0
      %5246 = vdwg.mxu0
      %5247 = vmatpush.bf16.msra.mxu0 %v4546
      %5248 = vmatpush.bf16.msra.mxu0 %v4535
      %5249 = vmatpush.bf16.msra.mxu0 %v4524
      %5250 = vmatpush.bf16.msra.mxu0 %v4513
      %5251 = vmatpush.bf16.msra.mxu0 %v4502
      %5252 = vmatpush.bf16.msra.mxu0 %v4491
      %5253 = vmatpush.bf16.msra.mxu0 %v4480
      %5254 = vmatpush.bf16.msra.mxu0 %v4469
      %5255 = vmatmul.bf16.gmra.mxu0 %v3452
      %v5256 = vpop.f32.mrf.mxu0
      %v5257 = vadd.f32 %v5244, %v5256
      %v5258 = vpop.f32.mrf.mxu0
      %5259 = vdwg.mxu0
      %5260 = vmatpush.bf16.msra.mxu0 %v4634
      %5261 = vmatpush.bf16.msra.mxu0 %v4623
      %5262 = vmatpush.bf16.msra.mxu0 %v4612
      %5263 = vmatpush.bf16.msra.mxu0 %v4601
      %5264 = vmatpush.bf16.msra.mxu0 %v4590
      %5265 = vmatpush.bf16.msra.mxu0 %v4579
      %5266 = vmatpush.bf16.msra.mxu0 %v4568
      %5267 = vmatpush.bf16.msra.mxu0 %v4557
      %5268 = vmatmul.bf16.gmra.mxu0 %v3453
      %v5269 = vpop.f32.mrf.mxu0
      %v5270 = vadd.f32 %v5257, %v5269
      %v5271 = vpop.f32.mrf.mxu0
      %5272 = vdwg.mxu0
      %5273 = vmatpush.bf16.msra.mxu0 0
      %5274 = vmatpush.bf16.msra.mxu0 0
      %5275 = vmatpush.bf16.msra.mxu0 0
      %5276 = vmatpush.bf16.msra.mxu0 0
      %5277 = vmatpush.bf16.msra.mxu0 0
      %5278 = vmatpush.bf16.msra.mxu0 %v4667
      %5279 = vmatpush.bf16.msra.mxu0 %v4656
      %5280 = vmatpush.bf16.msra.mxu0 %v4645
      %5281 = vmatmul.bf16.gmra.mxu0 %v4972
      %v5282 = vpop.f32.mrf.mxu0
      %v5283 = vadd.f32 %v5270, %v5282
      %v5284 = vpop.f32.mrf.mxu0
      %5285 = vdwg.mxu0
      %5286 = vmatpush.bf16.msra.mxu0 %v4459
      %5287 = vmatpush.bf16.msra.mxu0 %v4448
      %5288 = vmatpush.bf16.msra.mxu0 %v4437
      %5289 = vmatpush.bf16.msra.mxu0 %v4426
      %5290 = vmatpush.bf16.msra.mxu0 %v4415
      %5291 = vmatpush.bf16.msra.mxu0 %v4404
      %5292 = vmatpush.bf16.msra.mxu0 %v4393
      %5293 = vmatpush.bf16.msra.mxu0 %v4382
      %5294 = vmatmul.bf16.gmra.mxu0 %v3451
      %v5295 = vpop.f32.mrf.mxu0
      %v5296 = vadd.f32 %v3443, %v5295
      %v5297 = vpop.f32.mrf.mxu0
      %5298 = vdwg.mxu0
      %5299 = vmatpush.bf16.msra.mxu0 %v4547
      %5300 = vmatpush.bf16.msra.mxu0 %v4536
      %5301 = vmatpush.bf16.msra.mxu0 %v4525
      %5302 = vmatpush.bf16.msra.mxu0 %v4514
      %5303 = vmatpush.bf16.msra.mxu0 %v4503
      %5304 = vmatpush.bf16.msra.mxu0 %v4492
      %5305 = vmatpush.bf16.msra.mxu0 %v4481
      %5306 = vmatpush.bf16.msra.mxu0 %v4470
      %5307 = vmatmul.bf16.gmra.mxu0 %v3452
      %v5308 = vpop.f32.mrf.mxu0
      %v5309 = vadd.f32 %v5296, %v5308
      %v5310 = vpop.f32.mrf.mxu0
      %5311 = vdwg.mxu0
      %5312 = vmatpush.bf16.msra.mxu0 %v4635
      %5313 = vmatpush.bf16.msra.mxu0 %v4624
      %5314 = vmatpush.bf16.msra.mxu0 %v4613
      %5315 = vmatpush.bf16.msra.mxu0 %v4602
      %5316 = vmatpush.bf16.msra.mxu0 %v4591
      %5317 = vmatpush.bf16.msra.mxu0 %v4580
      %5318 = vmatpush.bf16.msra.mxu0 %v4569
      %5319 = vmatpush.bf16.msra.mxu0 %v4558
      %5320 = vmatmul.bf16.gmra.mxu0 %v3453
      %v5321 = vpop.f32.mrf.mxu0
      %v5322 = vadd.f32 %v5309, %v5321
      %v5323 = vpop.f32.mrf.mxu0
      %5324 = vdwg.mxu0
      %5325 = vmatpush.bf16.msra.mxu0 0
      %5326 = vmatpush.bf16.msra.mxu0 0
      %5327 = vmatpush.bf16.msra.mxu0 0
      %5328 = vmatpush.bf16.msra.mxu0 0
      %5329 = vmatpush.bf16.msra.mxu0 0
      %5330 = vmatpush.bf16.msra.mxu0 %v4668
      %5331 = vmatpush.bf16.msra.mxu0 %v4657
      %5332 = vmatpush.bf16.msra.mxu0 %v4646
      %5333 = vmatmul.bf16.gmra.mxu0 %v4972
      %v5334 = vpop.f32.mrf.mxu0
      %v5335 = vadd.f32 %v5322, %v5334
      %v5336 = vpop.f32.mrf.mxu0
      %5337 = vdwg.mxu0
      %5338 = vmatpush.bf16.msra.mxu0 %v4460
      %5339 = vmatpush.bf16.msra.mxu0 %v4449
      %5340 = vmatpush.bf16.msra.mxu0 %v4438
      %5341 = vmatpush.bf16.msra.mxu0 %v4427
      %5342 = vmatpush.bf16.msra.mxu0 %v4416
      %5343 = vmatpush.bf16.msra.mxu0 %v4405
      %5344 = vmatpush.bf16.msra.mxu0 %v4394
      %5345 = vmatpush.bf16.msra.mxu0 %v4383
      %5346 = vmatmul.bf16.gmra.mxu0 %v3451
      %v5347 = vpop.f32.mrf.mxu0
      %v5348 = vadd.f32 %v3443, %v5347
      %v5349 = vpop.f32.mrf.mxu0
      %5350 = vdwg.mxu0
      %5351 = vmatpush.bf16.msra.mxu0 %v4548
      %5352 = vmatpush.bf16.msra.mxu0 %v4537
      %5353 = vmatpush.bf16.msra.mxu0 %v4526
      %5354 = vmatpush.bf16.msra.mxu0 %v4515
      %5355 = vmatpush.bf16.msra.mxu0 %v4504
      %5356 = vmatpush.bf16.msra.mxu0 %v4493
      %5357 = vmatpush.bf16.msra.mxu0 %v4482
      %5358 = vmatpush.bf16.msra.mxu0 %v4471
      %5359 = vmatmul.bf16.gmra.mxu0 %v3452
      %v5360 = vpop.f32.mrf.mxu0
      %v5361 = vadd.f32 %v5348, %v5360
      %v5362 = vpop.f32.mrf.mxu0
      %5363 = vdwg.mxu0
      %5364 = vmatpush.bf16.msra.mxu0 %v4636
      %5365 = vmatpush.bf16.msra.mxu0 %v4625
      %5366 = vmatpush.bf16.msra.mxu0 %v4614
      %5367 = vmatpush.bf16.msra.mxu0 %v4603
      %5368 = vmatpush.bf16.msra.mxu0 %v4592
      %5369 = vmatpush.bf16.msra.mxu0 %v4581
      %5370 = vmatpush.bf16.msra.mxu0 %v4570
      %5371 = vmatpush.bf16.msra.mxu0 %v4559
      %5372 = vmatmul.bf16.gmra.mxu0 %v3453
      %v5373 = vpop.f32.mrf.mxu0
      %v5374 = vadd.f32 %v5361, %v5373
      %v5375 = vpop.f32.mrf.mxu0
      %5376 = vdwg.mxu0
      %5377 = vmatpush.bf16.msra.mxu0 0
      %5378 = vmatpush.bf16.msra.mxu0 0
      %5379 = vmatpush.bf16.msra.mxu0 0
      %5380 = vmatpush.bf16.msra.mxu0 0
      %5381 = vmatpush.bf16.msra.mxu0 0
      %5382 = vmatpush.bf16.msra.mxu0 %v4669
      %5383 = vmatpush.bf16.msra.mxu0 %v4658
      %5384 = vmatpush.bf16.msra.mxu0 %v4647
      %5385 = vmatmul.bf16.gmra.mxu0 %v4972
      %v5386 = vpop.f32.mrf.mxu0
      %v5387 = vadd.f32 %v5374, %v5386
      %v5388 = vpop.f32.mrf.mxu0
      %5389 = vdwg.mxu0
      %5390 = vmatpush.bf16.msra.mxu0 %v4461
      %5391 = vmatpush.bf16.msra.mxu0 %v4450
      %5392 = vmatpush.bf16.msra.mxu0 %v4439
      %5393 = vmatpush.bf16.msra.mxu0 %v4428
      %5394 = vmatpush.bf16.msra.mxu0 %v4417
      %5395 = vmatpush.bf16.msra.mxu0 %v4406
      %5396 = vmatpush.bf16.msra.mxu0 %v4395
      %5397 = vmatpush.bf16.msra.mxu0 %v4384
      %5398 = vmatmul.bf16.gmra.mxu0 %v3451
      %v5399 = vpop.f32.mrf.mxu0
      %v5400 = vadd.f32 %v3443, %v5399
      %v5401 = vpop.f32.mrf.mxu0
      %5402 = vdwg.mxu0
      %5403 = vmatpush.bf16.msra.mxu0 %v4549
      %5404 = vmatpush.bf16.msra.mxu0 %v4538
      %5405 = vmatpush.bf16.msra.mxu0 %v4527
      %5406 = vmatpush.bf16.msra.mxu0 %v4516
      %5407 = vmatpush.bf16.msra.mxu0 %v4505
      %5408 = vmatpush.bf16.msra.mxu0 %v4494
      %5409 = vmatpush.bf16.msra.mxu0 %v4483
      %5410 = vmatpush.bf16.msra.mxu0 %v4472
      %5411 = vmatmul.bf16.gmra.mxu0 %v3452
      %v5412 = vpop.f32.mrf.mxu0
      %v5413 = vadd.f32 %v5400, %v5412
      %v5414 = vpop.f32.mrf.mxu0
      %5415 = vdwg.mxu0
      %5416 = vmatpush.bf16.msra.mxu0 %v4637
      %5417 = vmatpush.bf16.msra.mxu0 %v4626
      %5418 = vmatpush.bf16.msra.mxu0 %v4615
      %5419 = vmatpush.bf16.msra.mxu0 %v4604
      %5420 = vmatpush.bf16.msra.mxu0 %v4593
      %5421 = vmatpush.bf16.msra.mxu0 %v4582
      %5422 = vmatpush.bf16.msra.mxu0 %v4571
      %5423 = vmatpush.bf16.msra.mxu0 %v4560
      %5424 = vmatmul.bf16.gmra.mxu0 %v3453
      %v5425 = vpop.f32.mrf.mxu0
      %v5426 = vadd.f32 %v5413, %v5425
      %v5427 = vpop.f32.mrf.mxu0
      %5428 = vdwg.mxu0
      %5429 = vmatpush.bf16.msra.mxu0 0
      %5430 = vmatpush.bf16.msra.mxu0 0
      %5431 = vmatpush.bf16.msra.mxu0 0
      %5432 = vmatpush.bf16.msra.mxu0 0
      %5433 = vmatpush.bf16.msra.mxu0 0
      %5434 = vmatpush.bf16.msra.mxu0 %v4670
      %5435 = vmatpush.bf16.msra.mxu0 %v4659
      %5436 = vmatpush.bf16.msra.mxu0 %v4648
      %5437 = vmatmul.bf16.gmra.mxu0 %v4972
      %v5438 = vpop.f32.mrf.mxu0
      %v5439 = vadd.f32 %v5426, %v5438
      %v5440 = vpop.f32.mrf.mxu0
      %5441 = vdwg.mxu0
      %5442 = vmatpush.bf16.msra.mxu0 %v4462
      %5443 = vmatpush.bf16.msra.mxu0 %v4451
      %5444 = vmatpush.bf16.msra.mxu0 %v4440
      %5445 = vmatpush.bf16.msra.mxu0 %v4429
      %5446 = vmatpush.bf16.msra.mxu0 %v4418
      %5447 = vmatpush.bf16.msra.mxu0 %v4407
      %5448 = vmatpush.bf16.msra.mxu0 %v4396
      %5449 = vmatpush.bf16.msra.mxu0 %v4385
      %5450 = vmatmul.bf16.gmra.mxu0 %v3451
      %v5451 = vpop.f32.mrf.mxu0
      %v5452 = vadd.f32 %v3443, %v5451
      %v5453 = vpop.f32.mrf.mxu0
      %5454 = vdwg.mxu0
      %5455 = vmatpush.bf16.msra.mxu0 %v4550
      %5456 = vmatpush.bf16.msra.mxu0 %v4539
      %5457 = vmatpush.bf16.msra.mxu0 %v4528
      %5458 = vmatpush.bf16.msra.mxu0 %v4517
      %5459 = vmatpush.bf16.msra.mxu0 %v4506
      %5460 = vmatpush.bf16.msra.mxu0 %v4495
      %5461 = vmatpush.bf16.msra.mxu0 %v4484
      %5462 = vmatpush.bf16.msra.mxu0 %v4473
      %5463 = vmatmul.bf16.gmra.mxu0 %v3452
      %v5464 = vpop.f32.mrf.mxu0
      %v5465 = vadd.f32 %v5452, %v5464
      %v5466 = vpop.f32.mrf.mxu0
      %5467 = vdwg.mxu0
      %5468 = vmatpush.bf16.msra.mxu0 %v4638
      %5469 = vmatpush.bf16.msra.mxu0 %v4627
      %5470 = vmatpush.bf16.msra.mxu0 %v4616
      %5471 = vmatpush.bf16.msra.mxu0 %v4605
      %5472 = vmatpush.bf16.msra.mxu0 %v4594
      %5473 = vmatpush.bf16.msra.mxu0 %v4583
      %5474 = vmatpush.bf16.msra.mxu0 %v4572
      %5475 = vmatpush.bf16.msra.mxu0 %v4561
      %5476 = vmatmul.bf16.gmra.mxu0 %v3453
      %v5477 = vpop.f32.mrf.mxu0
      %v5478 = vadd.f32 %v5465, %v5477
      %v5479 = vpop.f32.mrf.mxu0
      %5480 = vdwg.mxu0
      %5481 = vmatpush.bf16.msra.mxu0 0
      %5482 = vmatpush.bf16.msra.mxu0 0
      %5483 = vmatpush.bf16.msra.mxu0 0
      %5484 = vmatpush.bf16.msra.mxu0 0
      %5485 = vmatpush.bf16.msra.mxu0 0
      %5486 = vmatpush.bf16.msra.mxu0 %v4671
      %5487 = vmatpush.bf16.msra.mxu0 %v4660
      %5488 = vmatpush.bf16.msra.mxu0 %v4649
      %5489 = vmatmul.bf16.gmra.mxu0 %v4972
      %v5490 = vpop.f32.mrf.mxu0
      %v5491 = vadd.f32 %v5478, %v5490
      %v5492 = vpop.f32.mrf.mxu0
      %5493 = vdwg.mxu0
      %5494 = vmatpush.bf16.msra.mxu0 %v4463
      %5495 = vmatpush.bf16.msra.mxu0 %v4452
      %5496 = vmatpush.bf16.msra.mxu0 %v4441
      %5497 = vmatpush.bf16.msra.mxu0 %v4430
      %5498 = vmatpush.bf16.msra.mxu0 %v4419
      %5499 = vmatpush.bf16.msra.mxu0 %v4408
      %5500 = vmatpush.bf16.msra.mxu0 %v4397
      %5501 = vmatpush.bf16.msra.mxu0 %v4386
      %5502 = vmatmul.bf16.gmra.mxu0 %v3451
      %v5503 = vpop.f32.mrf.mxu0
      %v5504 = vadd.f32 %v3443, %v5503
      %v5505 = vpop.f32.mrf.mxu0
      %5506 = vdwg.mxu0
      %5507 = vmatpush.bf16.msra.mxu0 %v4551
      %5508 = vmatpush.bf16.msra.mxu0 %v4540
      %5509 = vmatpush.bf16.msra.mxu0 %v4529
      %5510 = vmatpush.bf16.msra.mxu0 %v4518
      %5511 = vmatpush.bf16.msra.mxu0 %v4507
      %5512 = vmatpush.bf16.msra.mxu0 %v4496
      %5513 = vmatpush.bf16.msra.mxu0 %v4485
      %5514 = vmatpush.bf16.msra.mxu0 %v4474
      %5515 = vmatmul.bf16.gmra.mxu0 %v3452
      %v5516 = vpop.f32.mrf.mxu0
      %v5517 = vadd.f32 %v5504, %v5516
      %v5518 = vpop.f32.mrf.mxu0
      %5519 = vdwg.mxu0
      %5520 = vmatpush.bf16.msra.mxu0 %v4639
      %5521 = vmatpush.bf16.msra.mxu0 %v4628
      %5522 = vmatpush.bf16.msra.mxu0 %v4617
      %5523 = vmatpush.bf16.msra.mxu0 %v4606
      %5524 = vmatpush.bf16.msra.mxu0 %v4595
      %5525 = vmatpush.bf16.msra.mxu0 %v4584
      %5526 = vmatpush.bf16.msra.mxu0 %v4573
      %5527 = vmatpush.bf16.msra.mxu0 %v4562
      %5528 = vmatmul.bf16.gmra.mxu0 %v3453
      %v5529 = vpop.f32.mrf.mxu0
      %v5530 = vadd.f32 %v5517, %v5529
      %v5531 = vpop.f32.mrf.mxu0
      %5532 = vdwg.mxu0
      %5533 = vmatpush.bf16.msra.mxu0 0
      %5534 = vmatpush.bf16.msra.mxu0 0
      %5535 = vmatpush.bf16.msra.mxu0 0
      %5536 = vmatpush.bf16.msra.mxu0 0
      %5537 = vmatpush.bf16.msra.mxu0 0
      %5538 = vmatpush.bf16.msra.mxu0 %v4672
      %5539 = vmatpush.bf16.msra.mxu0 %v4661
      %5540 = vmatpush.bf16.msra.mxu0 %v4650
      %5541 = vmatmul.bf16.gmra.mxu0 %v4972
      %v5542 = vpop.f32.mrf.mxu0
      %v5543 = vadd.f32 %v5530, %v5542
      %v5544 = vpop.f32.mrf.mxu0
      %5545 = vdwg.mxu0
      %5546 = vst [vmem:[%s146] sm:$0xff] %v5023
      %5547 = vst [vmem:[%s146 + $0x8] sm:$0xff] %v5075
      %5548 = vst [vmem:[%s146 + $0x10] sm:$0xff] %v5127
      %5549 = vst [vmem:[%s146 + $0x18] sm:$0xff] %v5179
      %5550 = vst [vmem:[%s146 + $0x20] sm:$0xff] %v5231
      %5551 = vst [vmem:[%s146 + $0x28] sm:$0xff] %v5283
      %5552 = vst [vmem:[%s146 + $0x30] sm:$0xff] %v5335
      %5553 = vst [vmem:[%s146 + $0x38] sm:$0xff] %v5387
      %5554 = vst [vmem:[%s146 + $0x40] sm:$0xff] %v5439
      %5555 = vst [vmem:[%s146 + $0x48] sm:$0xff] %v5491
      %5556 = vst [vmem:[%s146 + $0x50] sm:$0xff] %v5543
      %s5557 = smul.u32 11, %s19
      %p5558 = scmp.lt.s32.totalorder %s18, 1
      %s5559 = scalar_select %p5558, %s18, 1
      %p5560 = scmp.lt.s32.totalorder %s5557, 21
      %s5561 = scalar_select %p5560, %s5557, 21
      %s5562 = smul.addr %s5559, 22
      %s5563 = sadd.s32 %s5561, %s5562
      %s5564 = smul.addr %s5563, 8
      %s5565 = scalar_lea.vmem %s3, %s5564
      // Predicated region
      $region81: #{_lambda_.1} parent=27 // pred_check
        %p5566 = pneg %p88
      $region82: #{_lambda_.1} parent=27 // pred_check_branch
        %5568 = sbr.rel (%p5566) target = $region84
      $region83: #{_lambda_.1} parent=27 // pred_region
        %s5569 = smul.u32 11, %s19
      $region84: #{_lambda_.1} parent=27 // pred_fallthru
        _
    $region28: #{_lambda_.1} parent=5 // pred_fallthru
      _
    %p5570 = scmp.le.s32.totalorder 2, %s9
    // Predicated region
    $region85: #{_lambda_.1} parent=5 // pred_check
      %p5571 = pneg %p5570
    $region86: #{_lambda_.1} parent=5 // pred_check_branch
      %5573 = sbr.rel (%p5571) target = $region88
    $region87: #{_lambda_.1} parent=5 // pred_region
      %s5574 = ssub.s32 %s9, 2
      // Predicated region
      $region89: #{_lambda_.1} parent=87 // pred_check
        %p5575 = pneg %p94
      $region90: #{_lambda_.1} parent=87 // pred_check_branch
        %5577 = sbr.rel (%p5575) target = $region92
      $region91: #{_lambda_.1} parent=87 // pred_region
        %s5578 = smul.u32 11, %s21
        %p5579 = scmp.lt.s32.totalorder %s20, 1
        %s5580 = scalar_select %p5579, %s20, 1
        %p5581 = scmp.lt.s32.totalorder %s5578, 21
        %s5582 = scalar_select %p5581, %s5578, 21
        %s5583 = smul.addr %s5580, 22
        %s5584 = sadd.s32 %s5582, %s5583
        %s5585 = smul.addr %s5584, 8
        %s5586 = scalar_lea.vmem %s3, %s5585
      $region92: #{_lambda_.1} parent=87 // pred_fallthru
        _
    $region88: #{_lambda_.1} parent=5 // pred_fallthru
      _
  $region6: #{_lambda_.1} parent=0 // loop_footer
    %s13 = sadd.s32 1, %s9
  $region7: #{_lambda_.1} parent=0 // loop_footer_branch
    %8 = sbr.rel target = $region3
  $region8: #{_lambda_.1} parent=0 // loop_exit
    _
  %5587 = vsyncmov [#allocation4]
  %s5588 = vpop.sfrf %5587
  %p5589 = scmp.eq.s32.totalorder %s5588, 0
  %p5590 = pneg %p5589
  %5592 = shalt.err (%p5590)
  %s5593 = scalar_lea.sflag [#allocation4], 1
  %5594 = vsyncmov %s5593
  %s5595 = vpop.sfrf %5594
  %p5596 = scmp.eq.s32.totalorder %s5595, 0
  %p5597 = pneg %p5596
  %5599 = shalt.err (%p5597)

</llo_original>
